<compile_context>
chip_gen: v7x
topology: tpu7x:2x2x1
jax: 0.10.0
libtpu: 0.0.40
codegen_flags: <defaults>
</compile_context>

<pallas_src>
import functools

import jax
import jax.numpy as jnp
from jax.experimental import pallas as pl
from jax.experimental.pallas import tpu as pltpu


# ----------------------------------------------------------------------------
# Fused Pallas kernel: wavefront-interleaved 2-layer LSTM + FC head.
# ----------------------------------------------------------------------------
def _fused_lstm_kernel(x_ref, wih1_ref, whh1_ref, b1_ref,
                       wcat2_ref, b2_ref, wfc_ref, bfc_ref, out_ref,
                       *, T, B, Hp):
    """Single-invocation kernel (grid=()). All operands resident in VMEM.

    x_ref     : (T*B, D)      time-major input, batch padded to B (mult. of 8)
    wih1_ref  : (D, 4*Hp)     layer-1 input weights, gate order [i,f,o,g]
    whh1_ref  : (Hp, 4*Hp)    layer-1 recurrent weights
    b1_ref    : (1, 4*Hp)     layer-1 combined bias (b_ih + b_hh)
    wcat2_ref : (2*Hp, 4*Hp)  vstack([W_ih2^T, W_hh2^T]) — fused layer-2 weight
    b2_ref    : (1, 4*Hp)     layer-2 combined bias
    wfc_ref   : (1, Hp)       fc weight row (zero-padded past real H)
    bfc_ref   : (1, 1)        fc bias
    out_ref   : (B, 1)
    """

    def gate_update(gates, c):
        # Gate order [i | f | o | g]: one fused sigmoid over the first 3*Hp
        # lanes (3 lane-aligned vregs per sublane group), one tanh over the
        # last Hp. Hp == 128 -> every slice is lane-tile aligned.
        sig = jax.nn.sigmoid(gates[:, :3 * Hp])
        i_g = sig[:, 0 * Hp:1 * Hp]
        f_g = sig[:, 1 * Hp:2 * Hp]
        o_g = sig[:, 2 * Hp:3 * Hp]
        g_g = jnp.tanh(gates[:, 3 * Hp:4 * Hp])
        c_new = f_g * c + i_g * g_g
        h_new = o_g * jnp.tanh(c_new)
        return h_new, c_new

    # Layer-1 input projection hoisted out of the recurrence: one batched
    # (T*B, D) @ (D, 4*Hp) matmul with the bias folded in.
    x_proj1 = jnp.dot(x_ref[...], wih1_ref[...],
                      preferred_element_type=jnp.float32) + b1_ref[...]
    whh1 = whh1_ref[...]
    wcat2 = wcat2_ref[...]
    b2 = b2_ref[...]

    h1 = jnp.zeros((B, Hp), jnp.float32)
    c1 = jnp.zeros((B, Hp), jnp.float32)
    h2 = jnp.zeros((B, Hp), jnp.float32)
    c2 = jnp.zeros((B, Hp), jnp.float32)

    # Fully unrolled wavefront: layer-2 step t depends only on h1_t and
    # h2_{t-1}, layer-1 step t+1 depends only on (h1_t, c1_t), so the two
    # recurrence chains can be overlapped by the scheduler.
    for t in range(T):
        # Layer 1: x-projection precomputed, only h1 @ W_hh1 is sequential.
        gates1 = x_proj1[t * B:(t + 1) * B, :] + jnp.dot(
            h1, whh1, preferred_element_type=jnp.float32)
        h1, c1 = gate_update(gates1, c1)

        # Layer 2: single fused (B, 2*Hp) @ (2*Hp, 4*Hp) matmul replaces
        # (h1 @ W_ih2) + (h2 @ W_hh2) + add.
        gates2 = jnp.dot(jnp.concatenate([h1, h2], axis=-1), wcat2,
                         preferred_element_type=jnp.float32) + b2
        h2, c2 = gate_update(gates2, c2)

    # FC head as a VPU lane-reduction (avoid a degenerate N=1 MXU matmul).
    out_ref[...] = (jnp.sum(h2 * wfc_ref[...], axis=-1, keepdims=True)
                    + bfc_ref[...])


# ----------------------------------------------------------------------------
# One-time weight preparation (hoisted out of the per-call forward).
# ----------------------------------------------------------------------------
_LANE, _SUBLANE = 128, 8


def _reorder_gates(a4):
    # PyTorch gate order [i, f, g, o]  ->  kernel order [i, f, o, g]
    return jnp.stack([a4[0], a4[1], a4[3], a4[2]], axis=0)


def _prep_gate_mat(w, H, Hp, d_in_pad):
    """(4H, Din) -> (d_in_pad, 4Hp): reorder gates, zero-pad, transpose."""
    Din = w.shape[1]
    w4 = _reorder_gates(w.reshape(4, H, Din))                     # (4,H,Din)
    w4 = jnp.pad(w4, ((0, 0), (0, Hp - H), (0, d_in_pad - Din)))  # zero pad
    return jnp.transpose(w4.reshape(4 * Hp, d_in_pad))            # (d_in,4Hp)


def _prep_gate_bias(b_ih, b_hh, H, Hp):
    b4 = _reorder_gates((b_ih + b_hh).reshape(4, H))
    return jnp.pad(b4, ((0, 0), (0, Hp - H))).reshape(1, 4 * Hp)


def prepare_params(params):
    """One-time layout prep: call once, reuse the result for every forward."""
    layers = params["lstm"]
    assert len(layers) == 2, "fused kernel is written for num_layers=2"
    H = layers[0]["w_hh"].shape[1]
    D = layers[0]["w_ih"].shape[1]
    Hp = ((H + _LANE - 1) // _LANE) * _LANE

    wih1 = _prep_gate_mat(layers[0]["w_ih"], H, Hp, D)     # (D, 4Hp)
    whh1 = _prep_gate_mat(layers[0]["w_hh"], H, Hp, Hp)    # (Hp, 4Hp)
    b1 = _prep_gate_bias(layers[0]["b_ih"], layers[0]["b_hh"], H, Hp)

    wih2 = _prep_gate_mat(layers[1]["w_ih"], H, Hp, Hp)    # (Hp, 4Hp)
    whh2 = _prep_gate_mat(layers[1]["w_hh"], H, Hp, Hp)    # (Hp, 4Hp)
    wcat2 = jnp.concatenate([wih2, whh2], axis=0)          # (2Hp, 4Hp)
    b2 = _prep_gate_bias(layers[1]["b_ih"], layers[1]["b_hh"], H, Hp)

    wfc = jnp.pad(params["fc_w"], ((0, 0), (0, Hp - H)))   # (1, Hp)
    bfc = params["fc_b"].reshape(1, 1)                     # (1, 1)
    return {"wih1": wih1, "whh1": whh1, "b1": b1,
            "wcat2": wcat2, "b2": b2, "wfc": wfc, "bfc": bfc}


# ----------------------------------------------------------------------------
# Per-call forward: pad/permute x, single pallas_call.
# ----------------------------------------------------------------------------
@jax.jit
def lstm_model_forward(x, prep):
    """x: (B, T, input_size) batch-first float32. Mirrors LSTMModel.forward."""
    B, T, D = x.shape
    Hp = prep["wfc"].shape[1]
    Bp = ((B + _SUBLANE - 1) // _SUBLANE) * _SUBLANE

    # Pad batch with zero rows, go time-major, flatten timesteps to rows.
    x_p = jnp.pad(x, ((0, Bp - B), (0, 0), (0, 0)))            # (Bp, T, D)
    x2d = jnp.transpose(x_p, (1, 0, 2)).reshape(T * Bp, D)     # (T*Bp, D)

    kernel = functools.partial(_fused_lstm_kernel, T=T, B=Bp, Hp=Hp)
    vmem = pl.BlockSpec(memory_space=pltpu.MemorySpace.VMEM)
    out_p = pl.pallas_call(
        kernel,
        out_shape=jax.ShapeDtypeStruct((Bp, 1), jnp.float32),
        in_specs=[vmem] * 8,
        out_specs=vmem,
    )(x2d, prep["wih1"], prep["whh1"], prep["b1"],
      prep["wcat2"], prep["b2"], prep["wfc"], prep["bfc"])
    return out_p[:B]                                           # (B, 1)


# ----------------------------------------------------------------------------
# Pure-JAX reference (for correctness check)
# ----------------------------------------------------------------------------
def lstm_model_ref(x, params):
    h_in = x                              # (B, T, D)
    for layer in params["lstm"]:
        w_ih, w_hh = layer["w_ih"], layer["w_hh"]
        b_ih, b_hh = layer["b_ih"], layer["b_hh"]
        B, T, _ = h_in.shape
        H = w_hh.shape[1]
        h = jnp.zeros((B, H), jnp.float32)
        c = jnp.zeros((B, H), jnp.float32)
        outs = []
        for t in range(T):
            gates = h_in[:, t] @ w_ih.T + b_ih + h @ w_hh.T + b_hh
            i_g, f_g, g_g, o_g = jnp.split(gates, 4, axis=-1)
            i_g = jax.nn.sigmoid(i_g)
            f_g = jax.nn.sigmoid(f_g)
            g_g = jnp.tanh(g_g)
            o_g = jax.nn.sigmoid(o_g)
            c = f_g * c + i_g * g_g
            h = o_g * jnp.tanh(c)
            outs.append(h)
        h_in = jnp.stack(outs, axis=1)    # (B, T, H)
    last = h_in[:, -1, :]
    return last @ params["fc_w"].T + params["fc_b"]


# ----------------------------------------------------------------------------
# Deterministic parameter init (PyTorch-style uniform(-1/sqrt(H), 1/sqrt(H)))
# ----------------------------------------------------------------------------
def init_params(key, input_size, hidden_size=64, num_layers=2):
    bound = 1.0 / (hidden_size ** 0.5)
    layers = []
    for l in range(num_layers):
        d_in = input_size if l == 0 else hidden_size
        key, k1, k2, k3, k4 = jax.random.split(key, 5)
        layers.append({
            "w_ih": jax.random.uniform(k1, (4 * hidden_size, d_in),
                                       jnp.float32, -bound, bound),
            "w_hh": jax.random.uniform(k2, (4 * hidden_size, hidden_size),
                                       jnp.float32, -bound, bound),
            "b_ih": jax.random.uniform(k3, (4 * hidden_size,),
                                       jnp.float32, -bound, bound),
            "b_hh": jax.random.uniform(k4, (4 * hidden_size,),
                                       jnp.float32, -bound, bound),
        })
    key, k5, k6 = jax.random.split(key, 3)
    fc_w = jax.random.uniform(k5, (1, hidden_size), jnp.float32, -bound, bound)
    fc_b = jax.random.uniform(k6, (1,), jnp.float32, -bound, bound)
    return {"lstm": layers, "fc_w": fc_w, "fc_b": fc_b}


# ----------------------------------------------------------------------------
if __name__ == "__main__":
    BATCH, SEQ, INPUT_SIZE, HIDDEN = 2, 8, 16, 64

    key = jax.random.PRNGKey(0)
    key, kx = jax.random.split(key)
    x = jax.random.normal(kx, (BATCH, SEQ, INPUT_SIZE), dtype=jnp.float32)
    params = init_params(key, INPUT_SIZE, hidden_size=HIDDEN, num_layers=2)

    prep = prepare_params(params)            # one-time weight prep (cached)

    out = jax.block_until_ready(lstm_model_forward(x, prep))
    ref = jax.block_until_ready(lstm_model_ref(x, params))

    assert out.shape == (BATCH, 1), out.shape
    assert jnp.allclose(out, ref, rtol=1e-4, atol=1e-4), (out, ref)

    print("KERNEL_OK")
</pallas_src>

<mosaic_0001>
module attributes {stable_mosaic.version = 11 : i64} {
  func.func @_fused_lstm_kernel(%arg0: memref<64x16xf32, #tpu.memory_space<vmem>>, %arg1: memref<16x512xf32, #tpu.memory_space<vmem>>, %arg2: memref<128x512xf32, #tpu.memory_space<vmem>>, %arg3: memref<1x512xf32, #tpu.memory_space<vmem>>, %arg4: memref<256x512xf32, #tpu.memory_space<vmem>>, %arg5: memref<1x512xf32, #tpu.memory_space<vmem>>, %arg6: memref<1x128xf32, #tpu.memory_space<vmem>>, %arg7: memref<1x1xf32, #tpu.memory_space<vmem>>, %arg8: memref<8x1xf32, #tpu.memory_space<vmem>>) attributes {dimension_semantics = [], scalar_prefetch = 0 : i64, scratch_operands = 0 : i64, tpu.core_type = #tpu.core_type<tc>} {
    %c0 = arith.constant 0 : index
    %c0_0 = arith.constant 0 : index
    %0 = vector.load %arg0[%c0, %c0_0] : memref<64x16xf32, #tpu.memory_space<vmem>>, vector<64x16xf32>
    %c0_1 = arith.constant 0 : index
    %c0_2 = arith.constant 0 : index
    %1 = vector.load %arg1[%c0_1, %c0_2] : memref<16x512xf32, #tpu.memory_space<vmem>>, vector<16x512xf32>
    %cst = arith.constant dense<0.000000e+00> : vector<64x512xf32>
    %2 = tpu.matmul %0, %1, %cst {dimension_numbers = #tpu.dot_dimension_numbers<[1], [0], [0], [1], [0, 0, 1, 1], [], []>} : vector<64x16xf32>, vector<16x512xf32>, vector<64x512xf32> -> vector<64x512xf32>
    %c0_3 = arith.constant 0 : index
    %c0_4 = arith.constant 0 : index
    %3 = vector.load %arg3[%c0_3, %c0_4] : memref<1x512xf32, #tpu.memory_space<vmem>>, vector<1x512xf32>
    %4 = vector.broadcast %3 : vector<1x512xf32> to vector<64x512xf32>
    %5 = arith.addf %2, %4 : vector<64x512xf32>
    %c0_5 = arith.constant 0 : index
    %c0_6 = arith.constant 0 : index
    %6 = vector.load %arg2[%c0_5, %c0_6] : memref<128x512xf32, #tpu.memory_space<vmem>>, vector<128x512xf32>
    %c0_7 = arith.constant 0 : index
    %c0_8 = arith.constant 0 : index
    %7 = vector.load %arg4[%c0_7, %c0_8] : memref<256x512xf32, #tpu.memory_space<vmem>>, vector<256x512xf32>
    %c0_9 = arith.constant 0 : index
    %c0_10 = arith.constant 0 : index
    %8 = vector.load %arg5[%c0_9, %c0_10] : memref<1x512xf32, #tpu.memory_space<vmem>>, vector<1x512xf32>
    %cst_11 = arith.constant 0.000000e+00 : f32
    %9 = vector.broadcast %cst_11 : f32 to vector<8x128xf32>
    %cst_12 = arith.constant 0.000000e+00 : f32
    %10 = vector.broadcast %cst_12 : f32 to vector<8x128xf32>
    %cst_13 = arith.constant 0.000000e+00 : f32
    %11 = vector.broadcast %cst_13 : f32 to vector<8x128xf32>
    %cst_14 = arith.constant 0.000000e+00 : f32
    %12 = vector.broadcast %cst_14 : f32 to vector<8x128xf32>
    %13 = vector.extract_strided_slice %5 {offsets = [0, 0], sizes = [8, 512], strides = [1, 1]} : vector<64x512xf32> to vector<8x512xf32>
    %cst_15 = arith.constant dense<0.000000e+00> : vector<8x512xf32>
    %14 = tpu.matmul %9, %6, %cst_15 {dimension_numbers = #tpu.dot_dimension_numbers<[1], [0], [0], [1], [0, 0, 1, 1], [], []>} : vector<8x128xf32>, vector<128x512xf32>, vector<8x512xf32> -> vector<8x512xf32>
    %15 = arith.addf %13, %14 : vector<8x512xf32>
    %16 = vector.extract_strided_slice %15 {offsets = [0, 0], sizes = [8, 384], strides = [1, 1]} : vector<8x512xf32> to vector<8x384xf32>
    %17 = arith.negf %16 : vector<8x384xf32>
    %18 = math.exp %17 : vector<8x384xf32>
    %cst_16 = arith.constant 1.000000e+00 : f32
    %19 = vector.broadcast %cst_16 : f32 to vector<8x384xf32>
    %20 = arith.addf %19, %18 : vector<8x384xf32>
    %21 = arith.divf %19, %20 : vector<8x384xf32>
    %22 = vector.extract_strided_slice %21 {offsets = [0, 0], sizes = [8, 128], strides = [1, 1]} : vector<8x384xf32> to vector<8x128xf32>
    %23 = vector.extract_strided_slice %21 {offsets = [0, 128], sizes = [8, 128], strides = [1, 1]} : vector<8x384xf32> to vector<8x128xf32>
    %24 = vector.extract_strided_slice %21 {offsets = [0, 256], sizes = [8, 128], strides = [1, 1]} : vector<8x384xf32> to vector<8x128xf32>
    %25 = vector.extract_strided_slice %15 {offsets = [0, 384], sizes = [8, 128], strides = [1, 1]} : vector<8x512xf32> to vector<8x128xf32>
    %26 = math.tanh %25 : vector<8x128xf32>
    %27 = arith.mulf %23, %10 : vector<8x128xf32>
    %28 = arith.mulf %22, %26 : vector<8x128xf32>
    %29 = arith.addf %27, %28 : vector<8x128xf32>
    %30 = math.tanh %29 : vector<8x128xf32>
    %31 = arith.mulf %24, %30 : vector<8x128xf32>
    %32 = tpu.concatenate %31, %11 in 1 : vector<8x128xf32>, vector<8x128xf32> -> vector<8x256xf32>
    %cst_17 = arith.constant dense<0.000000e+00> : vector<8x512xf32>
    %33 = tpu.matmul %32, %7, %cst_17 {dimension_numbers = #tpu.dot_dimension_numbers<[1], [0], [0], [1], [0, 0, 1, 1], [], []>} : vector<8x256xf32>, vector<256x512xf32>, vector<8x512xf32> -> vector<8x512xf32>
    %34 = vector.broadcast %8 : vector<1x512xf32> to vector<8x512xf32>
    %35 = arith.addf %33, %34 : vector<8x512xf32>
    %36 = vector.extract_strided_slice %35 {offsets = [0, 0], sizes = [8, 384], strides = [1, 1]} : vector<8x512xf32> to vector<8x384xf32>
    %37 = arith.negf %36 : vector<8x384xf32>
    %38 = math.exp %37 : vector<8x384xf32>
    %cst_18 = arith.constant 1.000000e+00 : f32
    %39 = vector.broadcast %cst_18 : f32 to vector<8x384xf32>
    %40 = arith.addf %39, %38 : vector<8x384xf32>
    %41 = arith.divf %39, %40 : vector<8x384xf32>
    %42 = vector.extract_strided_slice %41 {offsets = [0, 0], sizes = [8, 128], strides = [1, 1]} : vector<8x384xf32> to vector<8x128xf32>
    %43 = vector.extract_strided_slice %41 {offsets = [0, 128], sizes = [8, 128], strides = [1, 1]} : vector<8x384xf32> to vector<8x128xf32>
    %44 = vector.extract_strided_slice %41 {offsets = [0, 256], sizes = [8, 128], strides = [1, 1]} : vector<8x384xf32> to vector<8x128xf32>
    %45 = vector.extract_strided_slice %35 {offsets = [0, 384], sizes = [8, 128], strides = [1, 1]} : vector<8x512xf32> to vector<8x128xf32>
    %46 = math.tanh %45 : vector<8x128xf32>
    %47 = arith.mulf %43, %12 : vector<8x128xf32>
    %48 = arith.mulf %42, %46 : vector<8x128xf32>
    %49 = arith.addf %47, %48 : vector<8x128xf32>
    %50 = math.tanh %49 : vector<8x128xf32>
    %51 = arith.mulf %44, %50 : vector<8x128xf32>
    %52 = vector.extract_strided_slice %5 {offsets = [8, 0], sizes = [8, 512], strides = [1, 1]} : vector<64x512xf32> to vector<8x512xf32>
    %cst_19 = arith.constant dense<0.000000e+00> : vector<8x512xf32>
    %53 = tpu.matmul %31, %6, %cst_19 {dimension_numbers = #tpu.dot_dimension_numbers<[1], [0], [0], [1], [0, 0, 1, 1], [], []>} : vector<8x128xf32>, vector<128x512xf32>, vector<8x512xf32> -> vector<8x512xf32>
    %54 = arith.addf %52, %53 : vector<8x512xf32>
    %55 = vector.extract_strided_slice %54 {offsets = [0, 0], sizes = [8, 384], strides = [1, 1]} : vector<8x512xf32> to vector<8x384xf32>
    %56 = arith.negf %55 : vector<8x384xf32>
    %57 = math.exp %56 : vector<8x384xf32>
    %cst_20 = arith.constant 1.000000e+00 : f32
    %58 = vector.broadcast %cst_20 : f32 to vector<8x384xf32>
    %59 = arith.addf %58, %57 : vector<8x384xf32>
    %60 = arith.divf %58, %59 : vector<8x384xf32>
    %61 = vector.extract_strided_slice %60 {offsets = [0, 0], sizes = [8, 128], strides = [1, 1]} : vector<8x384xf32> to vector<8x128xf32>
    %62 = vector.extract_strided_slice %60 {offsets = [0, 128], sizes = [8, 128], strides = [1, 1]} : vector<8x384xf32> to vector<8x128xf32>
    %63 = vector.extract_strided_slice %60 {offsets = [0, 256], sizes = [8, 128], strides = [1, 1]} : vector<8x384xf32> to vector<8x128xf32>
    %64 = vector.extract_strided_slice %54 {offsets = [0, 384], sizes = [8, 128], strides = [1, 1]} : vector<8x512xf32> to vector<8x128xf32>
    %65 = math.tanh %64 : vector<8x128xf32>
    %66 = arith.mulf %62, %29 : vector<8x128xf32>
    %67 = arith.mulf %61, %65 : vector<8x128xf32>
    %68 = arith.addf %66, %67 : vector<8x128xf32>
    %69 = math.tanh %68 : vector<8x128xf32>
    %70 = arith.mulf %63, %69 : vector<8x128xf32>
    %71 = tpu.concatenate %70, %51 in 1 : vector<8x128xf32>, vector<8x128xf32> -> vector<8x256xf32>
    %cst_21 = arith.constant dense<0.000000e+00> : vector<8x512xf32>
    %72 = tpu.matmul %71, %7, %cst_21 {dimension_numbers = #tpu.dot_dimension_numbers<[1], [0], [0], [1], [0, 0, 1, 1], [], []>} : vector<8x256xf32>, vector<256x512xf32>, vector<8x512xf32> -> vector<8x512xf32>
    %73 = vector.broadcast %8 : vector<1x512xf32> to vector<8x512xf32>
    %74 = arith.addf %72, %73 : vector<8x512xf32>
    %75 = vector.extract_strided_slice %74 {offsets = [0, 0], sizes = [8, 384], strides = [1, 1]} : vector<8x512xf32> to vector<8x384xf32>
    %76 = arith.negf %75 : vector<8x384xf32>
    %77 = math.exp %76 : vector<8x384xf32>
    %cst_22 = arith.constant 1.000000e+00 : f32
    %78 = vector.broadcast %cst_22 : f32 to vector<8x384xf32>
    %79 = arith.addf %78, %77 : vector<8x384xf32>
    %80 = arith.divf %78, %79 : vector<8x384xf32>
    %81 = vector.extract_strided_slice %80 {offsets = [0, 0], sizes = [8, 128], strides = [1, 1]} : vector<8x384xf32> to vector<8x128xf32>
    %82 = vector.extract_strided_slice %80 {offsets = [0, 128], sizes = [8, 128], strides = [1, 1]} : vector<8x384xf32> to vector<8x128xf32>
    %83 = vector.extract_strided_slice %80 {offsets = [0, 256], sizes = [8, 128], strides = [1, 1]} : vector<8x384xf32> to vector<8x128xf32>
    %84 = vector.extract_strided_slice %74 {offsets = [0, 384], sizes = [8, 128], strides = [1, 1]} : vector<8x512xf32> to vector<8x128xf32>
    %85 = math.tanh %84 : vector<8x128xf32>
    %86 = arith.mulf %82, %49 : vector<8x128xf32>
    %87 = arith.mulf %81, %85 : vector<8x128xf32>
    %88 = arith.addf %86, %87 : vector<8x128xf32>
    %89 = math.tanh %88 : vector<8x128xf32>
    %90 = arith.mulf %83, %89 : vector<8x128xf32>
    %91 = vector.extract_strided_slice %5 {offsets = [16, 0], sizes = [8, 512], strides = [1, 1]} : vector<64x512xf32> to vector<8x512xf32>
    %cst_23 = arith.constant dense<0.000000e+00> : vector<8x512xf32>
    %92 = tpu.matmul %70, %6, %cst_23 {dimension_numbers = #tpu.dot_dimension_numbers<[1], [0], [0], [1], [0, 0, 1, 1], [], []>} : vector<8x128xf32>, vector<128x512xf32>, vector<8x512xf32> -> vector<8x512xf32>
    %93 = arith.addf %91, %92 : vector<8x512xf32>
    %94 = vector.extract_strided_slice %93 {offsets = [0, 0], sizes = [8, 384], strides = [1, 1]} : vector<8x512xf32> to vector<8x384xf32>
    %95 = arith.negf %94 : vector<8x384xf32>
    %96 = math.exp %95 : vector<8x384xf32>
    %cst_24 = arith.constant 1.000000e+00 : f32
    %97 = vector.broadcast %cst_24 : f32 to vector<8x384xf32>
    %98 = arith.addf %97, %96 : vector<8x384xf32>
    %99 = arith.divf %97, %98 : vector<8x384xf32>
    %100 = vector.extract_strided_slice %99 {offsets = [0, 0], sizes = [8, 128], strides = [1, 1]} : vector<8x384xf32> to vector<8x128xf32>
    %101 = vector.extract_strided_slice %99 {offsets = [0, 128], sizes = [8, 128], strides = [1, 1]} : vector<8x384xf32> to vector<8x128xf32>
    %102 = vector.extract_strided_slice %99 {offsets = [0, 256], sizes = [8, 128], strides = [1, 1]} : vector<8x384xf32> to vector<8x128xf32>
    %103 = vector.extract_strided_slice %93 {offsets = [0, 384], sizes = [8, 128], strides = [1, 1]} : vector<8x512xf32> to vector<8x128xf32>
    %104 = math.tanh %103 : vector<8x128xf32>
    %105 = arith.mulf %101, %68 : vector<8x128xf32>
    %106 = arith.mulf %100, %104 : vector<8x128xf32>
    %107 = arith.addf %105, %106 : vector<8x128xf32>
    %108 = math.tanh %107 : vector<8x128xf32>
    %109 = arith.mulf %102, %108 : vector<8x128xf32>
    %110 = tpu.concatenate %109, %90 in 1 : vector<8x128xf32>, vector<8x128xf32> -> vector<8x256xf32>
    %cst_25 = arith.constant dense<0.000000e+00> : vector<8x512xf32>
    %111 = tpu.matmul %110, %7, %cst_25 {dimension_numbers = #tpu.dot_dimension_numbers<[1], [0], [0], [1], [0, 0, 1, 1], [], []>} : vector<8x256xf32>, vector<256x512xf32>, vector<8x512xf32> -> vector<8x512xf32>
    %112 = vector.broadcast %8 : vector<1x512xf32> to vector<8x512xf32>
    %113 = arith.addf %111, %112 : vector<8x512xf32>
    %114 = vector.extract_strided_slice %113 {offsets = [0, 0], sizes = [8, 384], strides = [1, 1]} : vector<8x512xf32> to vector<8x384xf32>
    %115 = arith.negf %114 : vector<8x384xf32>
    %116 = math.exp %115 : vector<8x384xf32>
    %cst_26 = arith.constant 1.000000e+00 : f32
    %117 = vector.broadcast %cst_26 : f32 to vector<8x384xf32>
    %118 = arith.addf %117, %116 : vector<8x384xf32>
    %119 = arith.divf %117, %118 : vector<8x384xf32>
    %120 = vector.extract_strided_slice %119 {offsets = [0, 0], sizes = [8, 128], strides = [1, 1]} : vector<8x384xf32> to vector<8x128xf32>
    %121 = vector.extract_strided_slice %119 {offsets = [0, 128], sizes = [8, 128], strides = [1, 1]} : vector<8x384xf32> to vector<8x128xf32>
    %122 = vector.extract_strided_slice %119 {offsets = [0, 256], sizes = [8, 128], strides = [1, 1]} : vector<8x384xf32> to vector<8x128xf32>
    %123 = vector.extract_strided_slice %113 {offsets = [0, 384], sizes = [8, 128], strides = [1, 1]} : vector<8x512xf32> to vector<8x128xf32>
    %124 = math.tanh %123 : vector<8x128xf32>
    %125 = arith.mulf %121, %88 : vector<8x128xf32>
    %126 = arith.mulf %120, %124 : vector<8x128xf32>
    %127 = arith.addf %125, %126 : vector<8x128xf32>
    %128 = math.tanh %127 : vector<8x128xf32>
    %129 = arith.mulf %122, %128 : vector<8x128xf32>
    %130 = vector.extract_strided_slice %5 {offsets = [24, 0], sizes = [8, 512], strides = [1, 1]} : vector<64x512xf32> to vector<8x512xf32>
    %cst_27 = arith.constant dense<0.000000e+00> : vector<8x512xf32>
    %131 = tpu.matmul %109, %6, %cst_27 {dimension_numbers = #tpu.dot_dimension_numbers<[1], [0], [0], [1], [0, 0, 1, 1], [], []>} : vector<8x128xf32>, vector<128x512xf32>, vector<8x512xf32> -> vector<8x512xf32>
    %132 = arith.addf %130, %131 : vector<8x512xf32>
    %133 = vector.extract_strided_slice %132 {offsets = [0, 0], sizes = [8, 384], strides = [1, 1]} : vector<8x512xf32> to vector<8x384xf32>
    %134 = arith.negf %133 : vector<8x384xf32>
    %135 = math.exp %134 : vector<8x384xf32>
    %cst_28 = arith.constant 1.000000e+00 : f32
    %136 = vector.broadcast %cst_28 : f32 to vector<8x384xf32>
    %137 = arith.addf %136, %135 : vector<8x384xf32>
    %138 = arith.divf %136, %137 : vector<8x384xf32>
    %139 = vector.extract_strided_slice %138 {offsets = [0, 0], sizes = [8, 128], strides = [1, 1]} : vector<8x384xf32> to vector<8x128xf32>
    %140 = vector.extract_strided_slice %138 {offsets = [0, 128], sizes = [8, 128], strides = [1, 1]} : vector<8x384xf32> to vector<8x128xf32>
    %141 = vector.extract_strided_slice %138 {offsets = [0, 256], sizes = [8, 128], strides = [1, 1]} : vector<8x384xf32> to vector<8x128xf32>
    %142 = vector.extract_strided_slice %132 {offsets = [0, 384], sizes = [8, 128], strides = [1, 1]} : vector<8x512xf32> to vector<8x128xf32>
    %143 = math.tanh %142 : vector<8x128xf32>
    %144 = arith.mulf %140, %107 : vector<8x128xf32>
    %145 = arith.mulf %139, %143 : vector<8x128xf32>
    %146 = arith.addf %144, %145 : vector<8x128xf32>
    %147 = math.tanh %146 : vector<8x128xf32>
    %148 = arith.mulf %141, %147 : vector<8x128xf32>
    %149 = tpu.concatenate %148, %129 in 1 : vector<8x128xf32>, vector<8x128xf32> -> vector<8x256xf32>
    %cst_29 = arith.constant dense<0.000000e+00> : vector<8x512xf32>
    %150 = tpu.matmul %149, %7, %cst_29 {dimension_numbers = #tpu.dot_dimension_numbers<[1], [0], [0], [1], [0, 0, 1, 1], [], []>} : vector<8x256xf32>, vector<256x512xf32>, vector<8x512xf32> -> vector<8x512xf32>
    %151 = vector.broadcast %8 : vector<1x512xf32> to vector<8x512xf32>
    %152 = arith.addf %150, %151 : vector<8x512xf32>
    %153 = vector.extract_strided_slice %152 {offsets = [0, 0], sizes = [8, 384], strides = [1, 1]} : vector<8x512xf32> to vector<8x384xf32>
    %154 = arith.negf %153 : vector<8x384xf32>
    %155 = math.exp %154 : vector<8x384xf32>
    %cst_30 = arith.constant 1.000000e+00 : f32
    %156 = vector.broadcast %cst_30 : f32 to vector<8x384xf32>
    %157 = arith.addf %156, %155 : vector<8x384xf32>
    %158 = arith.divf %156, %157 : vector<8x384xf32>
    %159 = vector.extract_strided_slice %158 {offsets = [0, 0], sizes = [8, 128], strides = [1, 1]} : vector<8x384xf32> to vector<8x128xf32>
    %160 = vector.extract_strided_slice %158 {offsets = [0, 128], sizes = [8, 128], strides = [1, 1]} : vector<8x384xf32> to vector<8x128xf32>
    %161 = vector.extract_strided_slice %158 {offsets = [0, 256], sizes = [8, 128], strides = [1, 1]} : vector<8x384xf32> to vector<8x128xf32>
    %162 = vector.extract_strided_slice %152 {offsets = [0, 384], sizes = [8, 128], strides = [1, 1]} : vector<8x512xf32> to vector<8x128xf32>
    %163 = math.tanh %162 : vector<8x128xf32>
    %164 = arith.mulf %160, %127 : vector<8x128xf32>
    %165 = arith.mulf %159, %163 : vector<8x128xf32>
    %166 = arith.addf %164, %165 : vector<8x128xf32>
    %167 = math.tanh %166 : vector<8x128xf32>
    %168 = arith.mulf %161, %167 : vector<8x128xf32>
    %169 = vector.extract_strided_slice %5 {offsets = [32, 0], sizes = [8, 512], strides = [1, 1]} : vector<64x512xf32> to vector<8x512xf32>
    %cst_31 = arith.constant dense<0.000000e+00> : vector<8x512xf32>
    %170 = tpu.matmul %148, %6, %cst_31 {dimension_numbers = #tpu.dot_dimension_numbers<[1], [0], [0], [1], [0, 0, 1, 1], [], []>} : vector<8x128xf32>, vector<128x512xf32>, vector<8x512xf32> -> vector<8x512xf32>
    %171 = arith.addf %169, %170 : vector<8x512xf32>
    %172 = vector.extract_strided_slice %171 {offsets = [0, 0], sizes = [8, 384], strides = [1, 1]} : vector<8x512xf32> to vector<8x384xf32>
    %173 = arith.negf %172 : vector<8x384xf32>
    %174 = math.exp %173 : vector<8x384xf32>
    %cst_32 = arith.constant 1.000000e+00 : f32
    %175 = vector.broadcast %cst_32 : f32 to vector<8x384xf32>
    %176 = arith.addf %175, %174 : vector<8x384xf32>
    %177 = arith.divf %175, %176 : vector<8x384xf32>
    %178 = vector.extract_strided_slice %177 {offsets = [0, 0], sizes = [8, 128], strides = [1, 1]} : vector<8x384xf32> to vector<8x128xf32>
    %179 = vector.extract_strided_slice %177 {offsets = [0, 128], sizes = [8, 128], strides = [1, 1]} : vector<8x384xf32> to vector<8x128xf32>
    %180 = vector.extract_strided_slice %177 {offsets = [0, 256], sizes = [8, 128], strides = [1, 1]} : vector<8x384xf32> to vector<8x128xf32>
    %181 = vector.extract_strided_slice %171 {offsets = [0, 384], sizes = [8, 128], strides = [1, 1]} : vector<8x512xf32> to vector<8x128xf32>
    %182 = math.tanh %181 : vector<8x128xf32>
    %183 = arith.mulf %179, %146 : vector<8x128xf32>
    %184 = arith.mulf %178, %182 : vector<8x128xf32>
    %185 = arith.addf %183, %184 : vector<8x128xf32>
    %186 = math.tanh %185 : vector<8x128xf32>
    %187 = arith.mulf %180, %186 : vector<8x128xf32>
    %188 = tpu.concatenate %187, %168 in 1 : vector<8x128xf32>, vector<8x128xf32> -> vector<8x256xf32>
    %cst_33 = arith.constant dense<0.000000e+00> : vector<8x512xf32>
    %189 = tpu.matmul %188, %7, %cst_33 {dimension_numbers = #tpu.dot_dimension_numbers<[1], [0], [0], [1], [0, 0, 1, 1], [], []>} : vector<8x256xf32>, vector<256x512xf32>, vector<8x512xf32> -> vector<8x512xf32>
    %190 = vector.broadcast %8 : vector<1x512xf32> to vector<8x512xf32>
    %191 = arith.addf %189, %190 : vector<8x512xf32>
    %192 = vector.extract_strided_slice %191 {offsets = [0, 0], sizes = [8, 384], strides = [1, 1]} : vector<8x512xf32> to vector<8x384xf32>
    %193 = arith.negf %192 : vector<8x384xf32>
    %194 = math.exp %193 : vector<8x384xf32>
    %cst_34 = arith.constant 1.000000e+00 : f32
    %195 = vector.broadcast %cst_34 : f32 to vector<8x384xf32>
    %196 = arith.addf %195, %194 : vector<8x384xf32>
    %197 = arith.divf %195, %196 : vector<8x384xf32>
    %198 = vector.extract_strided_slice %197 {offsets = [0, 0], sizes = [8, 128], strides = [1, 1]} : vector<8x384xf32> to vector<8x128xf32>
    %199 = vector.extract_strided_slice %197 {offsets = [0, 128], sizes = [8, 128], strides = [1, 1]} : vector<8x384xf32> to vector<8x128xf32>
    %200 = vector.extract_strided_slice %197 {offsets = [0, 256], sizes = [8, 128], strides = [1, 1]} : vector<8x384xf32> to vector<8x128xf32>
    %201 = vector.extract_strided_slice %191 {offsets = [0, 384], sizes = [8, 128], strides = [1, 1]} : vector<8x512xf32> to vector<8x128xf32>
    %202 = math.tanh %201 : vector<8x128xf32>
    %203 = arith.mulf %199, %166 : vector<8x128xf32>
    %204 = arith.mulf %198, %202 : vector<8x128xf32>
    %205 = arith.addf %203, %204 : vector<8x128xf32>
    %206 = math.tanh %205 : vector<8x128xf32>
    %207 = arith.mulf %200, %206 : vector<8x128xf32>
    %208 = vector.extract_strided_slice %5 {offsets = [40, 0], sizes = [8, 512], strides = [1, 1]} : vector<64x512xf32> to vector<8x512xf32>
    %cst_35 = arith.constant dense<0.000000e+00> : vector<8x512xf32>
    %209 = tpu.matmul %187, %6, %cst_35 {dimension_numbers = #tpu.dot_dimension_numbers<[1], [0], [0], [1], [0, 0, 1, 1], [], []>} : vector<8x128xf32>, vector<128x512xf32>, vector<8x512xf32> -> vector<8x512xf32>
    %210 = arith.addf %208, %209 : vector<8x512xf32>
    %211 = vector.extract_strided_slice %210 {offsets = [0, 0], sizes = [8, 384], strides = [1, 1]} : vector<8x512xf32> to vector<8x384xf32>
    %212 = arith.negf %211 : vector<8x384xf32>
    %213 = math.exp %212 : vector<8x384xf32>
    %cst_36 = arith.constant 1.000000e+00 : f32
    %214 = vector.broadcast %cst_36 : f32 to vector<8x384xf32>
    %215 = arith.addf %214, %213 : vector<8x384xf32>
    %216 = arith.divf %214, %215 : vector<8x384xf32>
    %217 = vector.extract_strided_slice %216 {offsets = [0, 0], sizes = [8, 128], strides = [1, 1]} : vector<8x384xf32> to vector<8x128xf32>
    %218 = vector.extract_strided_slice %216 {offsets = [0, 128], sizes = [8, 128], strides = [1, 1]} : vector<8x384xf32> to vector<8x128xf32>
    %219 = vector.extract_strided_slice %216 {offsets = [0, 256], sizes = [8, 128], strides = [1, 1]} : vector<8x384xf32> to vector<8x128xf32>
    %220 = vector.extract_strided_slice %210 {offsets = [0, 384], sizes = [8, 128], strides = [1, 1]} : vector<8x512xf32> to vector<8x128xf32>
    %221 = math.tanh %220 : vector<8x128xf32>
    %222 = arith.mulf %218, %185 : vector<8x128xf32>
    %223 = arith.mulf %217, %221 : vector<8x128xf32>
    %224 = arith.addf %222, %223 : vector<8x128xf32>
    %225 = math.tanh %224 : vector<8x128xf32>
    %226 = arith.mulf %219, %225 : vector<8x128xf32>
    %227 = tpu.concatenate %226, %207 in 1 : vector<8x128xf32>, vector<8x128xf32> -> vector<8x256xf32>
    %cst_37 = arith.constant dense<0.000000e+00> : vector<8x512xf32>
    %228 = tpu.matmul %227, %7, %cst_37 {dimension_numbers = #tpu.dot_dimension_numbers<[1], [0], [0], [1], [0, 0, 1, 1], [], []>} : vector<8x256xf32>, vector<256x512xf32>, vector<8x512xf32> -> vector<8x512xf32>
    %229 = vector.broadcast %8 : vector<1x512xf32> to vector<8x512xf32>
    %230 = arith.addf %228, %229 : vector<8x512xf32>
    %231 = vector.extract_strided_slice %230 {offsets = [0, 0], sizes = [8, 384], strides = [1, 1]} : vector<8x512xf32> to vector<8x384xf32>
    %232 = arith.negf %231 : vector<8x384xf32>
    %233 = math.exp %232 : vector<8x384xf32>
    %cst_38 = arith.constant 1.000000e+00 : f32
    %234 = vector.broadcast %cst_38 : f32 to vector<8x384xf32>
    %235 = arith.addf %234, %233 : vector<8x384xf32>
    %236 = arith.divf %234, %235 : vector<8x384xf32>
    %237 = vector.extract_strided_slice %236 {offsets = [0, 0], sizes = [8, 128], strides = [1, 1]} : vector<8x384xf32> to vector<8x128xf32>
    %238 = vector.extract_strided_slice %236 {offsets = [0, 128], sizes = [8, 128], strides = [1, 1]} : vector<8x384xf32> to vector<8x128xf32>
    %239 = vector.extract_strided_slice %236 {offsets = [0, 256], sizes = [8, 128], strides = [1, 1]} : vector<8x384xf32> to vector<8x128xf32>
    %240 = vector.extract_strided_slice %230 {offsets = [0, 384], sizes = [8, 128], strides = [1, 1]} : vector<8x512xf32> to vector<8x128xf32>
    %241 = math.tanh %240 : vector<8x128xf32>
    %242 = arith.mulf %238, %205 : vector<8x128xf32>
    %243 = arith.mulf %237, %241 : vector<8x128xf32>
    %244 = arith.addf %242, %243 : vector<8x128xf32>
    %245 = math.tanh %244 : vector<8x128xf32>
    %246 = arith.mulf %239, %245 : vector<8x128xf32>
    %247 = vector.extract_strided_slice %5 {offsets = [48, 0], sizes = [8, 512], strides = [1, 1]} : vector<64x512xf32> to vector<8x512xf32>
    %cst_39 = arith.constant dense<0.000000e+00> : vector<8x512xf32>
    %248 = tpu.matmul %226, %6, %cst_39 {dimension_numbers = #tpu.dot_dimension_numbers<[1], [0], [0], [1], [0, 0, 1, 1], [], []>} : vector<8x128xf32>, vector<128x512xf32>, vector<8x512xf32> -> vector<8x512xf32>
    %249 = arith.addf %247, %248 : vector<8x512xf32>
    %250 = vector.extract_strided_slice %249 {offsets = [0, 0], sizes = [8, 384], strides = [1, 1]} : vector<8x512xf32> to vector<8x384xf32>
    %251 = arith.negf %250 : vector<8x384xf32>
    %252 = math.exp %251 : vector<8x384xf32>
    %cst_40 = arith.constant 1.000000e+00 : f32
    %253 = vector.broadcast %cst_40 : f32 to vector<8x384xf32>
    %254 = arith.addf %253, %252 : vector<8x384xf32>
    %255 = arith.divf %253, %254 : vector<8x384xf32>
    %256 = vector.extract_strided_slice %255 {offsets = [0, 0], sizes = [8, 128], strides = [1, 1]} : vector<8x384xf32> to vector<8x128xf32>
    %257 = vector.extract_strided_slice %255 {offsets = [0, 128], sizes = [8, 128], strides = [1, 1]} : vector<8x384xf32> to vector<8x128xf32>
    %258 = vector.extract_strided_slice %255 {offsets = [0, 256], sizes = [8, 128], strides = [1, 1]} : vector<8x384xf32> to vector<8x128xf32>
    %259 = vector.extract_strided_slice %249 {offsets = [0, 384], sizes = [8, 128], strides = [1, 1]} : vector<8x512xf32> to vector<8x128xf32>
    %260 = math.tanh %259 : vector<8x128xf32>
    %261 = arith.mulf %257, %224 : vector<8x128xf32>
    %262 = arith.mulf %256, %260 : vector<8x128xf32>
    %263 = arith.addf %261, %262 : vector<8x128xf32>
    %264 = math.tanh %263 : vector<8x128xf32>
    %265 = arith.mulf %258, %264 : vector<8x128xf32>
    %266 = tpu.concatenate %265, %246 in 1 : vector<8x128xf32>, vector<8x128xf32> -> vector<8x256xf32>
    %cst_41 = arith.constant dense<0.000000e+00> : vector<8x512xf32>
    %267 = tpu.matmul %266, %7, %cst_41 {dimension_numbers = #tpu.dot_dimension_numbers<[1], [0], [0], [1], [0, 0, 1, 1], [], []>} : vector<8x256xf32>, vector<256x512xf32>, vector<8x512xf32> -> vector<8x512xf32>
    %268 = vector.broadcast %8 : vector<1x512xf32> to vector<8x512xf32>
    %269 = arith.addf %267, %268 : vector<8x512xf32>
    %270 = vector.extract_strided_slice %269 {offsets = [0, 0], sizes = [8, 384], strides = [1, 1]} : vector<8x512xf32> to vector<8x384xf32>
    %271 = arith.negf %270 : vector<8x384xf32>
    %272 = math.exp %271 : vector<8x384xf32>
    %cst_42 = arith.constant 1.000000e+00 : f32
    %273 = vector.broadcast %cst_42 : f32 to vector<8x384xf32>
    %274 = arith.addf %273, %272 : vector<8x384xf32>
    %275 = arith.divf %273, %274 : vector<8x384xf32>
    %276 = vector.extract_strided_slice %275 {offsets = [0, 0], sizes = [8, 128], strides = [1, 1]} : vector<8x384xf32> to vector<8x128xf32>
    %277 = vector.extract_strided_slice %275 {offsets = [0, 128], sizes = [8, 128], strides = [1, 1]} : vector<8x384xf32> to vector<8x128xf32>
    %278 = vector.extract_strided_slice %275 {offsets = [0, 256], sizes = [8, 128], strides = [1, 1]} : vector<8x384xf32> to vector<8x128xf32>
    %279 = vector.extract_strided_slice %269 {offsets = [0, 384], sizes = [8, 128], strides = [1, 1]} : vector<8x512xf32> to vector<8x128xf32>
    %280 = math.tanh %279 : vector<8x128xf32>
    %281 = arith.mulf %277, %244 : vector<8x128xf32>
    %282 = arith.mulf %276, %280 : vector<8x128xf32>
    %283 = arith.addf %281, %282 : vector<8x128xf32>
    %284 = math.tanh %283 : vector<8x128xf32>
    %285 = arith.mulf %278, %284 : vector<8x128xf32>
    %286 = vector.extract_strided_slice %5 {offsets = [56, 0], sizes = [8, 512], strides = [1, 1]} : vector<64x512xf32> to vector<8x512xf32>
    %cst_43 = arith.constant dense<0.000000e+00> : vector<8x512xf32>
    %287 = tpu.matmul %265, %6, %cst_43 {dimension_numbers = #tpu.dot_dimension_numbers<[1], [0], [0], [1], [0, 0, 1, 1], [], []>} : vector<8x128xf32>, vector<128x512xf32>, vector<8x512xf32> -> vector<8x512xf32>
    %288 = arith.addf %286, %287 : vector<8x512xf32>
    %289 = vector.extract_strided_slice %288 {offsets = [0, 0], sizes = [8, 384], strides = [1, 1]} : vector<8x512xf32> to vector<8x384xf32>
    %290 = arith.negf %289 : vector<8x384xf32>
    %291 = math.exp %290 : vector<8x384xf32>
    %cst_44 = arith.constant 1.000000e+00 : f32
    %292 = vector.broadcast %cst_44 : f32 to vector<8x384xf32>
    %293 = arith.addf %292, %291 : vector<8x384xf32>
    %294 = arith.divf %292, %293 : vector<8x384xf32>
    %295 = vector.extract_strided_slice %294 {offsets = [0, 0], sizes = [8, 128], strides = [1, 1]} : vector<8x384xf32> to vector<8x128xf32>
    %296 = vector.extract_strided_slice %294 {offsets = [0, 128], sizes = [8, 128], strides = [1, 1]} : vector<8x384xf32> to vector<8x128xf32>
    %297 = vector.extract_strided_slice %294 {offsets = [0, 256], sizes = [8, 128], strides = [1, 1]} : vector<8x384xf32> to vector<8x128xf32>
    %298 = vector.extract_strided_slice %288 {offsets = [0, 384], sizes = [8, 128], strides = [1, 1]} : vector<8x512xf32> to vector<8x128xf32>
    %299 = math.tanh %298 : vector<8x128xf32>
    %300 = arith.mulf %296, %263 : vector<8x128xf32>
    %301 = arith.mulf %295, %299 : vector<8x128xf32>
    %302 = arith.addf %300, %301 : vector<8x128xf32>
    %303 = math.tanh %302 : vector<8x128xf32>
    %304 = arith.mulf %297, %303 : vector<8x128xf32>
    %305 = tpu.concatenate %304, %285 in 1 : vector<8x128xf32>, vector<8x128xf32> -> vector<8x256xf32>
    %cst_45 = arith.constant dense<0.000000e+00> : vector<8x512xf32>
    %306 = tpu.matmul %305, %7, %cst_45 {dimension_numbers = #tpu.dot_dimension_numbers<[1], [0], [0], [1], [0, 0, 1, 1], [], []>} : vector<8x256xf32>, vector<256x512xf32>, vector<8x512xf32> -> vector<8x512xf32>
    %307 = vector.broadcast %8 : vector<1x512xf32> to vector<8x512xf32>
    %308 = arith.addf %306, %307 : vector<8x512xf32>
    %309 = vector.extract_strided_slice %308 {offsets = [0, 0], sizes = [8, 384], strides = [1, 1]} : vector<8x512xf32> to vector<8x384xf32>
    %310 = arith.negf %309 : vector<8x384xf32>
    %311 = math.exp %310 : vector<8x384xf32>
    %cst_46 = arith.constant 1.000000e+00 : f32
    %312 = vector.broadcast %cst_46 : f32 to vector<8x384xf32>
    %313 = arith.addf %312, %311 : vector<8x384xf32>
    %314 = arith.divf %312, %313 : vector<8x384xf32>
    %315 = vector.extract_strided_slice %314 {offsets = [0, 0], sizes = [8, 128], strides = [1, 1]} : vector<8x384xf32> to vector<8x128xf32>
    %316 = vector.extract_strided_slice %314 {offsets = [0, 128], sizes = [8, 128], strides = [1, 1]} : vector<8x384xf32> to vector<8x128xf32>
    %317 = vector.extract_strided_slice %314 {offsets = [0, 256], sizes = [8, 128], strides = [1, 1]} : vector<8x384xf32> to vector<8x128xf32>
    %318 = vector.extract_strided_slice %308 {offsets = [0, 384], sizes = [8, 128], strides = [1, 1]} : vector<8x512xf32> to vector<8x128xf32>
    %319 = math.tanh %318 : vector<8x128xf32>
    %320 = arith.mulf %316, %283 : vector<8x128xf32>
    %321 = arith.mulf %315, %319 : vector<8x128xf32>
    %322 = arith.addf %320, %321 : vector<8x128xf32>
    %323 = math.tanh %322 : vector<8x128xf32>
    %324 = arith.mulf %317, %323 : vector<8x128xf32>
    %c0_47 = arith.constant 0 : index
    %c0_48 = arith.constant 0 : index
    %325 = vector.load %arg6[%c0_47, %c0_48] : memref<1x128xf32, #tpu.memory_space<vmem>>, vector<1x128xf32>
    %326 = vector.broadcast %325 : vector<1x128xf32> to vector<8x128xf32>
    %327 = arith.mulf %324, %326 : vector<8x128xf32>
    %cst_49 = arith.constant dense<0.000000e+00> : vector<8xf32>
    %328 = vector.multi_reduction <add>, %327, %cst_49 [1] : vector<8x128xf32> to vector<8xf32>
    %329 = vector.shape_cast %328 : vector<8xf32> to vector<8x1xf32>
    %c0_50 = arith.constant 0 : index
    %c0_51 = arith.constant 0 : index
    %330 = vector.load %arg7[%c0_50, %c0_51] : memref<1x1xf32, #tpu.memory_space<vmem>>, vector<1x1xf32>
    %331 = vector.broadcast %330 : vector<1x1xf32> to vector<8x1xf32>
    %332 = arith.addf %329, %331 : vector<8x1xf32>
    %c0_52 = arith.constant 0 : index
    %c0_53 = arith.constant 0 : index
    %333 = vector.load %arg8[%c0_52, %c0_53] : memref<8x1xf32, #tpu.memory_space<vmem>>, vector<8x1xf32>
    tpu.vector_store %arg8[%c0_52, %c0_53], %332 {strides = array<i32>} : memref<8x1xf32, #tpu.memory_space<vmem>>, vector<8x1xf32>,
    return
  }
}

</mosaic_0001>

<llo_original>
// kernel: lstm_model_forward.1
$region0: #{lstm_model_forward.1}
  #allocation0 [shape = 'u32[]', space=smem, size = 0x4, offset = 0x4, fixed_abs, tag = 'smem constant byte address 0x4 - core index']
  #allocation1 [shape = 'u32[144,128]{1,0:T(1,128)}', space=vmem, size = 0x12000, scoped, tag = 'internal scratch']
  #allocation2 [shape = 'f32[1,1]{1,0:T(1,128)S(1)}', space=vmem, size = 0x200, scoped, tag = 'scoped memory for lstm_model_forward.1']
  %s0 = inlined_call_operand.vmem [shape: f32[64,16], index: 0, kind: input, shape index: {}]
  %s1 = inlined_call_operand.vmem [shape: f32[16,512], index: 1, kind: input, shape index: {}]
  %s2 = inlined_call_operand.hbm [shape: f32[128,512], index: 2, kind: input, shape index: {}]
  %s3 = inlined_call_operand.vmem [shape: f32[1,512], index: 3, kind: input, shape index: {}]
  %s4 = inlined_call_operand.hbm [shape: f32[256,512], index: 4, kind: input, shape index: {}]
  %s5 = inlined_call_operand.vmem [shape: f32[1,512], index: 5, kind: input, shape index: {}]
  %s6 = inlined_call_operand.vmem [shape: f32[1,128], index: 6, kind: input, shape index: {}]
  %s7 = inlined_call_operand.<no memory space> [shape: f32[1,1], index: 7, kind: input, shape index: {}]
  %s8 = inlined_call_operand.vmem [shape: f32[8,1], index: 8, kind: output, shape index: {}]
  %s9 = sld [smem:[#allocation0]]
  $region50: #{lstm_model_forward.1} parent=0
    _
  %s11 = ssub.s32 1, %s9
  %s12 = scalar_select 0, %s11, %s9
  %v13 = vstv %s7
  %14 = vst [vmem:[#allocation2] sm:$0x1] %v13
  $region1: #{lstm_model_forward.1} parent=0
    #allocation3 [shape = 'u8[262144]{0}', space=vmem, size = 0x40000, scoped, tag = 'input window, operand 2, single buffered']
    #allocation4 [shape = 's32[1]{0}', space=sflag, size = 0x4, scoped, tag = 'scoped memory for lstm_model_forward.1']
    #allocation5 [shape = 'u8[524288]{0}', space=vmem, size = 0x80000, scoped, tag = 'input window, operand 4, single buffered']
    #allocation6 [shape = 's32[1]{0}', space=sflag, size = 0x4, scoped, tag = 'scoped memory for lstm_model_forward.1']
    %15 = vsyncpa [#allocation4], 0
    %16 = vsyncpa [#allocation6], 0
    // Predicated region
    $region2: #{lstm_model_forward.1} parent=1 // pred_check
      _
    $region3: #{lstm_model_forward.1} parent=1 // pred_check_branch
      %18 = sbr.rel (0) target = $region5
    $region4: #{lstm_model_forward.1} parent=1 // pred_region
      _
    $region5: #{lstm_model_forward.1} parent=1 // pred_fallthru
      _
    // Predicated region
    $region6: #{lstm_model_forward.1} parent=1 // pred_check
      _
    $region7: #{lstm_model_forward.1} parent=1 // pred_check_branch
      %20 = sbr.rel (0) target = $region9
    $region8: #{lstm_model_forward.1} parent=1 // pred_region
      _
    $region9: #{lstm_model_forward.1} parent=1 // pred_fallthru
      _
    // Predicated region
    $region10: #{lstm_model_forward.1} parent=1 // pred_check
      _
    $region11: #{lstm_model_forward.1} parent=1 // pred_check_branch
      %22 = sbr.rel (0) target = $region13
    $region12: #{lstm_model_forward.1} parent=1 // pred_region
      %s24 = ssub.s32 8192, 8192
      %25 = vsyncadd [#allocation4], %s24
      %s26 = sshll.u32 [#allocation3], 4
      %s27 = int_to_ptr.vmem [resolvable:$true] %s26
      %32 = dma.hbm_to_vmem [thread:$0]  %s2, 8192, %s27, [#allocation4], 512, 512, 32
    $region13: #{lstm_model_forward.1} parent=1 // pred_fallthru
      _
    // Predicated region
    $region14: #{lstm_model_forward.1} parent=1 // pred_check
      _
    $region15: #{lstm_model_forward.1} parent=1 // pred_check_branch
      %34 = sbr.rel (0) target = $region17
    $region16: #{lstm_model_forward.1} parent=1 // pred_region
      _
    $region17: #{lstm_model_forward.1} parent=1 // pred_fallthru
      _
    // Predicated region
    $region18: #{lstm_model_forward.1} parent=1 // pred_check
      _
    $region19: #{lstm_model_forward.1} parent=1 // pred_check_branch
      %36 = sbr.rel (0) target = $region21
    $region20: #{lstm_model_forward.1} parent=1 // pred_region
      %s38 = ssub.s32 16384, 16384
      %39 = vsyncadd [#allocation6], %s38
      %s40 = sshll.u32 [#allocation5], 4
      %s41 = int_to_ptr.vmem [resolvable:$true] %s40
      %46 = dma.hbm_to_vmem [thread:$0]  %s4, 16384, %s41, [#allocation6], 512, 512, 32
    $region21: #{lstm_model_forward.1} parent=1 // pred_fallthru
      _
    // Predicated region
    $region22: #{lstm_model_forward.1} parent=1 // pred_check
      _
    $region23: #{lstm_model_forward.1} parent=1 // pred_check_branch
      %48 = sbr.rel (0) target = $region25
    $region24: #{lstm_model_forward.1} parent=1 // pred_region
      _
    $region25: #{lstm_model_forward.1} parent=1 // pred_fallthru
      _
    // Predicated region
    $region26: #{lstm_model_forward.1} parent=1 // pred_check
      _
    $region27: #{lstm_model_forward.1} parent=1 // pred_check_branch
      %50 = sbr.rel (0) target = $region29
    $region28: #{lstm_model_forward.1} parent=1 // pred_region
      _
    $region29: #{lstm_model_forward.1} parent=1 // pred_fallthru
      _
    // Predicated region
    $region30: #{lstm_model_forward.1} parent=1 // pred_check
      _
    $region31: #{lstm_model_forward.1} parent=1 // pred_check_branch
      %52 = sbr.rel (0) target = $region33
    $region32: #{lstm_model_forward.1} parent=1 // pred_region
      _
    $region33: #{lstm_model_forward.1} parent=1 // pred_fallthru
      _
    // Predicated region
    $region34: #{lstm_model_forward.1} parent=1 // pred_check
      _
    $region35: #{lstm_model_forward.1} parent=1 // pred_check_branch
      %54 = sbr.rel (0) target = $region37
    $region36: #{lstm_model_forward.1} parent=1 // pred_region
      %55 = dma.done [#allocation4], 8192
    $region37: #{lstm_model_forward.1} parent=1 // pred_fallthru
      _
    // Predicated region
    $region38: #{lstm_model_forward.1} parent=1 // pred_check
      _
    $region39: #{lstm_model_forward.1} parent=1 // pred_check_branch
      %57 = sbr.rel (0) target = $region41
    $region40: #{lstm_model_forward.1} parent=1 // pred_region
      %58 = dma.done [#allocation6], 16384
    $region41: #{lstm_model_forward.1} parent=1 // pred_fallthru
      _
    %v59 = vld [vmem:[%s0] sm:$0xff]
    %v60 = vld [vmem:[%s0 + $0x8] sm:$0xff]
    %v61 = vld [vmem:[%s0 + $0x10] sm:$0xff]
    %v62 = vld [vmem:[%s0 + $0x18] sm:$0xff]
    %v63 = vld [vmem:[%s0 + $0x20] sm:$0xff]
    %v64 = vld [vmem:[%s0 + $0x28] sm:$0xff]
    %v65 = vld [vmem:[%s0 + $0x30] sm:$0xff]
    %v66 = vld [vmem:[%s0 + $0x38] sm:$0xff]
    %v67 = vld [vmem:[%s1] sm:$0xff]
    %v68 = vld [vmem:[%s1 + $0x8] sm:$0xff]
    %v69 = vld [vmem:[%s1 + $0x10] sm:$0xff]
    %v70 = vld [vmem:[%s1 + $0x18] sm:$0xff]
    %v71 = vld [vmem:[%s1 + $0x20] sm:$0xff]
    %v72 = vld [vmem:[%s1 + $0x28] sm:$0xff]
    %v73 = vld [vmem:[%s1 + $0x30] sm:$0xff]
    %v74 = vld [vmem:[%s1 + $0x38] sm:$0xff]
    %v75 = vld [vmem:[%s3] sm:$0xf]
    %v77 = vlaneseq
    %v78 = vshrl.u32 %v77, 7
    %v79 = vsub.s32 0, %v78
    %v80 = vrot.slane %v75, %v79
    %v81 = vlaneseq
    %v82 = vshrl.u32 %v81, 7
    %v83 = vsub.s32 1, %v82
    %v84 = vrot.slane %v75, %v83
    %v85 = vlaneseq
    %v86 = vshrl.u32 %v85, 7
    %v87 = vsub.s32 2, %v86
    %v88 = vrot.slane %v75, %v87
    %v89 = vlaneseq
    %v90 = vshrl.u32 %v89, 7
    %v91 = vsub.s32 3, %v90
    %v92 = vrot.slane %v75, %v91
    %vm97 = vcmask 130048
    %v99 = vsel %vm97, %v59, 0
    %v102 = vsel %vm97, %v60, 0
    %v105 = vsel %vm97, %v61, 0
    %v108 = vsel %vm97, %v62, 0
    %v111 = vsel %vm97, %v63, 0
    %v114 = vsel %vm97, %v64, 0
    %v117 = vsel %vm97, %v65, 0
    %v120 = vsel %vm97, %v66, 0
    %122 = vmatprep.subr.mxu0 %v68
    %123 = vmatpush1.msra.mxu0 %v67
    %124 = vmatprep.subr.mxu0 %v72
    %125 = vmatpush1.msra.mxu0 %v71
    %126 = vmatprep.subr.mxu0 0.0
    %127 = vmatpush1.msra.mxu0 0.0
    %128 = vmatprep.subr.mxu0 0.0
    %129 = vmatpush1.msra.mxu0 0.0
    %130 = vmatprep.subr.mxu0 0.0
    %131 = vmatpush1.msra.mxu0 0.0
    %132 = vmatprep.subr.mxu0 0.0
    %133 = vmatpush1.msra.mxu0 0.0
    %134 = vmatprep.subr.mxu0 0.0
    %135 = vmatpush1.msra.mxu0 0.0
    %136 = vmatprep.subr.mxu0 0.0
    %137 = vmatpush1.msra.mxu0 0.0
    %138 = vmatprep.subr.mxu0 0.0
    %139 = vmatpush1.msra.mxu0 0.0
    %140 = vmatprep.subr.mxu0 0.0
    %141 = vmatpush1.msra.mxu0 0.0
    %142 = vmatprep.subr.mxu0 0.0
    %143 = vmatpush1.msra.mxu0 0.0
    %144 = vmatprep.subr.mxu0 0.0
    %145 = vmatpush1.msra.mxu0 0.0
    %146 = vmatprep.subr.mxu0 0.0
    %147 = vmatpush1.msra.mxu0 0.0
    %148 = vmatprep.subr.mxu0 0.0
    %149 = vmatpush1.msra.mxu0 0.0
    %150 = vmatprep.subr.mxu0 0.0
    %151 = vmatpush1.msra.mxu0 0.0
    %152 = vmatprep.subr.mxu0 0.0
    %153 = vmatpush1.msra.mxu0 0.0
    %154 = vmatprep.subr.mxu0 0.0
    %155 = vmatpush1.msra.mxu0 0.0
    %156 = vmatprep.subr.mxu0 0.0
    %157 = vmatpush1.msra.mxu0 0.0
    %158 = vmatprep.subr.mxu0 0.0
    %159 = vmatpush1.msra.mxu0 0.0
    %160 = vmatprep.subr.mxu0 0.0
    %161 = vmatpush1.msra.mxu0 0.0
    %162 = vmatprep.subr.mxu0 0.0
    %163 = vmatpush1.msra.mxu0 0.0
    %164 = vmatprep.subr.mxu0 0.0
    %165 = vmatpush1.msra.mxu0 0.0
    %166 = vmatprep.subr.mxu0 0.0
    %167 = vmatpush1.msra.mxu0 0.0
    %168 = vmatprep.subr.mxu0 0.0
    %169 = vmatpush1.msra.mxu0 0.0
    %170 = vmatprep.subr.mxu0 0.0
    %171 = vmatpush1.msra.mxu0 0.0
    %172 = vmatprep.subr.mxu0 0.0
    %173 = vmatpush1.msra.mxu0 0.0
    %174 = vmatprep.subr.mxu0 0.0
    %175 = vmatpush1.msra.mxu0 0.0
    %176 = vmatprep.subr.mxu0 0.0
    %177 = vmatpush1.msra.mxu0 0.0
    %178 = vmatprep.subr.mxu0 0.0
    %179 = vmatpush1.msra.mxu0 0.0
    %180 = vmatprep.subr.mxu0 0.0
    %181 = vmatpush1.msra.mxu0 0.0
    %182 = vmatprep.subr.mxu0 0.0
    %183 = vmatpush1.msra.mxu0 0.0
    %184 = vmatprep.subr.mxu0 0.0
    %185 = vmatpush1.msra.mxu0 0.0
    %186 = vmatprep.mubr.f32.mxu0 0.0
    %187 = vmatmul.mubr.f32.gmra.mrb[0].mxu0 %v99
    %v188 = vpop.f32.mrb[0].mxu0
    %v189 = vadd.f32 %v80, %v188
    %v190 = vpop.f32.mrb[0].mxu0
    %v191 = vadd.f32 %v84, %v190
    %192 = vmatprep.mubr.f32.mxu0 0.0
    %193 = vmatmul.mubr.f32.gmra.mrb[0].mxu0 %v102
    %v194 = vpop.f32.mrb[0].mxu0
    %v195 = vadd.f32 %v80, %v194
    %v196 = vpop.f32.mrb[0].mxu0
    %v197 = vadd.f32 %v84, %v196
    %198 = vmatprep.mubr.f32.mxu0 0.0
    %199 = vmatmul.mubr.f32.gmra.mrb[0].mxu0 %v105
    %v200 = vpop.f32.mrb[0].mxu0
    %v201 = vadd.f32 %v80, %v200
    %v202 = vpop.f32.mrb[0].mxu0
    %v203 = vadd.f32 %v84, %v202
    %204 = vmatprep.mubr.f32.mxu0 0.0
    %205 = vmatmul.mubr.f32.gmra.mrb[0].mxu0 %v108
    %v206 = vpop.f32.mrb[0].mxu0
    %v207 = vadd.f32 %v80, %v206
    %v208 = vpop.f32.mrb[0].mxu0
    %v209 = vadd.f32 %v84, %v208
    %210 = vmatprep.mubr.f32.mxu0 0.0
    %211 = vmatmul.mubr.f32.gmra.mrb[0].mxu0 %v111
    %v212 = vpop.f32.mrb[0].mxu0
    %v213 = vadd.f32 %v80, %v212
    %v214 = vpop.f32.mrb[0].mxu0
    %v215 = vadd.f32 %v84, %v214
    %216 = vmatprep.mubr.f32.mxu0 0.0
    %217 = vmatmul.mubr.f32.gmra.mrb[0].mxu0 %v114
    %v218 = vpop.f32.mrb[0].mxu0
    %v219 = vadd.f32 %v80, %v218
    %v220 = vpop.f32.mrb[0].mxu0
    %v221 = vadd.f32 %v84, %v220
    %222 = vmatprep.mubr.f32.mxu0 0.0
    %223 = vmatmul.mubr.f32.gmra.mrb[0].mxu0 %v117
    %v224 = vpop.f32.mrb[0].mxu0
    %v225 = vadd.f32 %v80, %v224
    %v226 = vpop.f32.mrb[0].mxu0
    %v227 = vadd.f32 %v84, %v226
    %228 = vmatprep.mubr.f32.mxu0 0.0
    %229 = vmatmul.mubr.f32.gmra.mrb[0].mxu0 %v120
    %v230 = vpop.f32.mrb[0].mxu0
    %v231 = vadd.f32 %v80, %v230
    %v232 = vpop.f32.mrb[0].mxu0
    %v233 = vadd.f32 %v84, %v232
    %234 = vdwg.mxu0
    %235 = vmatprep.subr.mxu0 %v70
    %236 = vmatpush1.msra.mxu0 %v69
    %237 = vmatprep.subr.mxu0 %v74
    %238 = vmatpush1.msra.mxu0 %v73
    %239 = vmatprep.subr.mxu0 0.0
    %240 = vmatpush1.msra.mxu0 0.0
    %241 = vmatprep.subr.mxu0 0.0
    %242 = vmatpush1.msra.mxu0 0.0
    %243 = vmatprep.subr.mxu0 0.0
    %244 = vmatpush1.msra.mxu0 0.0
    %245 = vmatprep.subr.mxu0 0.0
    %246 = vmatpush1.msra.mxu0 0.0
    %247 = vmatprep.subr.mxu0 0.0
    %248 = vmatpush1.msra.mxu0 0.0
    %249 = vmatprep.subr.mxu0 0.0
    %250 = vmatpush1.msra.mxu0 0.0
    %251 = vmatprep.subr.mxu0 0.0
    %252 = vmatpush1.msra.mxu0 0.0
    %253 = vmatprep.subr.mxu0 0.0
    %254 = vmatpush1.msra.mxu0 0.0
    %255 = vmatprep.subr.mxu0 0.0
    %256 = vmatpush1.msra.mxu0 0.0
    %257 = vmatprep.subr.mxu0 0.0
    %258 = vmatpush1.msra.mxu0 0.0
    %259 = vmatprep.subr.mxu0 0.0
    %260 = vmatpush1.msra.mxu0 0.0
    %261 = vmatprep.subr.mxu0 0.0
    %262 = vmatpush1.msra.mxu0 0.0
    %263 = vmatprep.subr.mxu0 0.0
    %264 = vmatpush1.msra.mxu0 0.0
    %265 = vmatprep.subr.mxu0 0.0
    %266 = vmatpush1.msra.mxu0 0.0
    %267 = vmatprep.subr.mxu0 0.0
    %268 = vmatpush1.msra.mxu0 0.0
    %269 = vmatprep.subr.mxu0 0.0
    %270 = vmatpush1.msra.mxu0 0.0
    %271 = vmatprep.subr.mxu0 0.0
    %272 = vmatpush1.msra.mxu0 0.0
    %273 = vmatprep.subr.mxu0 0.0
    %274 = vmatpush1.msra.mxu0 0.0
    %275 = vmatprep.subr.mxu0 0.0
    %276 = vmatpush1.msra.mxu0 0.0
    %277 = vmatprep.subr.mxu0 0.0
    %278 = vmatpush1.msra.mxu0 0.0
    %279 = vmatprep.subr.mxu0 0.0
    %280 = vmatpush1.msra.mxu0 0.0
    %281 = vmatprep.subr.mxu0 0.0
    %282 = vmatpush1.msra.mxu0 0.0
    %283 = vmatprep.subr.mxu0 0.0
    %284 = vmatpush1.msra.mxu0 0.0
    %285 = vmatprep.subr.mxu0 0.0
    %286 = vmatpush1.msra.mxu0 0.0
    %287 = vmatprep.subr.mxu0 0.0
    %288 = vmatpush1.msra.mxu0 0.0
    %289 = vmatprep.subr.mxu0 0.0
    %290 = vmatpush1.msra.mxu0 0.0
    %291 = vmatprep.subr.mxu0 0.0
    %292 = vmatpush1.msra.mxu0 0.0
    %293 = vmatprep.subr.mxu0 0.0
    %294 = vmatpush1.msra.mxu0 0.0
    %295 = vmatprep.subr.mxu0 0.0
    %296 = vmatpush1.msra.mxu0 0.0
    %297 = vmatprep.subr.mxu0 0.0
    %298 = vmatpush1.msra.mxu0 0.0
    %299 = vmatprep.mubr.f32.mxu0 0.0
    %300 = vmatmul.mubr.f32.gmra.mrb[0].mxu0 %v99
    %v301 = vpop.f32.mrb[0].mxu0
    %v302 = vadd.f32 %v88, %v301
    %v303 = vpop.f32.mrb[0].mxu0
    %v304 = vadd.f32 %v92, %v303
    %305 = vmatprep.mubr.f32.mxu0 0.0
    %306 = vmatmul.mubr.f32.gmra.mrb[0].mxu0 %v102
    %v307 = vpop.f32.mrb[0].mxu0
    %v308 = vadd.f32 %v88, %v307
    %v309 = vpop.f32.mrb[0].mxu0
    %v310 = vadd.f32 %v92, %v309
    %311 = vmatprep.mubr.f32.mxu0 0.0
    %312 = vmatmul.mubr.f32.gmra.mrb[0].mxu0 %v105
    %v313 = vpop.f32.mrb[0].mxu0
    %v314 = vadd.f32 %v88, %v313
    %v315 = vpop.f32.mrb[0].mxu0
    %v316 = vadd.f32 %v92, %v315
    %317 = vmatprep.mubr.f32.mxu0 0.0
    %318 = vmatmul.mubr.f32.gmra.mrb[0].mxu0 %v108
    %v319 = vpop.f32.mrb[0].mxu0
    %v320 = vadd.f32 %v88, %v319
    %v321 = vpop.f32.mrb[0].mxu0
    %v322 = vadd.f32 %v92, %v321
    %323 = vmatprep.mubr.f32.mxu0 0.0
    %324 = vmatmul.mubr.f32.gmra.mrb[0].mxu0 %v111
    %v325 = vpop.f32.mrb[0].mxu0
    %v326 = vadd.f32 %v88, %v325
    %v327 = vpop.f32.mrb[0].mxu0
    %v328 = vadd.f32 %v92, %v327
    %329 = vmatprep.mubr.f32.mxu0 0.0
    %330 = vmatmul.mubr.f32.gmra.mrb[0].mxu0 %v114
    %v331 = vpop.f32.mrb[0].mxu0
    %v332 = vadd.f32 %v88, %v331
    %v333 = vpop.f32.mrb[0].mxu0
    %v334 = vadd.f32 %v92, %v333
    %335 = vmatprep.mubr.f32.mxu0 0.0
    %336 = vmatmul.mubr.f32.gmra.mrb[0].mxu0 %v117
    %v337 = vpop.f32.mrb[0].mxu0
    %v338 = vadd.f32 %v88, %v337
    %v339 = vpop.f32.mrb[0].mxu0
    %v340 = vadd.f32 %v92, %v339
    %341 = vmatprep.mubr.f32.mxu0 0.0
    %342 = vmatmul.mubr.f32.gmra.mrb[0].mxu0 %v120
    %v343 = vpop.f32.mrb[0].mxu0
    %v344 = vadd.f32 %v88, %v343
    %v345 = vpop.f32.mrb[0].mxu0
    %v346 = vadd.f32 %v92, %v345
    %347 = vdwg.mxu0
    %v348 = vld [vmem:[#allocation3] sm:$0xff]
    %v349 = vld [vmem:[#allocation3 + $0x8] sm:$0xff]
    %v350 = vld [vmem:[#allocation3 + $0x10] sm:$0xff]
    %v351 = vld [vmem:[#allocation3 + $0x18] sm:$0xff]
    %v352 = vld [vmem:[#allocation3 + $0x20] sm:$0xff]
    %v353 = vld [vmem:[#allocation3 + $0x28] sm:$0xff]
    %v354 = vld [vmem:[#allocation3 + $0x30] sm:$0xff]
    %v355 = vld [vmem:[#allocation3 + $0x38] sm:$0xff]
    %v356 = vld [vmem:[#allocation3 + $0x40] sm:$0xff]
    %v357 = vld [vmem:[#allocation3 + $0x48] sm:$0xff]
    %v358 = vld [vmem:[#allocation3 + $0x50] sm:$0xff]
    %v359 = vld [vmem:[#allocation3 + $0x58] sm:$0xff]
    %v360 = vld [vmem:[#allocation3 + $0x60] sm:$0xff]
    %v361 = vld [vmem:[#allocation3 + $0x68] sm:$0xff]
    %v362 = vld [vmem:[#allocation3 + $0x70] sm:$0xff]
    %v363 = vld [vmem:[#allocation3 + $0x78] sm:$0xff]
    %v364 = vld [vmem:[#allocation3 + $0x80] sm:$0xff]
    %v365 = vld [vmem:[#allocation3 + $0x88] sm:$0xff]
    %v366 = vld [vmem:[#allocation3 + $0x90] sm:$0xff]
    %v367 = vld [vmem:[#allocation3 + $0x98] sm:$0xff]
    %v368 = vld [vmem:[#allocation3 + $0xa0] sm:$0xff]
    %v369 = vld [vmem:[#allocation3 + $0xa8] sm:$0xff]
    %v370 = vld [vmem:[#allocation3 + $0xb0] sm:$0xff]
    %v371 = vld [vmem:[#allocation3 + $0xb8] sm:$0xff]
    %v372 = vld [vmem:[#allocation3 + $0xc0] sm:$0xff]
    %v373 = vld [vmem:[#allocation3 + $0xc8] sm:$0xff]
    %v374 = vld [vmem:[#allocation3 + $0xd0] sm:$0xff]
    %v375 = vld [vmem:[#allocation3 + $0xd8] sm:$0xff]
    %v376 = vld [vmem:[#allocation3 + $0xe0] sm:$0xff]
    %v377 = vld [vmem:[#allocation3 + $0xe8] sm:$0xff]
    %v378 = vld [vmem:[#allocation3 + $0xf0] sm:$0xff]
    %v379 = vld [vmem:[#allocation3 + $0xf8] sm:$0xff]
    %v380 = vld [vmem:[#allocation3 + $0x100] sm:$0xff]
    %v381 = vld [vmem:[#allocation3 + $0x108] sm:$0xff]
    %v382 = vld [vmem:[#allocation3 + $0x110] sm:$0xff]
    %v383 = vld [vmem:[#allocation3 + $0x118] sm:$0xff]
    %v384 = vld [vmem:[#allocation3 + $0x120] sm:$0xff]
    %v385 = vld [vmem:[#allocation3 + $0x128] sm:$0xff]
    %v386 = vld [vmem:[#allocation3 + $0x130] sm:$0xff]
    %v387 = vld [vmem:[#allocation3 + $0x138] sm:$0xff]
    %v388 = vld [vmem:[#allocation3 + $0x140] sm:$0xff]
    %v389 = vld [vmem:[#allocation3 + $0x148] sm:$0xff]
    %v390 = vld [vmem:[#allocation3 + $0x150] sm:$0xff]
    %v391 = vld [vmem:[#allocation3 + $0x158] sm:$0xff]
    %v392 = vld [vmem:[#allocation3 + $0x160] sm:$0xff]
    %v393 = vld [vmem:[#allocation3 + $0x168] sm:$0xff]
    %v394 = vld [vmem:[#allocation3 + $0x170] sm:$0xff]
    %v395 = vld [vmem:[#allocation3 + $0x178] sm:$0xff]
    %v396 = vld [vmem:[#allocation3 + $0x180] sm:$0xff]
    %v397 = vld [vmem:[#allocation3 + $0x188] sm:$0xff]
    %v398 = vld [vmem:[#allocation3 + $0x190] sm:$0xff]
    %v399 = vld [vmem:[#allocation3 + $0x198] sm:$0xff]
    %v400 = vld [vmem:[#allocation3 + $0x1a0] sm:$0xff]
    %v401 = vld [vmem:[#allocation3 + $0x1a8] sm:$0xff]
    %v402 = vld [vmem:[#allocation3 + $0x1b0] sm:$0xff]
    %v403 = vld [vmem:[#allocation3 + $0x1b8] sm:$0xff]
    %v404 = vld [vmem:[#allocation3 + $0x1c0] sm:$0xff]
    %v405 = vld [vmem:[#allocation3 + $0x1c8] sm:$0xff]
    %v406 = vld [vmem:[#allocation3 + $0x1d0] sm:$0xff]
    %v407 = vld [vmem:[#allocation3 + $0x1d8] sm:$0xff]
    %v408 = vld [vmem:[#allocation3 + $0x1e0] sm:$0xff]
    %v409 = vld [vmem:[#allocation3 + $0x1e8] sm:$0xff]
    %v410 = vld [vmem:[#allocation3 + $0x1f0] sm:$0xff]
    %v411 = vld [vmem:[#allocation3 + $0x1f8] sm:$0xff]
    %v412 = vld [vmem:[#allocation5] sm:$0xff]
    %v413 = vld [vmem:[#allocation5 + $0x8] sm:$0xff]
    %v414 = vld [vmem:[#allocation5 + $0x10] sm:$0xff]
    %v415 = vld [vmem:[#allocation5 + $0x18] sm:$0xff]
    %v416 = vld [vmem:[#allocation5 + $0x20] sm:$0xff]
    %v417 = vld [vmem:[#allocation5 + $0x28] sm:$0xff]
    %v418 = vld [vmem:[#allocation5 + $0x30] sm:$0xff]
    %v419 = vld [vmem:[#allocation5 + $0x38] sm:$0xff]
    %v420 = vld [vmem:[#allocation5 + $0x40] sm:$0xff]
    %v421 = vld [vmem:[#allocation5 + $0x48] sm:$0xff]
    %v422 = vld [vmem:[#allocation5 + $0x50] sm:$0xff]
    %v423 = vld [vmem:[#allocation5 + $0x58] sm:$0xff]
    %v424 = vld [vmem:[#allocation5 + $0x60] sm:$0xff]
    %v425 = vld [vmem:[#allocation5 + $0x68] sm:$0xff]
    %v426 = vld [vmem:[#allocation5 + $0x70] sm:$0xff]
    %v427 = vld [vmem:[#allocation5 + $0x78] sm:$0xff]
    %v428 = vld [vmem:[#allocation5 + $0x80] sm:$0xff]
    %v429 = vld [vmem:[#allocation5 + $0x88] sm:$0xff]
    %v430 = vld [vmem:[#allocation5 + $0x90] sm:$0xff]
    %v431 = vld [vmem:[#allocation5 + $0x98] sm:$0xff]
    %v432 = vld [vmem:[#allocation5 + $0xa0] sm:$0xff]
    %v433 = vld [vmem:[#allocation5 + $0xa8] sm:$0xff]
    %v434 = vld [vmem:[#allocation5 + $0xb0] sm:$0xff]
    %v435 = vld [vmem:[#allocation5 + $0xb8] sm:$0xff]
    %v436 = vld [vmem:[#allocation5 + $0xc0] sm:$0xff]
    %v437 = vld [vmem:[#allocation5 + $0xc8] sm:$0xff]
    %v438 = vld [vmem:[#allocation5 + $0xd0] sm:$0xff]
    %v439 = vld [vmem:[#allocation5 + $0xd8] sm:$0xff]
    %v440 = vld [vmem:[#allocation5 + $0xe0] sm:$0xff]
    %v441 = vld [vmem:[#allocation5 + $0xe8] sm:$0xff]
    %v442 = vld [vmem:[#allocation5 + $0xf0] sm:$0xff]
    %v443 = vld [vmem:[#allocation5 + $0xf8] sm:$0xff]
    %v444 = vld [vmem:[#allocation5 + $0x100] sm:$0xff]
    %v445 = vld [vmem:[#allocation5 + $0x108] sm:$0xff]
    %v446 = vld [vmem:[#allocation5 + $0x110] sm:$0xff]
    %v447 = vld [vmem:[#allocation5 + $0x118] sm:$0xff]
    %v448 = vld [vmem:[#allocation5 + $0x120] sm:$0xff]
    %v449 = vld [vmem:[#allocation5 + $0x128] sm:$0xff]
    %v450 = vld [vmem:[#allocation5 + $0x130] sm:$0xff]
    %v451 = vld [vmem:[#allocation5 + $0x138] sm:$0xff]
    %v452 = vld [vmem:[#allocation5 + $0x140] sm:$0xff]
    %v453 = vld [vmem:[#allocation5 + $0x148] sm:$0xff]
    %v454 = vld [vmem:[#allocation5 + $0x150] sm:$0xff]
    %v455 = vld [vmem:[#allocation5 + $0x158] sm:$0xff]
    %v456 = vld [vmem:[#allocation5 + $0x160] sm:$0xff]
    %v457 = vld [vmem:[#allocation5 + $0x168] sm:$0xff]
    %v458 = vld [vmem:[#allocation5 + $0x170] sm:$0xff]
    %v459 = vld [vmem:[#allocation5 + $0x178] sm:$0xff]
    %v460 = vld [vmem:[#allocation5 + $0x180] sm:$0xff]
    %v461 = vld [vmem:[#allocation5 + $0x188] sm:$0xff]
    %v462 = vld [vmem:[#allocation5 + $0x190] sm:$0xff]
    %v463 = vld [vmem:[#allocation5 + $0x198] sm:$0xff]
    %v464 = vld [vmem:[#allocation5 + $0x1a0] sm:$0xff]
    %v465 = vld [vmem:[#allocation5 + $0x1a8] sm:$0xff]
    %v466 = vld [vmem:[#allocation5 + $0x1b0] sm:$0xff]
    %v467 = vld [vmem:[#allocation5 + $0x1b8] sm:$0xff]
    %v468 = vld [vmem:[#allocation5 + $0x1c0] sm:$0xff]
    %v469 = vld [vmem:[#allocation5 + $0x1c8] sm:$0xff]
    %v470 = vld [vmem:[#allocation5 + $0x1d0] sm:$0xff]
    %v471 = vld [vmem:[#allocation5 + $0x1d8] sm:$0xff]
    %v472 = vld [vmem:[#allocation5 + $0x1e0] sm:$0xff]
    %v473 = vld [vmem:[#allocation5 + $0x1e8] sm:$0xff]
    %v474 = vld [vmem:[#allocation5 + $0x1f0] sm:$0xff]
    %v475 = vld [vmem:[#allocation5 + $0x1f8] sm:$0xff]
    %v476 = vld [vmem:[#allocation5 + $0x200] sm:$0xff]
    %v477 = vld [vmem:[#allocation5 + $0x208] sm:$0xff]
    %v478 = vld [vmem:[#allocation5 + $0x210] sm:$0xff]
    %v479 = vld [vmem:[#allocation5 + $0x218] sm:$0xff]
    %v480 = vld [vmem:[#allocation5 + $0x220] sm:$0xff]
    %v481 = vld [vmem:[#allocation5 + $0x228] sm:$0xff]
    %v482 = vld [vmem:[#allocation5 + $0x230] sm:$0xff]
    %v483 = vld [vmem:[#allocation5 + $0x238] sm:$0xff]
    %v484 = vld [vmem:[#allocation5 + $0x240] sm:$0xff]
    %v485 = vld [vmem:[#allocation5 + $0x248] sm:$0xff]
    %v486 = vld [vmem:[#allocation5 + $0x250] sm:$0xff]
    %v487 = vld [vmem:[#allocation5 + $0x258] sm:$0xff]
    %v488 = vld [vmem:[#allocation5 + $0x260] sm:$0xff]
    %v489 = vld [vmem:[#allocation5 + $0x268] sm:$0xff]
    %v490 = vld [vmem:[#allocation5 + $0x270] sm:$0xff]
    %v491 = vld [vmem:[#allocation5 + $0x278] sm:$0xff]
    %v492 = vld [vmem:[#allocation5 + $0x280] sm:$0xff]
    %v493 = vld [vmem:[#allocation5 + $0x288] sm:$0xff]
    %v494 = vld [vmem:[#allocation5 + $0x290] sm:$0xff]
    %v495 = vld [vmem:[#allocation5 + $0x298] sm:$0xff]
    %v496 = vld [vmem:[#allocation5 + $0x2a0] sm:$0xff]
    %v497 = vld [vmem:[#allocation5 + $0x2a8] sm:$0xff]
    %v498 = vld [vmem:[#allocation5 + $0x2b0] sm:$0xff]
    %v499 = vld [vmem:[#allocation5 + $0x2b8] sm:$0xff]
    %v500 = vld [vmem:[#allocation5 + $0x2c0] sm:$0xff]
    %v501 = vld [vmem:[#allocation5 + $0x2c8] sm:$0xff]
    %v502 = vld [vmem:[#allocation5 + $0x2d0] sm:$0xff]
    %v503 = vld [vmem:[#allocation5 + $0x2d8] sm:$0xff]
    %v504 = vld [vmem:[#allocation5 + $0x2e0] sm:$0xff]
    %v505 = vld [vmem:[#allocation5 + $0x2e8] sm:$0xff]
    %v506 = vld [vmem:[#allocation5 + $0x2f0] sm:$0xff]
    %v507 = vld [vmem:[#allocation5 + $0x2f8] sm:$0xff]
    %v508 = vld [vmem:[#allocation5 + $0x300] sm:$0xff]
    %v509 = vld [vmem:[#allocation5 + $0x308] sm:$0xff]
    %v510 = vld [vmem:[#allocation5 + $0x310] sm:$0xff]
    %v511 = vld [vmem:[#allocation5 + $0x318] sm:$0xff]
    %v512 = vld [vmem:[#allocation5 + $0x320] sm:$0xff]
    %v513 = vld [vmem:[#allocation5 + $0x328] sm:$0xff]
    %v514 = vld [vmem:[#allocation5 + $0x330] sm:$0xff]
    %v515 = vld [vmem:[#allocation5 + $0x338] sm:$0xff]
    %v516 = vld [vmem:[#allocation5 + $0x340] sm:$0xff]
    %v517 = vld [vmem:[#allocation5 + $0x348] sm:$0xff]
    %v518 = vld [vmem:[#allocation5 + $0x350] sm:$0xff]
    %v519 = vld [vmem:[#allocation5 + $0x358] sm:$0xff]
    %v520 = vld [vmem:[#allocation5 + $0x360] sm:$0xff]
    %v521 = vld [vmem:[#allocation5 + $0x368] sm:$0xff]
    %v522 = vld [vmem:[#allocation5 + $0x370] sm:$0xff]
    %v523 = vld [vmem:[#allocation5 + $0x378] sm:$0xff]
    %v524 = vld [vmem:[#allocation5 + $0x380] sm:$0xff]
    %v525 = vld [vmem:[#allocation5 + $0x388] sm:$0xff]
    %v526 = vld [vmem:[#allocation5 + $0x390] sm:$0xff]
    %v527 = vld [vmem:[#allocation5 + $0x398] sm:$0xff]
    %v528 = vld [vmem:[#allocation5 + $0x3a0] sm:$0xff]
    %v529 = vld [vmem:[#allocation5 + $0x3a8] sm:$0xff]
    %v530 = vld [vmem:[#allocation5 + $0x3b0] sm:$0xff]
    %v531 = vld [vmem:[#allocation5 + $0x3b8] sm:$0xff]
    %v532 = vld [vmem:[#allocation5 + $0x3c0] sm:$0xff]
    %v533 = vld [vmem:[#allocation5 + $0x3c8] sm:$0xff]
    %v534 = vld [vmem:[#allocation5 + $0x3d0] sm:$0xff]
    %v535 = vld [vmem:[#allocation5 + $0x3d8] sm:$0xff]
    %v536 = vld [vmem:[#allocation5 + $0x3e0] sm:$0xff]
    %v537 = vld [vmem:[#allocation5 + $0x3e8] sm:$0xff]
    %v538 = vld [vmem:[#allocation5 + $0x3f0] sm:$0xff]
    %v539 = vld [vmem:[#allocation5 + $0x3f8] sm:$0xff]
    %v540 = vld [vmem:[%s5] sm:$0xf]
    %541 = vmatprep.subr.mxu0 %v349
    %542 = vmatpush1.msra.mxu0 %v348
    %543 = vmatprep.subr.mxu0 %v353
    %544 = vmatpush1.msra.mxu0 %v352
    %545 = vmatprep.subr.mxu0 %v357
    %546 = vmatpush1.msra.mxu0 %v356
    %547 = vmatprep.subr.mxu0 %v361
    %548 = vmatpush1.msra.mxu0 %v360
    %549 = vmatprep.subr.mxu0 %v365
    %550 = vmatpush1.msra.mxu0 %v364
    %551 = vmatprep.subr.mxu0 %v369
    %552 = vmatpush1.msra.mxu0 %v368
    %553 = vmatprep.subr.mxu0 %v373
    %554 = vmatpush1.msra.mxu0 %v372
    %555 = vmatprep.subr.mxu0 %v377
    %556 = vmatpush1.msra.mxu0 %v376
    %557 = vmatprep.subr.mxu0 %v381
    %558 = vmatpush1.msra.mxu0 %v380
    %559 = vmatprep.subr.mxu0 %v385
    %560 = vmatpush1.msra.mxu0 %v384
    %561 = vmatprep.subr.mxu0 %v389
    %562 = vmatpush1.msra.mxu0 %v388
    %563 = vmatprep.subr.mxu0 %v393
    %564 = vmatpush1.msra.mxu0 %v392
    %565 = vmatprep.subr.mxu0 %v397
    %566 = vmatpush1.msra.mxu0 %v396
    %567 = vmatprep.subr.mxu0 %v401
    %568 = vmatpush1.msra.mxu0 %v400
    %569 = vmatprep.subr.mxu0 %v405
    %570 = vmatpush1.msra.mxu0 %v404
    %571 = vmatprep.subr.mxu0 %v409
    %572 = vmatpush1.msra.mxu0 %v408
    %573 = vmatprep.subr.mxu0 0.0
    %574 = vmatpush1.msra.mxu0 0.0
    %575 = vmatprep.subr.mxu0 0.0
    %576 = vmatpush1.msra.mxu0 0.0
    %577 = vmatprep.subr.mxu0 0.0
    %578 = vmatpush1.msra.mxu0 0.0
    %579 = vmatprep.subr.mxu0 0.0
    %580 = vmatpush1.msra.mxu0 0.0
    %581 = vmatprep.subr.mxu0 0.0
    %582 = vmatpush1.msra.mxu0 0.0
    %583 = vmatprep.subr.mxu0 0.0
    %584 = vmatpush1.msra.mxu0 0.0
    %585 = vmatprep.subr.mxu0 0.0
    %586 = vmatpush1.msra.mxu0 0.0
    %587 = vmatprep.subr.mxu0 0.0
    %588 = vmatpush1.msra.mxu0 0.0
    %589 = vmatprep.subr.mxu0 0.0
    %590 = vmatpush1.msra.mxu0 0.0
    %591 = vmatprep.subr.mxu0 0.0
    %592 = vmatpush1.msra.mxu0 0.0
    %593 = vmatprep.subr.mxu0 0.0
    %594 = vmatpush1.msra.mxu0 0.0
    %595 = vmatprep.subr.mxu0 0.0
    %596 = vmatpush1.msra.mxu0 0.0
    %597 = vmatprep.subr.mxu0 0.0
    %598 = vmatpush1.msra.mxu0 0.0
    %599 = vmatprep.subr.mxu0 0.0
    %600 = vmatpush1.msra.mxu0 0.0
    %601 = vmatprep.subr.mxu0 0.0
    %602 = vmatpush1.msra.mxu0 0.0
    %603 = vmatprep.subr.mxu0 0.0
    %604 = vmatpush1.msra.mxu0 0.0
    %605 = vmatprep.mubr.f32.mxu0 0.0
    %606 = vmatmul.mubr.f32.gmra.mrb[0].mxu0 0.0
    %v607 = vpop.f32.mrb[0].mxu0
    %v608 = vadd.f32 0.0, %v607
    %v609 = vpop.f32.mrb[0].mxu0
    %v610 = vadd.f32 0.0, %v609
    %611 = vdwg.mxu0
    %612 = vmatprep.subr.mxu0 %v351
    %613 = vmatpush1.msra.mxu0 %v350
    %614 = vmatprep.subr.mxu0 %v355
    %615 = vmatpush1.msra.mxu0 %v354
    %616 = vmatprep.subr.mxu0 %v359
    %617 = vmatpush1.msra.mxu0 %v358
    %618 = vmatprep.subr.mxu0 %v363
    %619 = vmatpush1.msra.mxu0 %v362
    %620 = vmatprep.subr.mxu0 %v367
    %621 = vmatpush1.msra.mxu0 %v366
    %622 = vmatprep.subr.mxu0 %v371
    %623 = vmatpush1.msra.mxu0 %v370
    %624 = vmatprep.subr.mxu0 %v375
    %625 = vmatpush1.msra.mxu0 %v374
    %626 = vmatprep.subr.mxu0 %v379
    %627 = vmatpush1.msra.mxu0 %v378
    %628 = vmatprep.subr.mxu0 %v383
    %629 = vmatpush1.msra.mxu0 %v382
    %630 = vmatprep.subr.mxu0 %v387
    %631 = vmatpush1.msra.mxu0 %v386
    %632 = vmatprep.subr.mxu0 %v391
    %633 = vmatpush1.msra.mxu0 %v390
    %634 = vmatprep.subr.mxu0 %v395
    %635 = vmatpush1.msra.mxu0 %v394
    %636 = vmatprep.subr.mxu0 %v399
    %637 = vmatpush1.msra.mxu0 %v398
    %638 = vmatprep.subr.mxu0 %v403
    %639 = vmatpush1.msra.mxu0 %v402
    %640 = vmatprep.subr.mxu0 %v407
    %641 = vmatpush1.msra.mxu0 %v406
    %642 = vmatprep.subr.mxu0 %v411
    %643 = vmatpush1.msra.mxu0 %v410
    %644 = vmatprep.subr.mxu0 0.0
    %645 = vmatpush1.msra.mxu0 0.0
    %646 = vmatprep.subr.mxu0 0.0
    %647 = vmatpush1.msra.mxu0 0.0
    %648 = vmatprep.subr.mxu0 0.0
    %649 = vmatpush1.msra.mxu0 0.0
    %650 = vmatprep.subr.mxu0 0.0
    %651 = vmatpush1.msra.mxu0 0.0
    %652 = vmatprep.subr.mxu0 0.0
    %653 = vmatpush1.msra.mxu0 0.0
    %654 = vmatprep.subr.mxu0 0.0
    %655 = vmatpush1.msra.mxu0 0.0
    %656 = vmatprep.subr.mxu0 0.0
    %657 = vmatpush1.msra.mxu0 0.0
    %658 = vmatprep.subr.mxu0 0.0
    %659 = vmatpush1.msra.mxu0 0.0
    %660 = vmatprep.subr.mxu0 0.0
    %661 = vmatpush1.msra.mxu0 0.0
    %662 = vmatprep.subr.mxu0 0.0
    %663 = vmatpush1.msra.mxu0 0.0
    %664 = vmatprep.subr.mxu0 0.0
    %665 = vmatpush1.msra.mxu0 0.0
    %666 = vmatprep.subr.mxu0 0.0
    %667 = vmatpush1.msra.mxu0 0.0
    %668 = vmatprep.subr.mxu0 0.0
    %669 = vmatpush1.msra.mxu0 0.0
    %670 = vmatprep.subr.mxu0 0.0
    %671 = vmatpush1.msra.mxu0 0.0
    %672 = vmatprep.subr.mxu0 0.0
    %673 = vmatpush1.msra.mxu0 0.0
    %674 = vmatprep.subr.mxu0 0.0
    %675 = vmatpush1.msra.mxu0 0.0
    %676 = vmatprep.mubr.f32.mxu0 0.0
    %677 = vmatmul.mubr.f32.gmra.mrb[0].mxu0 0.0
    %v678 = vpop.f32.mrb[0].mxu0
    %v679 = vadd.f32 0.0, %v678
    %v680 = vpop.f32.mrb[0].mxu0
    %v681 = vadd.f32 0.0, %v680
    %682 = vdwg.mxu0
    %v683 = vadd.f32 %v189, %v608
    %v684 = vadd.f32 %v191, %v610
    %v685 = vadd.f32 %v302, %v679
    %v686 = vadd.f32 %v304, %v681
    %v687 = vxor.u32 %v683, 2147483648
    %v688 = vxor.u32 %v684, 2147483648
    %v689 = vxor.u32 %v685, 2147483648
    %v690 = vmul.f32 %v687, 1.442695
    %v691 = vpow.pop %v690
    %v692 = vmul.f32 %v688, 1.442695
    %v693 = vpow.pop %v692
    %v694 = vmul.f32 %v689, 1.442695
    %v695 = vpow.pop %v694
    %v696 = vadd.f32 %v691, 1.0
    %v697 = vadd.f32 %v693, 1.0
    %v698 = vadd.f32 %v695, 1.0
    %v699 = vrcp.pop %v696
    %v700 = vmul.f32 1.0, %v699
    %v701 = vrcp.pop %v697
    %v702 = vmul.f32 1.0, %v701
    %v703 = vrcp.pop %v698
    %v704 = vmul.f32 1.0, %v703
    %v705 = vtanh.pop %v686
    %v706 = vmul.f32 %v702, 0.0
    %v707 = vmul.f32 %v700, %v705
    %v708 = vadd.f32 %v706, %v707
    %v709 = vtanh.pop %v708
    %v710 = vmul.f32 %v704, %v709
    %v712 = vlaneseq
    %v713 = vshrl.u32 %v712, 7
    %v714 = vsub.s32 0, %v713
    %v715 = vrot.slane %v540, %v714
    %v716 = vlaneseq
    %v717 = vshrl.u32 %v716, 7
    %v718 = vsub.s32 1, %v717
    %v719 = vrot.slane %v540, %v718
    %v720 = vlaneseq
    %v721 = vshrl.u32 %v720, 7
    %v722 = vsub.s32 2, %v721
    %v723 = vrot.slane %v540, %v722
    %v724 = vlaneseq
    %v725 = vshrl.u32 %v724, 7
    %v726 = vsub.s32 3, %v725
    %v727 = vrot.slane %v540, %v726
    %732 = vmatprep.subr.mxu0 %v413
    %733 = vmatpush1.msra.mxu0 %v412
    %734 = vmatprep.subr.mxu0 %v417
    %735 = vmatpush1.msra.mxu0 %v416
    %736 = vmatprep.subr.mxu0 %v421
    %737 = vmatpush1.msra.mxu0 %v420
    %738 = vmatprep.subr.mxu0 %v425
    %739 = vmatpush1.msra.mxu0 %v424
    %740 = vmatprep.subr.mxu0 %v429
    %741 = vmatpush1.msra.mxu0 %v428
    %742 = vmatprep.subr.mxu0 %v433
    %743 = vmatpush1.msra.mxu0 %v432
    %744 = vmatprep.subr.mxu0 %v437
    %745 = vmatpush1.msra.mxu0 %v436
    %746 = vmatprep.subr.mxu0 %v441
    %747 = vmatpush1.msra.mxu0 %v440
    %748 = vmatprep.subr.mxu0 %v445
    %749 = vmatpush1.msra.mxu0 %v444
    %750 = vmatprep.subr.mxu0 %v449
    %751 = vmatpush1.msra.mxu0 %v448
    %752 = vmatprep.subr.mxu0 %v453
    %753 = vmatpush1.msra.mxu0 %v452
    %754 = vmatprep.subr.mxu0 %v457
    %755 = vmatpush1.msra.mxu0 %v456
    %756 = vmatprep.subr.mxu0 %v461
    %757 = vmatpush1.msra.mxu0 %v460
    %758 = vmatprep.subr.mxu0 %v465
    %759 = vmatpush1.msra.mxu0 %v464
    %760 = vmatprep.subr.mxu0 %v469
    %761 = vmatpush1.msra.mxu0 %v468
    %762 = vmatprep.subr.mxu0 %v473
    %763 = vmatpush1.msra.mxu0 %v472
    %764 = vmatprep.subr.mxu0 %v477
    %765 = vmatpush1.msra.mxu0 %v476
    %766 = vmatprep.subr.mxu0 %v481
    %767 = vmatpush1.msra.mxu0 %v480
    %768 = vmatprep.subr.mxu0 %v485
    %769 = vmatpush1.msra.mxu0 %v484
    %770 = vmatprep.subr.mxu0 %v489
    %771 = vmatpush1.msra.mxu0 %v488
    %772 = vmatprep.subr.mxu0 %v493
    %773 = vmatpush1.msra.mxu0 %v492
    %774 = vmatprep.subr.mxu0 %v497
    %775 = vmatpush1.msra.mxu0 %v496
    %776 = vmatprep.subr.mxu0 %v501
    %777 = vmatpush1.msra.mxu0 %v500
    %778 = vmatprep.subr.mxu0 %v505
    %779 = vmatpush1.msra.mxu0 %v504
    %780 = vmatprep.subr.mxu0 %v509
    %781 = vmatpush1.msra.mxu0 %v508
    %782 = vmatprep.subr.mxu0 %v513
    %783 = vmatpush1.msra.mxu0 %v512
    %784 = vmatprep.subr.mxu0 %v517
    %785 = vmatpush1.msra.mxu0 %v516
    %786 = vmatprep.subr.mxu0 %v521
    %787 = vmatpush1.msra.mxu0 %v520
    %788 = vmatprep.subr.mxu0 %v525
    %789 = vmatpush1.msra.mxu0 %v524
    %790 = vmatprep.subr.mxu0 %v529
    %791 = vmatpush1.msra.mxu0 %v528
    %792 = vmatprep.subr.mxu0 %v533
    %793 = vmatpush1.msra.mxu0 %v532
    %794 = vmatprep.subr.mxu0 %v537
    %795 = vmatpush1.msra.mxu0 %v536
    %796 = vmatprep.mubr.f32.mxu0 0.0
    %797 = vmatmul.mubr.f32.gmra.mrb[0].mxu0 %v710
    %v798 = vpop.f32.mrb[0].mxu0
    %v799 = vadd.f32 %v715, %v798
    %v800 = vpop.f32.mrb[0].mxu0
    %v801 = vadd.f32 %v719, %v800
    %802 = vdwg.mxu0
    %803 = vmatprep.subr.mxu0 %v415
    %804 = vmatpush1.msra.mxu0 %v414
    %805 = vmatprep.subr.mxu0 %v419
    %806 = vmatpush1.msra.mxu0 %v418
    %807 = vmatprep.subr.mxu0 %v423
    %808 = vmatpush1.msra.mxu0 %v422
    %809 = vmatprep.subr.mxu0 %v427
    %810 = vmatpush1.msra.mxu0 %v426
    %811 = vmatprep.subr.mxu0 %v431
    %812 = vmatpush1.msra.mxu0 %v430
    %813 = vmatprep.subr.mxu0 %v435
    %814 = vmatpush1.msra.mxu0 %v434
    %815 = vmatprep.subr.mxu0 %v439
    %816 = vmatpush1.msra.mxu0 %v438
    %817 = vmatprep.subr.mxu0 %v443
    %818 = vmatpush1.msra.mxu0 %v442
    %819 = vmatprep.subr.mxu0 %v447
    %820 = vmatpush1.msra.mxu0 %v446
    %821 = vmatprep.subr.mxu0 %v451
    %822 = vmatpush1.msra.mxu0 %v450
    %823 = vmatprep.subr.mxu0 %v455
    %824 = vmatpush1.msra.mxu0 %v454
    %825 = vmatprep.subr.mxu0 %v459
    %826 = vmatpush1.msra.mxu0 %v458
    %827 = vmatprep.subr.mxu0 %v463
    %828 = vmatpush1.msra.mxu0 %v462
    %829 = vmatprep.subr.mxu0 %v467
    %830 = vmatpush1.msra.mxu0 %v466
    %831 = vmatprep.subr.mxu0 %v471
    %832 = vmatpush1.msra.mxu0 %v470
    %833 = vmatprep.subr.mxu0 %v475
    %834 = vmatpush1.msra.mxu0 %v474
    %835 = vmatprep.subr.mxu0 %v479
    %836 = vmatpush1.msra.mxu0 %v478
    %837 = vmatprep.subr.mxu0 %v483
    %838 = vmatpush1.msra.mxu0 %v482
    %839 = vmatprep.subr.mxu0 %v487
    %840 = vmatpush1.msra.mxu0 %v486
    %841 = vmatprep.subr.mxu0 %v491
    %842 = vmatpush1.msra.mxu0 %v490
    %843 = vmatprep.subr.mxu0 %v495
    %844 = vmatpush1.msra.mxu0 %v494
    %845 = vmatprep.subr.mxu0 %v499
    %846 = vmatpush1.msra.mxu0 %v498
    %847 = vmatprep.subr.mxu0 %v503
    %848 = vmatpush1.msra.mxu0 %v502
    %849 = vmatprep.subr.mxu0 %v507
    %850 = vmatpush1.msra.mxu0 %v506
    %851 = vmatprep.subr.mxu0 %v511
    %852 = vmatpush1.msra.mxu0 %v510
    %853 = vmatprep.subr.mxu0 %v515
    %854 = vmatpush1.msra.mxu0 %v514
    %855 = vmatprep.subr.mxu0 %v519
    %856 = vmatpush1.msra.mxu0 %v518
    %857 = vmatprep.subr.mxu0 %v523
    %858 = vmatpush1.msra.mxu0 %v522
    %859 = vmatprep.subr.mxu0 %v527
    %860 = vmatpush1.msra.mxu0 %v526
    %861 = vmatprep.subr.mxu0 %v531
    %862 = vmatpush1.msra.mxu0 %v530
    %863 = vmatprep.subr.mxu0 %v535
    %864 = vmatpush1.msra.mxu0 %v534
    %865 = vmatprep.subr.mxu0 %v539
    %866 = vmatpush1.msra.mxu0 %v538
    %867 = vmatprep.mubr.f32.mxu0 0.0
    %868 = vmatmul.mubr.f32.gmra.mrb[0].mxu0 %v710
    %v869 = vpop.f32.mrb[0].mxu0
    %v870 = vadd.f32 %v723, %v869
    %v871 = vpop.f32.mrb[0].mxu0
    %v872 = vadd.f32 %v727, %v871
    %873 = vdwg.mxu0
    %v874 = vxor.u32 %v799, 2147483648
    %v875 = vxor.u32 %v801, 2147483648
    %v876 = vxor.u32 %v870, 2147483648
    %v877 = vmul.f32 %v874, 1.442695
    %v878 = vpow.pop %v877
    %v879 = vmul.f32 %v875, 1.442695
    %v880 = vpow.pop %v879
    %v881 = vmul.f32 %v876, 1.442695
    %v882 = vpow.pop %v881
    %v883 = vadd.f32 %v878, 1.0
    %v884 = vadd.f32 %v880, 1.0
    %v885 = vadd.f32 %v882, 1.0
    %v886 = vrcp.pop %v883
    %v887 = vmul.f32 1.0, %v886
    %v888 = vrcp.pop %v884
    %v889 = vmul.f32 1.0, %v888
    %v890 = vrcp.pop %v885
    %v891 = vmul.f32 1.0, %v890
    %v892 = vtanh.pop %v872
    %v893 = vmul.f32 %v889, 0.0
    %v894 = vmul.f32 %v887, %v892
    %v895 = vadd.f32 %v893, %v894
    %v896 = vtanh.pop %v895
    %v897 = vmul.f32 %v891, %v896
    %898 = vmatprep.subr.mxu0 %v349
    %899 = vmatpush1.msra.mxu0 %v348
    %900 = vmatprep.subr.mxu0 %v353
    %901 = vmatpush1.msra.mxu0 %v352
    %902 = vmatprep.subr.mxu0 %v357
    %903 = vmatpush1.msra.mxu0 %v356
    %904 = vmatprep.subr.mxu0 %v361
    %905 = vmatpush1.msra.mxu0 %v360
    %906 = vmatprep.subr.mxu0 %v365
    %907 = vmatpush1.msra.mxu0 %v364
    %908 = vmatprep.subr.mxu0 %v369
    %909 = vmatpush1.msra.mxu0 %v368
    %910 = vmatprep.subr.mxu0 %v373
    %911 = vmatpush1.msra.mxu0 %v372
    %912 = vmatprep.subr.mxu0 %v377
    %913 = vmatpush1.msra.mxu0 %v376
    %914 = vmatprep.subr.mxu0 %v381
    %915 = vmatpush1.msra.mxu0 %v380
    %916 = vmatprep.subr.mxu0 %v385
    %917 = vmatpush1.msra.mxu0 %v384
    %918 = vmatprep.subr.mxu0 %v389
    %919 = vmatpush1.msra.mxu0 %v388
    %920 = vmatprep.subr.mxu0 %v393
    %921 = vmatpush1.msra.mxu0 %v392
    %922 = vmatprep.subr.mxu0 %v397
    %923 = vmatpush1.msra.mxu0 %v396
    %924 = vmatprep.subr.mxu0 %v401
    %925 = vmatpush1.msra.mxu0 %v400
    %926 = vmatprep.subr.mxu0 %v405
    %927 = vmatpush1.msra.mxu0 %v404
    %928 = vmatprep.subr.mxu0 %v409
    %929 = vmatpush1.msra.mxu0 %v408
    %930 = vmatprep.subr.mxu0 0.0
    %931 = vmatpush1.msra.mxu0 0.0
    %932 = vmatprep.subr.mxu0 0.0
    %933 = vmatpush1.msra.mxu0 0.0
    %934 = vmatprep.subr.mxu0 0.0
    %935 = vmatpush1.msra.mxu0 0.0
    %936 = vmatprep.subr.mxu0 0.0
    %937 = vmatpush1.msra.mxu0 0.0
    %938 = vmatprep.subr.mxu0 0.0
    %939 = vmatpush1.msra.mxu0 0.0
    %940 = vmatprep.subr.mxu0 0.0
    %941 = vmatpush1.msra.mxu0 0.0
    %942 = vmatprep.subr.mxu0 0.0
    %943 = vmatpush1.msra.mxu0 0.0
    %944 = vmatprep.subr.mxu0 0.0
    %945 = vmatpush1.msra.mxu0 0.0
    %946 = vmatprep.subr.mxu0 0.0
    %947 = vmatpush1.msra.mxu0 0.0
    %948 = vmatprep.subr.mxu0 0.0
    %949 = vmatpush1.msra.mxu0 0.0
    %950 = vmatprep.subr.mxu0 0.0
    %951 = vmatpush1.msra.mxu0 0.0
    %952 = vmatprep.subr.mxu0 0.0
    %953 = vmatpush1.msra.mxu0 0.0
    %954 = vmatprep.subr.mxu0 0.0
    %955 = vmatpush1.msra.mxu0 0.0
    %956 = vmatprep.subr.mxu0 0.0
    %957 = vmatpush1.msra.mxu0 0.0
    %958 = vmatprep.subr.mxu0 0.0
    %959 = vmatpush1.msra.mxu0 0.0
    %960 = vmatprep.subr.mxu0 0.0
    %961 = vmatpush1.msra.mxu0 0.0
    %962 = vmatprep.mubr.f32.mxu0 0.0
    %963 = vmatmul.mubr.f32.gmra.mrb[0].mxu0 %v710
    %v964 = vpop.f32.mrb[0].mxu0
    %v965 = vadd.f32 0.0, %v964
    %v966 = vpop.f32.mrb[0].mxu0
    %v967 = vadd.f32 0.0, %v966
    %968 = vdwg.mxu0
    %969 = vmatprep.subr.mxu0 %v351
    %970 = vmatpush1.msra.mxu0 %v350
    %971 = vmatprep.subr.mxu0 %v355
    %972 = vmatpush1.msra.mxu0 %v354
    %973 = vmatprep.subr.mxu0 %v359
    %974 = vmatpush1.msra.mxu0 %v358
    %975 = vmatprep.subr.mxu0 %v363
    %976 = vmatpush1.msra.mxu0 %v362
    %977 = vmatprep.subr.mxu0 %v367
    %978 = vmatpush1.msra.mxu0 %v366
    %979 = vmatprep.subr.mxu0 %v371
    %980 = vmatpush1.msra.mxu0 %v370
    %981 = vmatprep.subr.mxu0 %v375
    %982 = vmatpush1.msra.mxu0 %v374
    %983 = vmatprep.subr.mxu0 %v379
    %984 = vmatpush1.msra.mxu0 %v378
    %985 = vmatprep.subr.mxu0 %v383
    %986 = vmatpush1.msra.mxu0 %v382
    %987 = vmatprep.subr.mxu0 %v387
    %988 = vmatpush1.msra.mxu0 %v386
    %989 = vmatprep.subr.mxu0 %v391
    %990 = vmatpush1.msra.mxu0 %v390
    %991 = vmatprep.subr.mxu0 %v395
    %992 = vmatpush1.msra.mxu0 %v394
    %993 = vmatprep.subr.mxu0 %v399
    %994 = vmatpush1.msra.mxu0 %v398
    %995 = vmatprep.subr.mxu0 %v403
    %996 = vmatpush1.msra.mxu0 %v402
    %997 = vmatprep.subr.mxu0 %v407
    %998 = vmatpush1.msra.mxu0 %v406
    %999 = vmatprep.subr.mxu0 %v411
    %1000 = vmatpush1.msra.mxu0 %v410
    %1001 = vmatprep.subr.mxu0 0.0
    %1002 = vmatpush1.msra.mxu0 0.0
    %1003 = vmatprep.subr.mxu0 0.0
    %1004 = vmatpush1.msra.mxu0 0.0
    %1005 = vmatprep.subr.mxu0 0.0
    %1006 = vmatpush1.msra.mxu0 0.0
    %1007 = vmatprep.subr.mxu0 0.0
    %1008 = vmatpush1.msra.mxu0 0.0
    %1009 = vmatprep.subr.mxu0 0.0
    %1010 = vmatpush1.msra.mxu0 0.0
    %1011 = vmatprep.subr.mxu0 0.0
    %1012 = vmatpush1.msra.mxu0 0.0
    %1013 = vmatprep.subr.mxu0 0.0
    %1014 = vmatpush1.msra.mxu0 0.0
    %1015 = vmatprep.subr.mxu0 0.0
    %1016 = vmatpush1.msra.mxu0 0.0
    %1017 = vmatprep.subr.mxu0 0.0
    %1018 = vmatpush1.msra.mxu0 0.0
    %1019 = vmatprep.subr.mxu0 0.0
    %1020 = vmatpush1.msra.mxu0 0.0
    %1021 = vmatprep.subr.mxu0 0.0
    %1022 = vmatpush1.msra.mxu0 0.0
    %1023 = vmatprep.subr.mxu0 0.0
    %1024 = vmatpush1.msra.mxu0 0.0
    %1025 = vmatprep.subr.mxu0 0.0
    %1026 = vmatpush1.msra.mxu0 0.0
    %1027 = vmatprep.subr.mxu0 0.0
    %1028 = vmatpush1.msra.mxu0 0.0
    %1029 = vmatprep.subr.mxu0 0.0
    %1030 = vmatpush1.msra.mxu0 0.0
    %1031 = vmatprep.subr.mxu0 0.0
    %1032 = vmatpush1.msra.mxu0 0.0
    %1033 = vmatprep.mubr.f32.mxu0 0.0
    %1034 = vmatmul.mubr.f32.gmra.mrb[0].mxu0 %v710
    %v1035 = vpop.f32.mrb[0].mxu0
    %v1036 = vadd.f32 0.0, %v1035
    %v1037 = vpop.f32.mrb[0].mxu0
    %v1038 = vadd.f32 0.0, %v1037
    %1039 = vdwg.mxu0
    %v1040 = vadd.f32 %v195, %v965
    %v1041 = vadd.f32 %v197, %v967
    %v1042 = vadd.f32 %v308, %v1036
    %v1043 = vadd.f32 %v310, %v1038
    %v1044 = vxor.u32 %v1040, 2147483648
    %v1045 = vxor.u32 %v1041, 2147483648
    %v1046 = vxor.u32 %v1042, 2147483648
    %v1047 = vmul.f32 %v1044, 1.442695
    %v1048 = vpow.pop %v1047
    %v1049 = vmul.f32 %v1045, 1.442695
    %v1050 = vpow.pop %v1049
    %v1051 = vmul.f32 %v1046, 1.442695
    %v1052 = vpow.pop %v1051
    %v1053 = vadd.f32 %v1048, 1.0
    %v1054 = vadd.f32 %v1050, 1.0
    %v1055 = vadd.f32 %v1052, 1.0
    %v1056 = vrcp.pop %v1053
    %v1057 = vmul.f32 1.0, %v1056
    %v1058 = vrcp.pop %v1054
    %v1059 = vmul.f32 1.0, %v1058
    %v1060 = vrcp.pop %v1055
    %v1061 = vmul.f32 1.0, %v1060
    %v1062 = vtanh.pop %v1043
    %v1063 = vmul.f32 %v1059, %v708
    %v1064 = vmul.f32 %v1057, %v1062
    %v1065 = vadd.f32 %v1063, %v1064
    %v1066 = vtanh.pop %v1065
    %v1067 = vmul.f32 %v1061, %v1066
    %1068 = vmatprep.subr.mxu0 %v413
    %1069 = vmatpush1.msra.mxu0 %v412
    %1070 = vmatprep.subr.mxu0 %v417
    %1071 = vmatpush1.msra.mxu0 %v416
    %1072 = vmatprep.subr.mxu0 %v421
    %1073 = vmatpush1.msra.mxu0 %v420
    %1074 = vmatprep.subr.mxu0 %v425
    %1075 = vmatpush1.msra.mxu0 %v424
    %1076 = vmatprep.subr.mxu0 %v429
    %1077 = vmatpush1.msra.mxu0 %v428
    %1078 = vmatprep.subr.mxu0 %v433
    %1079 = vmatpush1.msra.mxu0 %v432
    %1080 = vmatprep.subr.mxu0 %v437
    %1081 = vmatpush1.msra.mxu0 %v436
    %1082 = vmatprep.subr.mxu0 %v441
    %1083 = vmatpush1.msra.mxu0 %v440
    %1084 = vmatprep.subr.mxu0 %v445
    %1085 = vmatpush1.msra.mxu0 %v444
    %1086 = vmatprep.subr.mxu0 %v449
    %1087 = vmatpush1.msra.mxu0 %v448
    %1088 = vmatprep.subr.mxu0 %v453
    %1089 = vmatpush1.msra.mxu0 %v452
    %1090 = vmatprep.subr.mxu0 %v457
    %1091 = vmatpush1.msra.mxu0 %v456
    %1092 = vmatprep.subr.mxu0 %v461
    %1093 = vmatpush1.msra.mxu0 %v460
    %1094 = vmatprep.subr.mxu0 %v465
    %1095 = vmatpush1.msra.mxu0 %v464
    %1096 = vmatprep.subr.mxu0 %v469
    %1097 = vmatpush1.msra.mxu0 %v468
    %1098 = vmatprep.subr.mxu0 %v473
    %1099 = vmatpush1.msra.mxu0 %v472
    %1100 = vmatprep.subr.mxu0 %v477
    %1101 = vmatpush1.msra.mxu0 %v476
    %1102 = vmatprep.subr.mxu0 %v481
    %1103 = vmatpush1.msra.mxu0 %v480
    %1104 = vmatprep.subr.mxu0 %v485
    %1105 = vmatpush1.msra.mxu0 %v484
    %1106 = vmatprep.subr.mxu0 %v489
    %1107 = vmatpush1.msra.mxu0 %v488
    %1108 = vmatprep.subr.mxu0 %v493
    %1109 = vmatpush1.msra.mxu0 %v492
    %1110 = vmatprep.subr.mxu0 %v497
    %1111 = vmatpush1.msra.mxu0 %v496
    %1112 = vmatprep.subr.mxu0 %v501
    %1113 = vmatpush1.msra.mxu0 %v500
    %1114 = vmatprep.subr.mxu0 %v505
    %1115 = vmatpush1.msra.mxu0 %v504
    %1116 = vmatprep.subr.mxu0 %v509
    %1117 = vmatpush1.msra.mxu0 %v508
    %1118 = vmatprep.subr.mxu0 %v513
    %1119 = vmatpush1.msra.mxu0 %v512
    %1120 = vmatprep.subr.mxu0 %v517
    %1121 = vmatpush1.msra.mxu0 %v516
    %1122 = vmatprep.subr.mxu0 %v521
    %1123 = vmatpush1.msra.mxu0 %v520
    %1124 = vmatprep.subr.mxu0 %v525
    %1125 = vmatpush1.msra.mxu0 %v524
    %1126 = vmatprep.subr.mxu0 %v529
    %1127 = vmatpush1.msra.mxu0 %v528
    %1128 = vmatprep.subr.mxu0 %v533
    %1129 = vmatpush1.msra.mxu0 %v532
    %1130 = vmatprep.subr.mxu0 %v537
    %1131 = vmatpush1.msra.mxu0 %v536
    %1132 = vmatprep.mubr.f32.mxu0 %v897
    %1133 = vmatmul.mubr.f32.gmra.mrb[0].mxu0 %v1067
    %v1134 = vpop.f32.mrb[0].mxu0
    %v1135 = vadd.f32 %v715, %v1134
    %v1136 = vpop.f32.mrb[0].mxu0
    %v1137 = vadd.f32 %v719, %v1136
    %1138 = vdwg.mxu0
    %1139 = vmatprep.subr.mxu0 %v415
    %1140 = vmatpush1.msra.mxu0 %v414
    %1141 = vmatprep.subr.mxu0 %v419
    %1142 = vmatpush1.msra.mxu0 %v418
    %1143 = vmatprep.subr.mxu0 %v423
    %1144 = vmatpush1.msra.mxu0 %v422
    %1145 = vmatprep.subr.mxu0 %v427
    %1146 = vmatpush1.msra.mxu0 %v426
    %1147 = vmatprep.subr.mxu0 %v431
    %1148 = vmatpush1.msra.mxu0 %v430
    %1149 = vmatprep.subr.mxu0 %v435
    %1150 = vmatpush1.msra.mxu0 %v434
    %1151 = vmatprep.subr.mxu0 %v439
    %1152 = vmatpush1.msra.mxu0 %v438
    %1153 = vmatprep.subr.mxu0 %v443
    %1154 = vmatpush1.msra.mxu0 %v442
    %1155 = vmatprep.subr.mxu0 %v447
    %1156 = vmatpush1.msra.mxu0 %v446
    %1157 = vmatprep.subr.mxu0 %v451
    %1158 = vmatpush1.msra.mxu0 %v450
    %1159 = vmatprep.subr.mxu0 %v455
    %1160 = vmatpush1.msra.mxu0 %v454
    %1161 = vmatprep.subr.mxu0 %v459
    %1162 = vmatpush1.msra.mxu0 %v458
    %1163 = vmatprep.subr.mxu0 %v463
    %1164 = vmatpush1.msra.mxu0 %v462
    %1165 = vmatprep.subr.mxu0 %v467
    %1166 = vmatpush1.msra.mxu0 %v466
    %1167 = vmatprep.subr.mxu0 %v471
    %1168 = vmatpush1.msra.mxu0 %v470
    %1169 = vmatprep.subr.mxu0 %v475
    %1170 = vmatpush1.msra.mxu0 %v474
    %1171 = vmatprep.subr.mxu0 %v479
    %1172 = vmatpush1.msra.mxu0 %v478
    %1173 = vmatprep.subr.mxu0 %v483
    %1174 = vmatpush1.msra.mxu0 %v482
    %1175 = vmatprep.subr.mxu0 %v487
    %1176 = vmatpush1.msra.mxu0 %v486
    %1177 = vmatprep.subr.mxu0 %v491
    %1178 = vmatpush1.msra.mxu0 %v490
    %1179 = vmatprep.subr.mxu0 %v495
    %1180 = vmatpush1.msra.mxu0 %v494
    %1181 = vmatprep.subr.mxu0 %v499
    %1182 = vmatpush1.msra.mxu0 %v498
    %1183 = vmatprep.subr.mxu0 %v503
    %1184 = vmatpush1.msra.mxu0 %v502
    %1185 = vmatprep.subr.mxu0 %v507
    %1186 = vmatpush1.msra.mxu0 %v506
    %1187 = vmatprep.subr.mxu0 %v511
    %1188 = vmatpush1.msra.mxu0 %v510
    %1189 = vmatprep.subr.mxu0 %v515
    %1190 = vmatpush1.msra.mxu0 %v514
    %1191 = vmatprep.subr.mxu0 %v519
    %1192 = vmatpush1.msra.mxu0 %v518
    %1193 = vmatprep.subr.mxu0 %v523
    %1194 = vmatpush1.msra.mxu0 %v522
    %1195 = vmatprep.subr.mxu0 %v527
    %1196 = vmatpush1.msra.mxu0 %v526
    %1197 = vmatprep.subr.mxu0 %v531
    %1198 = vmatpush1.msra.mxu0 %v530
    %1199 = vmatprep.subr.mxu0 %v535
    %1200 = vmatpush1.msra.mxu0 %v534
    %1201 = vmatprep.subr.mxu0 %v539
    %1202 = vmatpush1.msra.mxu0 %v538
    %1203 = vmatprep.mubr.f32.mxu0 %v897
    %1204 = vmatmul.mubr.f32.gmra.mrb[0].mxu0 %v1067
    %v1205 = vpop.f32.mrb[0].mxu0
    %v1206 = vadd.f32 %v723, %v1205
    %v1207 = vpop.f32.mrb[0].mxu0
    %v1208 = vadd.f32 %v727, %v1207
    %1209 = vdwg.mxu0
    %v1210 = vxor.u32 %v1135, 2147483648
    %v1211 = vxor.u32 %v1137, 2147483648
    %v1212 = vxor.u32 %v1206, 2147483648
    %v1213 = vmul.f32 %v1210, 1.442695
    %v1214 = vpow.pop %v1213
    %v1215 = vmul.f32 %v1211, 1.442695
    %v1216 = vpow.pop %v1215
    %v1217 = vmul.f32 %v1212, 1.442695
    %v1218 = vpow.pop %v1217
    %v1219 = vadd.f32 %v1214, 1.0
    %v1220 = vadd.f32 %v1216, 1.0
    %v1221 = vadd.f32 %v1218, 1.0
    %v1222 = vrcp.pop %v1219
    %v1223 = vmul.f32 1.0, %v1222
    %v1224 = vrcp.pop %v1220
    %v1225 = vmul.f32 1.0, %v1224
    %v1226 = vrcp.pop %v1221
    %v1227 = vmul.f32 1.0, %v1226
    %v1228 = vtanh.pop %v1208
    %v1229 = vmul.f32 %v1225, %v895
    %v1230 = vmul.f32 %v1223, %v1228
    %v1231 = vadd.f32 %v1229, %v1230
    %v1232 = vtanh.pop %v1231
    %v1233 = vmul.f32 %v1227, %v1232
    %1234 = vmatprep.subr.mxu0 %v349
    %1235 = vmatpush1.msra.mxu0 %v348
    %1236 = vmatprep.subr.mxu0 %v353
    %1237 = vmatpush1.msra.mxu0 %v352
    %1238 = vmatprep.subr.mxu0 %v357
    %1239 = vmatpush1.msra.mxu0 %v356
    %1240 = vmatprep.subr.mxu0 %v361
    %1241 = vmatpush1.msra.mxu0 %v360
    %1242 = vmatprep.subr.mxu0 %v365
    %1243 = vmatpush1.msra.mxu0 %v364
    %1244 = vmatprep.subr.mxu0 %v369
    %1245 = vmatpush1.msra.mxu0 %v368
    %1246 = vmatprep.subr.mxu0 %v373
    %1247 = vmatpush1.msra.mxu0 %v372
    %1248 = vmatprep.subr.mxu0 %v377
    %1249 = vmatpush1.msra.mxu0 %v376
    %1250 = vmatprep.subr.mxu0 %v381
    %1251 = vmatpush1.msra.mxu0 %v380
    %1252 = vmatprep.subr.mxu0 %v385
    %1253 = vmatpush1.msra.mxu0 %v384
    %1254 = vmatprep.subr.mxu0 %v389
    %1255 = vmatpush1.msra.mxu0 %v388
    %1256 = vmatprep.subr.mxu0 %v393
    %1257 = vmatpush1.msra.mxu0 %v392
    %1258 = vmatprep.subr.mxu0 %v397
    %1259 = vmatpush1.msra.mxu0 %v396
    %1260 = vmatprep.subr.mxu0 %v401
    %1261 = vmatpush1.msra.mxu0 %v400
    %1262 = vmatprep.subr.mxu0 %v405
    %1263 = vmatpush1.msra.mxu0 %v404
    %1264 = vmatprep.subr.mxu0 %v409
    %1265 = vmatpush1.msra.mxu0 %v408
    %1266 = vmatprep.subr.mxu0 0.0
    %1267 = vmatpush1.msra.mxu0 0.0
    %1268 = vmatprep.subr.mxu0 0.0
    %1269 = vmatpush1.msra.mxu0 0.0
    %1270 = vmatprep.subr.mxu0 0.0
    %1271 = vmatpush1.msra.mxu0 0.0
    %1272 = vmatprep.subr.mxu0 0.0
    %1273 = vmatpush1.msra.mxu0 0.0
    %1274 = vmatprep.subr.mxu0 0.0
    %1275 = vmatpush1.msra.mxu0 0.0
    %1276 = vmatprep.subr.mxu0 0.0
    %1277 = vmatpush1.msra.mxu0 0.0
    %1278 = vmatprep.subr.mxu0 0.0
    %1279 = vmatpush1.msra.mxu0 0.0
    %1280 = vmatprep.subr.mxu0 0.0
    %1281 = vmatpush1.msra.mxu0 0.0
    %1282 = vmatprep.subr.mxu0 0.0
    %1283 = vmatpush1.msra.mxu0 0.0
    %1284 = vmatprep.subr.mxu0 0.0
    %1285 = vmatpush1.msra.mxu0 0.0
    %1286 = vmatprep.subr.mxu0 0.0
    %1287 = vmatpush1.msra.mxu0 0.0
    %1288 = vmatprep.subr.mxu0 0.0
    %1289 = vmatpush1.msra.mxu0 0.0
    %1290 = vmatprep.subr.mxu0 0.0
    %1291 = vmatpush1.msra.mxu0 0.0
    %1292 = vmatprep.subr.mxu0 0.0
    %1293 = vmatpush1.msra.mxu0 0.0
    %1294 = vmatprep.subr.mxu0 0.0
    %1295 = vmatpush1.msra.mxu0 0.0
    %1296 = vmatprep.subr.mxu0 0.0
    %1297 = vmatpush1.msra.mxu0 0.0
    %1298 = vmatprep.mubr.f32.mxu0 0.0
    %1299 = vmatmul.mubr.f32.gmra.mrb[0].mxu0 %v1067
    %v1300 = vpop.f32.mrb[0].mxu0
    %v1301 = vadd.f32 0.0, %v1300
    %v1302 = vpop.f32.mrb[0].mxu0
    %v1303 = vadd.f32 0.0, %v1302
    %1304 = vdwg.mxu0
    %1305 = vmatprep.subr.mxu0 %v351
    %1306 = vmatpush1.msra.mxu0 %v350
    %1307 = vmatprep.subr.mxu0 %v355
    %1308 = vmatpush1.msra.mxu0 %v354
    %1309 = vmatprep.subr.mxu0 %v359
    %1310 = vmatpush1.msra.mxu0 %v358
    %1311 = vmatprep.subr.mxu0 %v363
    %1312 = vmatpush1.msra.mxu0 %v362
    %1313 = vmatprep.subr.mxu0 %v367
    %1314 = vmatpush1.msra.mxu0 %v366
    %1315 = vmatprep.subr.mxu0 %v371
    %1316 = vmatpush1.msra.mxu0 %v370
    %1317 = vmatprep.subr.mxu0 %v375
    %1318 = vmatpush1.msra.mxu0 %v374
    %1319 = vmatprep.subr.mxu0 %v379
    %1320 = vmatpush1.msra.mxu0 %v378
    %1321 = vmatprep.subr.mxu0 %v383
    %1322 = vmatpush1.msra.mxu0 %v382
    %1323 = vmatprep.subr.mxu0 %v387
    %1324 = vmatpush1.msra.mxu0 %v386
    %1325 = vmatprep.subr.mxu0 %v391
    %1326 = vmatpush1.msra.mxu0 %v390
    %1327 = vmatprep.subr.mxu0 %v395
    %1328 = vmatpush1.msra.mxu0 %v394
    %1329 = vmatprep.subr.mxu0 %v399
    %1330 = vmatpush1.msra.mxu0 %v398
    %1331 = vmatprep.subr.mxu0 %v403
    %1332 = vmatpush1.msra.mxu0 %v402
    %1333 = vmatprep.subr.mxu0 %v407
    %1334 = vmatpush1.msra.mxu0 %v406
    %1335 = vmatprep.subr.mxu0 %v411
    %1336 = vmatpush1.msra.mxu0 %v410
    %1337 = vmatprep.subr.mxu0 0.0
    %1338 = vmatpush1.msra.mxu0 0.0
    %1339 = vmatprep.subr.mxu0 0.0
    %1340 = vmatpush1.msra.mxu0 0.0
    %1341 = vmatprep.subr.mxu0 0.0
    %1342 = vmatpush1.msra.mxu0 0.0
    %1343 = vmatprep.subr.mxu0 0.0
    %1344 = vmatpush1.msra.mxu0 0.0
    %1345 = vmatprep.subr.mxu0 0.0
    %1346 = vmatpush1.msra.mxu0 0.0
    %1347 = vmatprep.subr.mxu0 0.0
    %1348 = vmatpush1.msra.mxu0 0.0
    %1349 = vmatprep.subr.mxu0 0.0
    %1350 = vmatpush1.msra.mxu0 0.0
    %1351 = vmatprep.subr.mxu0 0.0
    %1352 = vmatpush1.msra.mxu0 0.0
    %1353 = vmatprep.subr.mxu0 0.0
    %1354 = vmatpush1.msra.mxu0 0.0
    %1355 = vmatprep.subr.mxu0 0.0
    %1356 = vmatpush1.msra.mxu0 0.0
    %1357 = vmatprep.subr.mxu0 0.0
    %1358 = vmatpush1.msra.mxu0 0.0
    %1359 = vmatprep.subr.mxu0 0.0
    %1360 = vmatpush1.msra.mxu0 0.0
    %1361 = vmatprep.subr.mxu0 0.0
    %1362 = vmatpush1.msra.mxu0 0.0
    %1363 = vmatprep.subr.mxu0 0.0
    %1364 = vmatpush1.msra.mxu0 0.0
    %1365 = vmatprep.subr.mxu0 0.0
    %1366 = vmatpush1.msra.mxu0 0.0
    %1367 = vmatprep.subr.mxu0 0.0
    %1368 = vmatpush1.msra.mxu0 0.0
    %1369 = vmatprep.mubr.f32.mxu0 0.0
    %1370 = vmatmul.mubr.f32.gmra.mrb[0].mxu0 %v1067
    %v1371 = vpop.f32.mrb[0].mxu0
    %v1372 = vadd.f32 0.0, %v1371
    %v1373 = vpop.f32.mrb[0].mxu0
    %v1374 = vadd.f32 0.0, %v1373
    %1375 = vdwg.mxu0
    %v1376 = vadd.f32 %v201, %v1301
    %v1377 = vadd.f32 %v203, %v1303
    %v1378 = vadd.f32 %v314, %v1372
    %v1379 = vadd.f32 %v316, %v1374
    %v1380 = vxor.u32 %v1376, 2147483648
    %v1381 = vxor.u32 %v1377, 2147483648
    %v1382 = vxor.u32 %v1378, 2147483648
    %v1383 = vmul.f32 %v1380, 1.442695
    %v1384 = vpow.pop %v1383
    %v1385 = vmul.f32 %v1381, 1.442695
    %v1386 = vpow.pop %v1385
    %v1387 = vmul.f32 %v1382, 1.442695
    %v1388 = vpow.pop %v1387
    %v1389 = vadd.f32 %v1384, 1.0
    %v1390 = vadd.f32 %v1386, 1.0
    %v1391 = vadd.f32 %v1388, 1.0
    %v1392 = vrcp.pop %v1389
    %v1393 = vmul.f32 1.0, %v1392
    %v1394 = vrcp.pop %v1390
    %v1395 = vmul.f32 1.0, %v1394
    %v1396 = vrcp.pop %v1391
    %v1397 = vmul.f32 1.0, %v1396
    %v1398 = vtanh.pop %v1379
    %v1399 = vmul.f32 %v1395, %v1065
    %v1400 = vmul.f32 %v1393, %v1398
    %v1401 = vadd.f32 %v1399, %v1400
    %v1402 = vtanh.pop %v1401
    %v1403 = vmul.f32 %v1397, %v1402
    %1404 = vmatprep.subr.mxu0 %v413
    %1405 = vmatpush1.msra.mxu0 %v412
    %1406 = vmatprep.subr.mxu0 %v417
    %1407 = vmatpush1.msra.mxu0 %v416
    %1408 = vmatprep.subr.mxu0 %v421
    %1409 = vmatpush1.msra.mxu0 %v420
    %1410 = vmatprep.subr.mxu0 %v425
    %1411 = vmatpush1.msra.mxu0 %v424
    %1412 = vmatprep.subr.mxu0 %v429
    %1413 = vmatpush1.msra.mxu0 %v428
    %1414 = vmatprep.subr.mxu0 %v433
    %1415 = vmatpush1.msra.mxu0 %v432
    %1416 = vmatprep.subr.mxu0 %v437
    %1417 = vmatpush1.msra.mxu0 %v436
    %1418 = vmatprep.subr.mxu0 %v441
    %1419 = vmatpush1.msra.mxu0 %v440
    %1420 = vmatprep.subr.mxu0 %v445
    %1421 = vmatpush1.msra.mxu0 %v444
    %1422 = vmatprep.subr.mxu0 %v449
    %1423 = vmatpush1.msra.mxu0 %v448
    %1424 = vmatprep.subr.mxu0 %v453
    %1425 = vmatpush1.msra.mxu0 %v452
    %1426 = vmatprep.subr.mxu0 %v457
    %1427 = vmatpush1.msra.mxu0 %v456
    %1428 = vmatprep.subr.mxu0 %v461
    %1429 = vmatpush1.msra.mxu0 %v460
    %1430 = vmatprep.subr.mxu0 %v465
    %1431 = vmatpush1.msra.mxu0 %v464
    %1432 = vmatprep.subr.mxu0 %v469
    %1433 = vmatpush1.msra.mxu0 %v468
    %1434 = vmatprep.subr.mxu0 %v473
    %1435 = vmatpush1.msra.mxu0 %v472
    %1436 = vmatprep.subr.mxu0 %v477
    %1437 = vmatpush1.msra.mxu0 %v476
    %1438 = vmatprep.subr.mxu0 %v481
    %1439 = vmatpush1.msra.mxu0 %v480
    %1440 = vmatprep.subr.mxu0 %v485
    %1441 = vmatpush1.msra.mxu0 %v484
    %1442 = vmatprep.subr.mxu0 %v489
    %1443 = vmatpush1.msra.mxu0 %v488
    %1444 = vmatprep.subr.mxu0 %v493
    %1445 = vmatpush1.msra.mxu0 %v492
    %1446 = vmatprep.subr.mxu0 %v497
    %1447 = vmatpush1.msra.mxu0 %v496
    %1448 = vmatprep.subr.mxu0 %v501
    %1449 = vmatpush1.msra.mxu0 %v500
    %1450 = vmatprep.subr.mxu0 %v505
    %1451 = vmatpush1.msra.mxu0 %v504
    %1452 = vmatprep.subr.mxu0 %v509
    %1453 = vmatpush1.msra.mxu0 %v508
    %1454 = vmatprep.subr.mxu0 %v513
    %1455 = vmatpush1.msra.mxu0 %v512
    %1456 = vmatprep.subr.mxu0 %v517
    %1457 = vmatpush1.msra.mxu0 %v516
    %1458 = vmatprep.subr.mxu0 %v521
    %1459 = vmatpush1.msra.mxu0 %v520
    %1460 = vmatprep.subr.mxu0 %v525
    %1461 = vmatpush1.msra.mxu0 %v524
    %1462 = vmatprep.subr.mxu0 %v529
    %1463 = vmatpush1.msra.mxu0 %v528
    %1464 = vmatprep.subr.mxu0 %v533
    %1465 = vmatpush1.msra.mxu0 %v532
    %1466 = vmatprep.subr.mxu0 %v537
    %1467 = vmatpush1.msra.mxu0 %v536
    %1468 = vmatprep.mubr.f32.mxu0 %v1233
    %1469 = vmatmul.mubr.f32.gmra.mrb[0].mxu0 %v1403
    %v1470 = vpop.f32.mrb[0].mxu0
    %v1471 = vadd.f32 %v715, %v1470
    %v1472 = vpop.f32.mrb[0].mxu0
    %v1473 = vadd.f32 %v719, %v1472
    %1474 = vdwg.mxu0
    %1475 = vmatprep.subr.mxu0 %v415
    %1476 = vmatpush1.msra.mxu0 %v414
    %1477 = vmatprep.subr.mxu0 %v419
    %1478 = vmatpush1.msra.mxu0 %v418
    %1479 = vmatprep.subr.mxu0 %v423
    %1480 = vmatpush1.msra.mxu0 %v422
    %1481 = vmatprep.subr.mxu0 %v427
    %1482 = vmatpush1.msra.mxu0 %v426
    %1483 = vmatprep.subr.mxu0 %v431
    %1484 = vmatpush1.msra.mxu0 %v430
    %1485 = vmatprep.subr.mxu0 %v435
    %1486 = vmatpush1.msra.mxu0 %v434
    %1487 = vmatprep.subr.mxu0 %v439
    %1488 = vmatpush1.msra.mxu0 %v438
    %1489 = vmatprep.subr.mxu0 %v443
    %1490 = vmatpush1.msra.mxu0 %v442
    %1491 = vmatprep.subr.mxu0 %v447
    %1492 = vmatpush1.msra.mxu0 %v446
    %1493 = vmatprep.subr.mxu0 %v451
    %1494 = vmatpush1.msra.mxu0 %v450
    %1495 = vmatprep.subr.mxu0 %v455
    %1496 = vmatpush1.msra.mxu0 %v454
    %1497 = vmatprep.subr.mxu0 %v459
    %1498 = vmatpush1.msra.mxu0 %v458
    %1499 = vmatprep.subr.mxu0 %v463
    %1500 = vmatpush1.msra.mxu0 %v462
    %1501 = vmatprep.subr.mxu0 %v467
    %1502 = vmatpush1.msra.mxu0 %v466
    %1503 = vmatprep.subr.mxu0 %v471
    %1504 = vmatpush1.msra.mxu0 %v470
    %1505 = vmatprep.subr.mxu0 %v475
    %1506 = vmatpush1.msra.mxu0 %v474
    %1507 = vmatprep.subr.mxu0 %v479
    %1508 = vmatpush1.msra.mxu0 %v478
    %1509 = vmatprep.subr.mxu0 %v483
    %1510 = vmatpush1.msra.mxu0 %v482
    %1511 = vmatprep.subr.mxu0 %v487
    %1512 = vmatpush1.msra.mxu0 %v486
    %1513 = vmatprep.subr.mxu0 %v491
    %1514 = vmatpush1.msra.mxu0 %v490
    %1515 = vmatprep.subr.mxu0 %v495
    %1516 = vmatpush1.msra.mxu0 %v494
    %1517 = vmatprep.subr.mxu0 %v499
    %1518 = vmatpush1.msra.mxu0 %v498
    %1519 = vmatprep.subr.mxu0 %v503
    %1520 = vmatpush1.msra.mxu0 %v502
    %1521 = vmatprep.subr.mxu0 %v507
    %1522 = vmatpush1.msra.mxu0 %v506
    %1523 = vmatprep.subr.mxu0 %v511
    %1524 = vmatpush1.msra.mxu0 %v510
    %1525 = vmatprep.subr.mxu0 %v515
    %1526 = vmatpush1.msra.mxu0 %v514
    %1527 = vmatprep.subr.mxu0 %v519
    %1528 = vmatpush1.msra.mxu0 %v518
    %1529 = vmatprep.subr.mxu0 %v523
    %1530 = vmatpush1.msra.mxu0 %v522
    %1531 = vmatprep.subr.mxu0 %v527
    %1532 = vmatpush1.msra.mxu0 %v526
    %1533 = vmatprep.subr.mxu0 %v531
    %1534 = vmatpush1.msra.mxu0 %v530
    %1535 = vmatprep.subr.mxu0 %v535
    %1536 = vmatpush1.msra.mxu0 %v534
    %1537 = vmatprep.subr.mxu0 %v539
    %1538 = vmatpush1.msra.mxu0 %v538
    %1539 = vmatprep.mubr.f32.mxu0 %v1233
    %1540 = vmatmul.mubr.f32.gmra.mrb[0].mxu0 %v1403
    %v1541 = vpop.f32.mrb[0].mxu0
    %v1542 = vadd.f32 %v723, %v1541
    %v1543 = vpop.f32.mrb[0].mxu0
    %v1544 = vadd.f32 %v727, %v1543
    %1545 = vdwg.mxu0
    %v1546 = vxor.u32 %v1471, 2147483648
    %v1547 = vxor.u32 %v1473, 2147483648
    %v1548 = vxor.u32 %v1542, 2147483648
    %v1549 = vmul.f32 %v1546, 1.442695
    %v1550 = vpow.pop %v1549
    %v1551 = vmul.f32 %v1547, 1.442695
    %v1552 = vpow.pop %v1551
    %v1553 = vmul.f32 %v1548, 1.442695
    %v1554 = vpow.pop %v1553
    %v1555 = vadd.f32 %v1550, 1.0
    %v1556 = vadd.f32 %v1552, 1.0
    %v1557 = vadd.f32 %v1554, 1.0
    %v1558 = vrcp.pop %v1555
    %v1559 = vmul.f32 1.0, %v1558
    %v1560 = vrcp.pop %v1556
    %v1561 = vmul.f32 1.0, %v1560
    %v1562 = vrcp.pop %v1557
    %v1563 = vmul.f32 1.0, %v1562
    %v1564 = vtanh.pop %v1544
    %v1565 = vmul.f32 %v1561, %v1231
    %v1566 = vmul.f32 %v1559, %v1564
    %v1567 = vadd.f32 %v1565, %v1566
    %v1568 = vtanh.pop %v1567
    %v1569 = vmul.f32 %v1563, %v1568
    %1570 = vmatprep.subr.mxu0 %v349
    %1571 = vmatpush1.msra.mxu0 %v348
    %1572 = vmatprep.subr.mxu0 %v353
    %1573 = vmatpush1.msra.mxu0 %v352
    %1574 = vmatprep.subr.mxu0 %v357
    %1575 = vmatpush1.msra.mxu0 %v356
    %1576 = vmatprep.subr.mxu0 %v361
    %1577 = vmatpush1.msra.mxu0 %v360
    %1578 = vmatprep.subr.mxu0 %v365
    %1579 = vmatpush1.msra.mxu0 %v364
    %1580 = vmatprep.subr.mxu0 %v369
    %1581 = vmatpush1.msra.mxu0 %v368
    %1582 = vmatprep.subr.mxu0 %v373
    %1583 = vmatpush1.msra.mxu0 %v372
    %1584 = vmatprep.subr.mxu0 %v377
    %1585 = vmatpush1.msra.mxu0 %v376
    %1586 = vmatprep.subr.mxu0 %v381
    %1587 = vmatpush1.msra.mxu0 %v380
    %1588 = vmatprep.subr.mxu0 %v385
    %1589 = vmatpush1.msra.mxu0 %v384
    %1590 = vmatprep.subr.mxu0 %v389
    %1591 = vmatpush1.msra.mxu0 %v388
    %1592 = vmatprep.subr.mxu0 %v393
    %1593 = vmatpush1.msra.mxu0 %v392
    %1594 = vmatprep.subr.mxu0 %v397
    %1595 = vmatpush1.msra.mxu0 %v396
    %1596 = vmatprep.subr.mxu0 %v401
    %1597 = vmatpush1.msra.mxu0 %v400
    %1598 = vmatprep.subr.mxu0 %v405
    %1599 = vmatpush1.msra.mxu0 %v404
    %1600 = vmatprep.subr.mxu0 %v409
    %1601 = vmatpush1.msra.mxu0 %v408
    %1602 = vmatprep.subr.mxu0 0.0
    %1603 = vmatpush1.msra.mxu0 0.0
    %1604 = vmatprep.subr.mxu0 0.0
    %1605 = vmatpush1.msra.mxu0 0.0
    %1606 = vmatprep.subr.mxu0 0.0
    %1607 = vmatpush1.msra.mxu0 0.0
    %1608 = vmatprep.subr.mxu0 0.0
    %1609 = vmatpush1.msra.mxu0 0.0
    %1610 = vmatprep.subr.mxu0 0.0
    %1611 = vmatpush1.msra.mxu0 0.0
    %1612 = vmatprep.subr.mxu0 0.0
    %1613 = vmatpush1.msra.mxu0 0.0
    %1614 = vmatprep.subr.mxu0 0.0
    %1615 = vmatpush1.msra.mxu0 0.0
    %1616 = vmatprep.subr.mxu0 0.0
    %1617 = vmatpush1.msra.mxu0 0.0
    %1618 = vmatprep.subr.mxu0 0.0
    %1619 = vmatpush1.msra.mxu0 0.0
    %1620 = vmatprep.subr.mxu0 0.0
    %1621 = vmatpush1.msra.mxu0 0.0
    %1622 = vmatprep.subr.mxu0 0.0
    %1623 = vmatpush1.msra.mxu0 0.0
    %1624 = vmatprep.subr.mxu0 0.0
    %1625 = vmatpush1.msra.mxu0 0.0
    %1626 = vmatprep.subr.mxu0 0.0
    %1627 = vmatpush1.msra.mxu0 0.0
    %1628 = vmatprep.subr.mxu0 0.0
    %1629 = vmatpush1.msra.mxu0 0.0
    %1630 = vmatprep.subr.mxu0 0.0
    %1631 = vmatpush1.msra.mxu0 0.0
    %1632 = vmatprep.subr.mxu0 0.0
    %1633 = vmatpush1.msra.mxu0 0.0
    %1634 = vmatprep.mubr.f32.mxu0 0.0
    %1635 = vmatmul.mubr.f32.gmra.mrb[0].mxu0 %v1403
    %v1636 = vpop.f32.mrb[0].mxu0
    %v1637 = vadd.f32 0.0, %v1636
    %v1638 = vpop.f32.mrb[0].mxu0
    %v1639 = vadd.f32 0.0, %v1638
    %1640 = vdwg.mxu0
    %1641 = vmatprep.subr.mxu0 %v351
    %1642 = vmatpush1.msra.mxu0 %v350
    %1643 = vmatprep.subr.mxu0 %v355
    %1644 = vmatpush1.msra.mxu0 %v354
    %1645 = vmatprep.subr.mxu0 %v359
    %1646 = vmatpush1.msra.mxu0 %v358
    %1647 = vmatprep.subr.mxu0 %v363
    %1648 = vmatpush1.msra.mxu0 %v362
    %1649 = vmatprep.subr.mxu0 %v367
    %1650 = vmatpush1.msra.mxu0 %v366
    %1651 = vmatprep.subr.mxu0 %v371
    %1652 = vmatpush1.msra.mxu0 %v370
    %1653 = vmatprep.subr.mxu0 %v375
    %1654 = vmatpush1.msra.mxu0 %v374
    %1655 = vmatprep.subr.mxu0 %v379
    %1656 = vmatpush1.msra.mxu0 %v378
    %1657 = vmatprep.subr.mxu0 %v383
    %1658 = vmatpush1.msra.mxu0 %v382
    %1659 = vmatprep.subr.mxu0 %v387
    %1660 = vmatpush1.msra.mxu0 %v386
    %1661 = vmatprep.subr.mxu0 %v391
    %1662 = vmatpush1.msra.mxu0 %v390
    %1663 = vmatprep.subr.mxu0 %v395
    %1664 = vmatpush1.msra.mxu0 %v394
    %1665 = vmatprep.subr.mxu0 %v399
    %1666 = vmatpush1.msra.mxu0 %v398
    %1667 = vmatprep.subr.mxu0 %v403
    %1668 = vmatpush1.msra.mxu0 %v402
    %1669 = vmatprep.subr.mxu0 %v407
    %1670 = vmatpush1.msra.mxu0 %v406
    %1671 = vmatprep.subr.mxu0 %v411
    %1672 = vmatpush1.msra.mxu0 %v410
    %1673 = vmatprep.subr.mxu0 0.0
    %1674 = vmatpush1.msra.mxu0 0.0
    %1675 = vmatprep.subr.mxu0 0.0
    %1676 = vmatpush1.msra.mxu0 0.0
    %1677 = vmatprep.subr.mxu0 0.0
    %1678 = vmatpush1.msra.mxu0 0.0
    %1679 = vmatprep.subr.mxu0 0.0
    %1680 = vmatpush1.msra.mxu0 0.0
    %1681 = vmatprep.subr.mxu0 0.0
    %1682 = vmatpush1.msra.mxu0 0.0
    %1683 = vmatprep.subr.mxu0 0.0
    %1684 = vmatpush1.msra.mxu0 0.0
    %1685 = vmatprep.subr.mxu0 0.0
    %1686 = vmatpush1.msra.mxu0 0.0
    %1687 = vmatprep.subr.mxu0 0.0
    %1688 = vmatpush1.msra.mxu0 0.0
    %1689 = vmatprep.subr.mxu0 0.0
    %1690 = vmatpush1.msra.mxu0 0.0
    %1691 = vmatprep.subr.mxu0 0.0
    %1692 = vmatpush1.msra.mxu0 0.0
    %1693 = vmatprep.subr.mxu0 0.0
    %1694 = vmatpush1.msra.mxu0 0.0
    %1695 = vmatprep.subr.mxu0 0.0
    %1696 = vmatpush1.msra.mxu0 0.0
    %1697 = vmatprep.subr.mxu0 0.0
    %1698 = vmatpush1.msra.mxu0 0.0
    %1699 = vmatprep.subr.mxu0 0.0
    %1700 = vmatpush1.msra.mxu0 0.0
    %1701 = vmatprep.subr.mxu0 0.0
    %1702 = vmatpush1.msra.mxu0 0.0
    %1703 = vmatprep.subr.mxu0 0.0
    %1704 = vmatpush1.msra.mxu0 0.0
    %1705 = vmatprep.mubr.f32.mxu0 0.0
    %1706 = vmatmul.mubr.f32.gmra.mrb[0].mxu0 %v1403
    %v1707 = vpop.f32.mrb[0].mxu0
    %v1708 = vadd.f32 0.0, %v1707
    %v1709 = vpop.f32.mrb[0].mxu0
    %v1710 = vadd.f32 0.0, %v1709
    %1711 = vdwg.mxu0
    %v1712 = vadd.f32 %v207, %v1637
    %v1713 = vadd.f32 %v209, %v1639
    %v1714 = vadd.f32 %v320, %v1708
    %v1715 = vadd.f32 %v322, %v1710
    %v1716 = vxor.u32 %v1712, 2147483648
    %v1717 = vxor.u32 %v1713, 2147483648
    %v1718 = vxor.u32 %v1714, 2147483648
    %v1719 = vmul.f32 %v1716, 1.442695
    %v1720 = vpow.pop %v1719
    %v1721 = vmul.f32 %v1717, 1.442695
    %v1722 = vpow.pop %v1721
    %v1723 = vmul.f32 %v1718, 1.442695
    %v1724 = vpow.pop %v1723
    %v1725 = vadd.f32 %v1720, 1.0
    %v1726 = vadd.f32 %v1722, 1.0
    %v1727 = vadd.f32 %v1724, 1.0
    %v1728 = vrcp.pop %v1725
    %v1729 = vmul.f32 1.0, %v1728
    %v1730 = vrcp.pop %v1726
    %v1731 = vmul.f32 1.0, %v1730
    %v1732 = vrcp.pop %v1727
    %v1733 = vmul.f32 1.0, %v1732
    %v1734 = vtanh.pop %v1715
    %v1735 = vmul.f32 %v1731, %v1401
    %v1736 = vmul.f32 %v1729, %v1734
    %v1737 = vadd.f32 %v1735, %v1736
    %v1738 = vtanh.pop %v1737
    %v1739 = vmul.f32 %v1733, %v1738
    %1740 = vmatprep.subr.mxu0 %v413
    %1741 = vmatpush1.msra.mxu0 %v412
    %1742 = vmatprep.subr.mxu0 %v417
    %1743 = vmatpush1.msra.mxu0 %v416
    %1744 = vmatprep.subr.mxu0 %v421
    %1745 = vmatpush1.msra.mxu0 %v420
    %1746 = vmatprep.subr.mxu0 %v425
    %1747 = vmatpush1.msra.mxu0 %v424
    %1748 = vmatprep.subr.mxu0 %v429
    %1749 = vmatpush1.msra.mxu0 %v428
    %1750 = vmatprep.subr.mxu0 %v433
    %1751 = vmatpush1.msra.mxu0 %v432
    %1752 = vmatprep.subr.mxu0 %v437
    %1753 = vmatpush1.msra.mxu0 %v436
    %1754 = vmatprep.subr.mxu0 %v441
    %1755 = vmatpush1.msra.mxu0 %v440
    %1756 = vmatprep.subr.mxu0 %v445
    %1757 = vmatpush1.msra.mxu0 %v444
    %1758 = vmatprep.subr.mxu0 %v449
    %1759 = vmatpush1.msra.mxu0 %v448
    %1760 = vmatprep.subr.mxu0 %v453
    %1761 = vmatpush1.msra.mxu0 %v452
    %1762 = vmatprep.subr.mxu0 %v457
    %1763 = vmatpush1.msra.mxu0 %v456
    %1764 = vmatprep.subr.mxu0 %v461
    %1765 = vmatpush1.msra.mxu0 %v460
    %1766 = vmatprep.subr.mxu0 %v465
    %1767 = vmatpush1.msra.mxu0 %v464
    %1768 = vmatprep.subr.mxu0 %v469
    %1769 = vmatpush1.msra.mxu0 %v468
    %1770 = vmatprep.subr.mxu0 %v473
    %1771 = vmatpush1.msra.mxu0 %v472
    %1772 = vmatprep.subr.mxu0 %v477
    %1773 = vmatpush1.msra.mxu0 %v476
    %1774 = vmatprep.subr.mxu0 %v481
    %1775 = vmatpush1.msra.mxu0 %v480
    %1776 = vmatprep.subr.mxu0 %v485
    %1777 = vmatpush1.msra.mxu0 %v484
    %1778 = vmatprep.subr.mxu0 %v489
    %1779 = vmatpush1.msra.mxu0 %v488
    %1780 = vmatprep.subr.mxu0 %v493
    %1781 = vmatpush1.msra.mxu0 %v492
    %1782 = vmatprep.subr.mxu0 %v497
    %1783 = vmatpush1.msra.mxu0 %v496
    %1784 = vmatprep.subr.mxu0 %v501
    %1785 = vmatpush1.msra.mxu0 %v500
    %1786 = vmatprep.subr.mxu0 %v505
    %1787 = vmatpush1.msra.mxu0 %v504
    %1788 = vmatprep.subr.mxu0 %v509
    %1789 = vmatpush1.msra.mxu0 %v508
    %1790 = vmatprep.subr.mxu0 %v513
    %1791 = vmatpush1.msra.mxu0 %v512
    %1792 = vmatprep.subr.mxu0 %v517
    %1793 = vmatpush1.msra.mxu0 %v516
    %1794 = vmatprep.subr.mxu0 %v521
    %1795 = vmatpush1.msra.mxu0 %v520
    %1796 = vmatprep.subr.mxu0 %v525
    %1797 = vmatpush1.msra.mxu0 %v524
    %1798 = vmatprep.subr.mxu0 %v529
    %1799 = vmatpush1.msra.mxu0 %v528
    %1800 = vmatprep.subr.mxu0 %v533
    %1801 = vmatpush1.msra.mxu0 %v532
    %1802 = vmatprep.subr.mxu0 %v537
    %1803 = vmatpush1.msra.mxu0 %v536
    %1804 = vmatprep.mubr.f32.mxu0 %v1569
    %1805 = vmatmul.mubr.f32.gmra.mrb[0].mxu0 %v1739
    %v1806 = vpop.f32.mrb[0].mxu0
    %v1807 = vadd.f32 %v715, %v1806
    %v1808 = vpop.f32.mrb[0].mxu0
    %v1809 = vadd.f32 %v719, %v1808
    %1810 = vdwg.mxu0
    %1811 = vmatprep.subr.mxu0 %v415
    %1812 = vmatpush1.msra.mxu0 %v414
    %1813 = vmatprep.subr.mxu0 %v419
    %1814 = vmatpush1.msra.mxu0 %v418
    %1815 = vmatprep.subr.mxu0 %v423
    %1816 = vmatpush1.msra.mxu0 %v422
    %1817 = vmatprep.subr.mxu0 %v427
    %1818 = vmatpush1.msra.mxu0 %v426
    %1819 = vmatprep.subr.mxu0 %v431
    %1820 = vmatpush1.msra.mxu0 %v430
    %1821 = vmatprep.subr.mxu0 %v435
    %1822 = vmatpush1.msra.mxu0 %v434
    %1823 = vmatprep.subr.mxu0 %v439
    %1824 = vmatpush1.msra.mxu0 %v438
    %1825 = vmatprep.subr.mxu0 %v443
    %1826 = vmatpush1.msra.mxu0 %v442
    %1827 = vmatprep.subr.mxu0 %v447
    %1828 = vmatpush1.msra.mxu0 %v446
    %1829 = vmatprep.subr.mxu0 %v451
    %1830 = vmatpush1.msra.mxu0 %v450
    %1831 = vmatprep.subr.mxu0 %v455
    %1832 = vmatpush1.msra.mxu0 %v454
    %1833 = vmatprep.subr.mxu0 %v459
    %1834 = vmatpush1.msra.mxu0 %v458
    %1835 = vmatprep.subr.mxu0 %v463
    %1836 = vmatpush1.msra.mxu0 %v462
    %1837 = vmatprep.subr.mxu0 %v467
    %1838 = vmatpush1.msra.mxu0 %v466
    %1839 = vmatprep.subr.mxu0 %v471
    %1840 = vmatpush1.msra.mxu0 %v470
    %1841 = vmatprep.subr.mxu0 %v475
    %1842 = vmatpush1.msra.mxu0 %v474
    %1843 = vmatprep.subr.mxu0 %v479
    %1844 = vmatpush1.msra.mxu0 %v478
    %1845 = vmatprep.subr.mxu0 %v483
    %1846 = vmatpush1.msra.mxu0 %v482
    %1847 = vmatprep.subr.mxu0 %v487
    %1848 = vmatpush1.msra.mxu0 %v486
    %1849 = vmatprep.subr.mxu0 %v491
    %1850 = vmatpush1.msra.mxu0 %v490
    %1851 = vmatprep.subr.mxu0 %v495
    %1852 = vmatpush1.msra.mxu0 %v494
    %1853 = vmatprep.subr.mxu0 %v499
    %1854 = vmatpush1.msra.mxu0 %v498
    %1855 = vmatprep.subr.mxu0 %v503
    %1856 = vmatpush1.msra.mxu0 %v502
    %1857 = vmatprep.subr.mxu0 %v507
    %1858 = vmatpush1.msra.mxu0 %v506
    %1859 = vmatprep.subr.mxu0 %v511
    %1860 = vmatpush1.msra.mxu0 %v510
    %1861 = vmatprep.subr.mxu0 %v515
    %1862 = vmatpush1.msra.mxu0 %v514
    %1863 = vmatprep.subr.mxu0 %v519
    %1864 = vmatpush1.msra.mxu0 %v518
    %1865 = vmatprep.subr.mxu0 %v523
    %1866 = vmatpush1.msra.mxu0 %v522
    %1867 = vmatprep.subr.mxu0 %v527
    %1868 = vmatpush1.msra.mxu0 %v526
    %1869 = vmatprep.subr.mxu0 %v531
    %1870 = vmatpush1.msra.mxu0 %v530
    %1871 = vmatprep.subr.mxu0 %v535
    %1872 = vmatpush1.msra.mxu0 %v534
    %1873 = vmatprep.subr.mxu0 %v539
    %1874 = vmatpush1.msra.mxu0 %v538
    %1875 = vmatprep.mubr.f32.mxu0 %v1569
    %1876 = vmatmul.mubr.f32.gmra.mrb[0].mxu0 %v1739
    %v1877 = vpop.f32.mrb[0].mxu0
    %v1878 = vadd.f32 %v723, %v1877
    %v1879 = vpop.f32.mrb[0].mxu0
    %v1880 = vadd.f32 %v727, %v1879
    %1881 = vdwg.mxu0
    %v1882 = vxor.u32 %v1807, 2147483648
    %v1883 = vxor.u32 %v1809, 2147483648
    %v1884 = vxor.u32 %v1878, 2147483648
    %v1885 = vmul.f32 %v1882, 1.442695
    %v1886 = vpow.pop %v1885
    %v1887 = vmul.f32 %v1883, 1.442695
    %v1888 = vpow.pop %v1887
    %v1889 = vmul.f32 %v1884, 1.442695
    %v1890 = vpow.pop %v1889
    %v1891 = vadd.f32 %v1886, 1.0
    %v1892 = vadd.f32 %v1888, 1.0
    %v1893 = vadd.f32 %v1890, 1.0
    %v1894 = vrcp.pop %v1891
    %v1895 = vmul.f32 1.0, %v1894
    %v1896 = vrcp.pop %v1892
    %v1897 = vmul.f32 1.0, %v1896
    %v1898 = vrcp.pop %v1893
    %v1899 = vmul.f32 1.0, %v1898
    %v1900 = vtanh.pop %v1880
    %v1901 = vmul.f32 %v1897, %v1567
    %v1902 = vmul.f32 %v1895, %v1900
    %v1903 = vadd.f32 %v1901, %v1902
    %v1904 = vtanh.pop %v1903
    %v1905 = vmul.f32 %v1899, %v1904
    %1906 = vmatprep.subr.mxu0 %v349
    %1907 = vmatpush1.msra.mxu0 %v348
    %1908 = vmatprep.subr.mxu0 %v353
    %1909 = vmatpush1.msra.mxu0 %v352
    %1910 = vmatprep.subr.mxu0 %v357
    %1911 = vmatpush1.msra.mxu0 %v356
    %1912 = vmatprep.subr.mxu0 %v361
    %1913 = vmatpush1.msra.mxu0 %v360
    %1914 = vmatprep.subr.mxu0 %v365
    %1915 = vmatpush1.msra.mxu0 %v364
    %1916 = vmatprep.subr.mxu0 %v369
    %1917 = vmatpush1.msra.mxu0 %v368
    %1918 = vmatprep.subr.mxu0 %v373
    %1919 = vmatpush1.msra.mxu0 %v372
    %1920 = vmatprep.subr.mxu0 %v377
    %1921 = vmatpush1.msra.mxu0 %v376
    %1922 = vmatprep.subr.mxu0 %v381
    %1923 = vmatpush1.msra.mxu0 %v380
    %1924 = vmatprep.subr.mxu0 %v385
    %1925 = vmatpush1.msra.mxu0 %v384
    %1926 = vmatprep.subr.mxu0 %v389
    %1927 = vmatpush1.msra.mxu0 %v388
    %1928 = vmatprep.subr.mxu0 %v393
    %1929 = vmatpush1.msra.mxu0 %v392
    %1930 = vmatprep.subr.mxu0 %v397
    %1931 = vmatpush1.msra.mxu0 %v396
    %1932 = vmatprep.subr.mxu0 %v401
    %1933 = vmatpush1.msra.mxu0 %v400
    %1934 = vmatprep.subr.mxu0 %v405
    %1935 = vmatpush1.msra.mxu0 %v404
    %1936 = vmatprep.subr.mxu0 %v409
    %1937 = vmatpush1.msra.mxu0 %v408
    %1938 = vmatprep.subr.mxu0 0.0
    %1939 = vmatpush1.msra.mxu0 0.0
    %1940 = vmatprep.subr.mxu0 0.0
    %1941 = vmatpush1.msra.mxu0 0.0
    %1942 = vmatprep.subr.mxu0 0.0
    %1943 = vmatpush1.msra.mxu0 0.0
    %1944 = vmatprep.subr.mxu0 0.0
    %1945 = vmatpush1.msra.mxu0 0.0
    %1946 = vmatprep.subr.mxu0 0.0
    %1947 = vmatpush1.msra.mxu0 0.0
    %1948 = vmatprep.subr.mxu0 0.0
    %1949 = vmatpush1.msra.mxu0 0.0
    %1950 = vmatprep.subr.mxu0 0.0
    %1951 = vmatpush1.msra.mxu0 0.0
    %1952 = vmatprep.subr.mxu0 0.0
    %1953 = vmatpush1.msra.mxu0 0.0
    %1954 = vmatprep.subr.mxu0 0.0
    %1955 = vmatpush1.msra.mxu0 0.0
    %1956 = vmatprep.subr.mxu0 0.0
    %1957 = vmatpush1.msra.mxu0 0.0
    %1958 = vmatprep.subr.mxu0 0.0
    %1959 = vmatpush1.msra.mxu0 0.0
    %1960 = vmatprep.subr.mxu0 0.0
    %1961 = vmatpush1.msra.mxu0 0.0
    %1962 = vmatprep.subr.mxu0 0.0
    %1963 = vmatpush1.msra.mxu0 0.0
    %1964 = vmatprep.subr.mxu0 0.0
    %1965 = vmatpush1.msra.mxu0 0.0
    %1966 = vmatprep.subr.mxu0 0.0
    %1967 = vmatpush1.msra.mxu0 0.0
    %1968 = vmatprep.subr.mxu0 0.0
    %1969 = vmatpush1.msra.mxu0 0.0
    %1970 = vmatprep.mubr.f32.mxu0 0.0
    %1971 = vmatmul.mubr.f32.gmra.mrb[0].mxu0 %v1739
    %v1972 = vpop.f32.mrb[0].mxu0
    %v1973 = vadd.f32 0.0, %v1972
    %v1974 = vpop.f32.mrb[0].mxu0
    %v1975 = vadd.f32 0.0, %v1974
    %1976 = vdwg.mxu0
    %1977 = vmatprep.subr.mxu0 %v351
    %1978 = vmatpush1.msra.mxu0 %v350
    %1979 = vmatprep.subr.mxu0 %v355
    %1980 = vmatpush1.msra.mxu0 %v354
    %1981 = vmatprep.subr.mxu0 %v359
    %1982 = vmatpush1.msra.mxu0 %v358
    %1983 = vmatprep.subr.mxu0 %v363
    %1984 = vmatpush1.msra.mxu0 %v362
    %1985 = vmatprep.subr.mxu0 %v367
    %1986 = vmatpush1.msra.mxu0 %v366
    %1987 = vmatprep.subr.mxu0 %v371
    %1988 = vmatpush1.msra.mxu0 %v370
    %1989 = vmatprep.subr.mxu0 %v375
    %1990 = vmatpush1.msra.mxu0 %v374
    %1991 = vmatprep.subr.mxu0 %v379
    %1992 = vmatpush1.msra.mxu0 %v378
    %1993 = vmatprep.subr.mxu0 %v383
    %1994 = vmatpush1.msra.mxu0 %v382
    %1995 = vmatprep.subr.mxu0 %v387
    %1996 = vmatpush1.msra.mxu0 %v386
    %1997 = vmatprep.subr.mxu0 %v391
    %1998 = vmatpush1.msra.mxu0 %v390
    %1999 = vmatprep.subr.mxu0 %v395
    %2000 = vmatpush1.msra.mxu0 %v394
    %2001 = vmatprep.subr.mxu0 %v399
    %2002 = vmatpush1.msra.mxu0 %v398
    %2003 = vmatprep.subr.mxu0 %v403
    %2004 = vmatpush1.msra.mxu0 %v402
    %2005 = vmatprep.subr.mxu0 %v407
    %2006 = vmatpush1.msra.mxu0 %v406
    %2007 = vmatprep.subr.mxu0 %v411
    %2008 = vmatpush1.msra.mxu0 %v410
    %2009 = vmatprep.subr.mxu0 0.0
    %2010 = vmatpush1.msra.mxu0 0.0
    %2011 = vmatprep.subr.mxu0 0.0
    %2012 = vmatpush1.msra.mxu0 0.0
    %2013 = vmatprep.subr.mxu0 0.0
    %2014 = vmatpush1.msra.mxu0 0.0
    %2015 = vmatprep.subr.mxu0 0.0
    %2016 = vmatpush1.msra.mxu0 0.0
    %2017 = vmatprep.subr.mxu0 0.0
    %2018 = vmatpush1.msra.mxu0 0.0
    %2019 = vmatprep.subr.mxu0 0.0
    %2020 = vmatpush1.msra.mxu0 0.0
    %2021 = vmatprep.subr.mxu0 0.0
    %2022 = vmatpush1.msra.mxu0 0.0
    %2023 = vmatprep.subr.mxu0 0.0
    %2024 = vmatpush1.msra.mxu0 0.0
    %2025 = vmatprep.subr.mxu0 0.0
    %2026 = vmatpush1.msra.mxu0 0.0
    %2027 = vmatprep.subr.mxu0 0.0
    %2028 = vmatpush1.msra.mxu0 0.0
    %2029 = vmatprep.subr.mxu0 0.0
    %2030 = vmatpush1.msra.mxu0 0.0
    %2031 = vmatprep.subr.mxu0 0.0
    %2032 = vmatpush1.msra.mxu0 0.0
    %2033 = vmatprep.subr.mxu0 0.0
    %2034 = vmatpush1.msra.mxu0 0.0
    %2035 = vmatprep.subr.mxu0 0.0
    %2036 = vmatpush1.msra.mxu0 0.0
    %2037 = vmatprep.subr.mxu0 0.0
    %2038 = vmatpush1.msra.mxu0 0.0
    %2039 = vmatprep.subr.mxu0 0.0
    %2040 = vmatpush1.msra.mxu0 0.0
    %2041 = vmatprep.mubr.f32.mxu0 0.0
    %2042 = vmatmul.mubr.f32.gmra.mrb[0].mxu0 %v1739
    %v2043 = vpop.f32.mrb[0].mxu0
    %v2044 = vadd.f32 0.0, %v2043
    %v2045 = vpop.f32.mrb[0].mxu0
    %v2046 = vadd.f32 0.0, %v2045
    %2047 = vdwg.mxu0
    %v2048 = vadd.f32 %v213, %v1973
    %v2049 = vadd.f32 %v215, %v1975
    %v2050 = vadd.f32 %v326, %v2044
    %v2051 = vadd.f32 %v328, %v2046
    %v2052 = vxor.u32 %v2048, 2147483648
    %v2053 = vxor.u32 %v2049, 2147483648
    %v2054 = vxor.u32 %v2050, 2147483648
    %v2055 = vmul.f32 %v2052, 1.442695
    %v2056 = vpow.pop %v2055
    %v2057 = vmul.f32 %v2053, 1.442695
    %v2058 = vpow.pop %v2057
    %v2059 = vmul.f32 %v2054, 1.442695
    %v2060 = vpow.pop %v2059
    %v2061 = vadd.f32 %v2056, 1.0
    %v2062 = vadd.f32 %v2058, 1.0
    %v2063 = vadd.f32 %v2060, 1.0
    %v2064 = vrcp.pop %v2061
    %v2065 = vmul.f32 1.0, %v2064
    %v2066 = vrcp.pop %v2062
    %v2067 = vmul.f32 1.0, %v2066
    %v2068 = vrcp.pop %v2063
    %v2069 = vmul.f32 1.0, %v2068
    %v2070 = vtanh.pop %v2051
    %v2071 = vmul.f32 %v2067, %v1737
    %v2072 = vmul.f32 %v2065, %v2070
    %v2073 = vadd.f32 %v2071, %v2072
    %v2074 = vtanh.pop %v2073
    %v2075 = vmul.f32 %v2069, %v2074
    %2076 = vmatprep.subr.mxu0 %v413
    %2077 = vmatpush1.msra.mxu0 %v412
    %2078 = vmatprep.subr.mxu0 %v417
    %2079 = vmatpush1.msra.mxu0 %v416
    %2080 = vmatprep.subr.mxu0 %v421
    %2081 = vmatpush1.msra.mxu0 %v420
    %2082 = vmatprep.subr.mxu0 %v425
    %2083 = vmatpush1.msra.mxu0 %v424
    %2084 = vmatprep.subr.mxu0 %v429
    %2085 = vmatpush1.msra.mxu0 %v428
    %2086 = vmatprep.subr.mxu0 %v433
    %2087 = vmatpush1.msra.mxu0 %v432
    %2088 = vmatprep.subr.mxu0 %v437
    %2089 = vmatpush1.msra.mxu0 %v436
    %2090 = vmatprep.subr.mxu0 %v441
    %2091 = vmatpush1.msra.mxu0 %v440
    %2092 = vmatprep.subr.mxu0 %v445
    %2093 = vmatpush1.msra.mxu0 %v444
    %2094 = vmatprep.subr.mxu0 %v449
    %2095 = vmatpush1.msra.mxu0 %v448
    %2096 = vmatprep.subr.mxu0 %v453
    %2097 = vmatpush1.msra.mxu0 %v452
    %2098 = vmatprep.subr.mxu0 %v457
    %2099 = vmatpush1.msra.mxu0 %v456
    %2100 = vmatprep.subr.mxu0 %v461
    %2101 = vmatpush1.msra.mxu0 %v460
    %2102 = vmatprep.subr.mxu0 %v465
    %2103 = vmatpush1.msra.mxu0 %v464
    %2104 = vmatprep.subr.mxu0 %v469
    %2105 = vmatpush1.msra.mxu0 %v468
    %2106 = vmatprep.subr.mxu0 %v473
    %2107 = vmatpush1.msra.mxu0 %v472
    %2108 = vmatprep.subr.mxu0 %v477
    %2109 = vmatpush1.msra.mxu0 %v476
    %2110 = vmatprep.subr.mxu0 %v481
    %2111 = vmatpush1.msra.mxu0 %v480
    %2112 = vmatprep.subr.mxu0 %v485
    %2113 = vmatpush1.msra.mxu0 %v484
    %2114 = vmatprep.subr.mxu0 %v489
    %2115 = vmatpush1.msra.mxu0 %v488
    %2116 = vmatprep.subr.mxu0 %v493
    %2117 = vmatpush1.msra.mxu0 %v492
    %2118 = vmatprep.subr.mxu0 %v497
    %2119 = vmatpush1.msra.mxu0 %v496
    %2120 = vmatprep.subr.mxu0 %v501
    %2121 = vmatpush1.msra.mxu0 %v500
    %2122 = vmatprep.subr.mxu0 %v505
    %2123 = vmatpush1.msra.mxu0 %v504
    %2124 = vmatprep.subr.mxu0 %v509
    %2125 = vmatpush1.msra.mxu0 %v508
    %2126 = vmatprep.subr.mxu0 %v513
    %2127 = vmatpush1.msra.mxu0 %v512
    %2128 = vmatprep.subr.mxu0 %v517
    %2129 = vmatpush1.msra.mxu0 %v516
    %2130 = vmatprep.subr.mxu0 %v521
    %2131 = vmatpush1.msra.mxu0 %v520
    %2132 = vmatprep.subr.mxu0 %v525
    %2133 = vmatpush1.msra.mxu0 %v524
    %2134 = vmatprep.subr.mxu0 %v529
    %2135 = vmatpush1.msra.mxu0 %v528
    %2136 = vmatprep.subr.mxu0 %v533
    %2137 = vmatpush1.msra.mxu0 %v532
    %2138 = vmatprep.subr.mxu0 %v537
    %2139 = vmatpush1.msra.mxu0 %v536
    %2140 = vmatprep.mubr.f32.mxu0 %v1905
    %2141 = vmatmul.mubr.f32.gmra.mrb[0].mxu0 %v2075
    %v2142 = vpop.f32.mrb[0].mxu0
    %v2143 = vadd.f32 %v715, %v2142
    %v2144 = vpop.f32.mrb[0].mxu0
    %v2145 = vadd.f32 %v719, %v2144
    %2146 = vdwg.mxu0
    %2147 = vmatprep.subr.mxu0 %v415
    %2148 = vmatpush1.msra.mxu0 %v414
    %2149 = vmatprep.subr.mxu0 %v419
    %2150 = vmatpush1.msra.mxu0 %v418
    %2151 = vmatprep.subr.mxu0 %v423
    %2152 = vmatpush1.msra.mxu0 %v422
    %2153 = vmatprep.subr.mxu0 %v427
    %2154 = vmatpush1.msra.mxu0 %v426
    %2155 = vmatprep.subr.mxu0 %v431
    %2156 = vmatpush1.msra.mxu0 %v430
    %2157 = vmatprep.subr.mxu0 %v435
    %2158 = vmatpush1.msra.mxu0 %v434
    %2159 = vmatprep.subr.mxu0 %v439
    %2160 = vmatpush1.msra.mxu0 %v438
    %2161 = vmatprep.subr.mxu0 %v443
    %2162 = vmatpush1.msra.mxu0 %v442
    %2163 = vmatprep.subr.mxu0 %v447
    %2164 = vmatpush1.msra.mxu0 %v446
    %2165 = vmatprep.subr.mxu0 %v451
    %2166 = vmatpush1.msra.mxu0 %v450
    %2167 = vmatprep.subr.mxu0 %v455
    %2168 = vmatpush1.msra.mxu0 %v454
    %2169 = vmatprep.subr.mxu0 %v459
    %2170 = vmatpush1.msra.mxu0 %v458
    %2171 = vmatprep.subr.mxu0 %v463
    %2172 = vmatpush1.msra.mxu0 %v462
    %2173 = vmatprep.subr.mxu0 %v467
    %2174 = vmatpush1.msra.mxu0 %v466
    %2175 = vmatprep.subr.mxu0 %v471
    %2176 = vmatpush1.msra.mxu0 %v470
    %2177 = vmatprep.subr.mxu0 %v475
    %2178 = vmatpush1.msra.mxu0 %v474
    %2179 = vmatprep.subr.mxu0 %v479
    %2180 = vmatpush1.msra.mxu0 %v478
    %2181 = vmatprep.subr.mxu0 %v483
    %2182 = vmatpush1.msra.mxu0 %v482
    %2183 = vmatprep.subr.mxu0 %v487
    %2184 = vmatpush1.msra.mxu0 %v486
    %2185 = vmatprep.subr.mxu0 %v491
    %2186 = vmatpush1.msra.mxu0 %v490
    %2187 = vmatprep.subr.mxu0 %v495
    %2188 = vmatpush1.msra.mxu0 %v494
    %2189 = vmatprep.subr.mxu0 %v499
    %2190 = vmatpush1.msra.mxu0 %v498
    %2191 = vmatprep.subr.mxu0 %v503
    %2192 = vmatpush1.msra.mxu0 %v502
    %2193 = vmatprep.subr.mxu0 %v507
    %2194 = vmatpush1.msra.mxu0 %v506
    %2195 = vmatprep.subr.mxu0 %v511
    %2196 = vmatpush1.msra.mxu0 %v510
    %2197 = vmatprep.subr.mxu0 %v515
    %2198 = vmatpush1.msra.mxu0 %v514
    %2199 = vmatprep.subr.mxu0 %v519
    %2200 = vmatpush1.msra.mxu0 %v518
    %2201 = vmatprep.subr.mxu0 %v523
    %2202 = vmatpush1.msra.mxu0 %v522
    %2203 = vmatprep.subr.mxu0 %v527
    %2204 = vmatpush1.msra.mxu0 %v526
    %2205 = vmatprep.subr.mxu0 %v531
    %2206 = vmatpush1.msra.mxu0 %v530
    %2207 = vmatprep.subr.mxu0 %v535
    %2208 = vmatpush1.msra.mxu0 %v534
    %2209 = vmatprep.subr.mxu0 %v539
    %2210 = vmatpush1.msra.mxu0 %v538
    %2211 = vmatprep.mubr.f32.mxu0 %v1905
    %2212 = vmatmul.mubr.f32.gmra.mrb[0].mxu0 %v2075
    %v2213 = vpop.f32.mrb[0].mxu0
    %v2214 = vadd.f32 %v723, %v2213
    %v2215 = vpop.f32.mrb[0].mxu0
    %v2216 = vadd.f32 %v727, %v2215
    %2217 = vdwg.mxu0
    %v2218 = vxor.u32 %v2143, 2147483648
    %v2219 = vxor.u32 %v2145, 2147483648
    %v2220 = vxor.u32 %v2214, 2147483648
    %v2221 = vmul.f32 %v2218, 1.442695
    %v2222 = vpow.pop %v2221
    %v2223 = vmul.f32 %v2219, 1.442695
    %v2224 = vpow.pop %v2223
    %v2225 = vmul.f32 %v2220, 1.442695
    %v2226 = vpow.pop %v2225
    %v2227 = vadd.f32 %v2222, 1.0
    %v2228 = vadd.f32 %v2224, 1.0
    %v2229 = vadd.f32 %v2226, 1.0
    %v2230 = vrcp.pop %v2227
    %v2231 = vmul.f32 1.0, %v2230
    %v2232 = vrcp.pop %v2228
    %v2233 = vmul.f32 1.0, %v2232
    %v2234 = vrcp.pop %v2229
    %v2235 = vmul.f32 1.0, %v2234
    %v2236 = vtanh.pop %v2216
    %v2237 = vmul.f32 %v2233, %v1903
    %v2238 = vmul.f32 %v2231, %v2236
    %v2239 = vadd.f32 %v2237, %v2238
    %v2240 = vtanh.pop %v2239
    %v2241 = vmul.f32 %v2235, %v2240
    %2242 = vmatprep.subr.mxu0 %v349
    %2243 = vmatpush1.msra.mxu0 %v348
    %2244 = vmatprep.subr.mxu0 %v353
    %2245 = vmatpush1.msra.mxu0 %v352
    %2246 = vmatprep.subr.mxu0 %v357
    %2247 = vmatpush1.msra.mxu0 %v356
    %2248 = vmatprep.subr.mxu0 %v361
    %2249 = vmatpush1.msra.mxu0 %v360
    %2250 = vmatprep.subr.mxu0 %v365
    %2251 = vmatpush1.msra.mxu0 %v364
    %2252 = vmatprep.subr.mxu0 %v369
    %2253 = vmatpush1.msra.mxu0 %v368
    %2254 = vmatprep.subr.mxu0 %v373
    %2255 = vmatpush1.msra.mxu0 %v372
    %2256 = vmatprep.subr.mxu0 %v377
    %2257 = vmatpush1.msra.mxu0 %v376
    %2258 = vmatprep.subr.mxu0 %v381
    %2259 = vmatpush1.msra.mxu0 %v380
    %2260 = vmatprep.subr.mxu0 %v385
    %2261 = vmatpush1.msra.mxu0 %v384
    %2262 = vmatprep.subr.mxu0 %v389
    %2263 = vmatpush1.msra.mxu0 %v388
    %2264 = vmatprep.subr.mxu0 %v393
    %2265 = vmatpush1.msra.mxu0 %v392
    %2266 = vmatprep.subr.mxu0 %v397
    %2267 = vmatpush1.msra.mxu0 %v396
    %2268 = vmatprep.subr.mxu0 %v401
    %2269 = vmatpush1.msra.mxu0 %v400
    %2270 = vmatprep.subr.mxu0 %v405
    %2271 = vmatpush1.msra.mxu0 %v404
    %2272 = vmatprep.subr.mxu0 %v409
    %2273 = vmatpush1.msra.mxu0 %v408
    %2274 = vmatprep.subr.mxu0 0.0
    %2275 = vmatpush1.msra.mxu0 0.0
    %2276 = vmatprep.subr.mxu0 0.0
    %2277 = vmatpush1.msra.mxu0 0.0
    %2278 = vmatprep.subr.mxu0 0.0
    %2279 = vmatpush1.msra.mxu0 0.0
    %2280 = vmatprep.subr.mxu0 0.0
    %2281 = vmatpush1.msra.mxu0 0.0
    %2282 = vmatprep.subr.mxu0 0.0
    %2283 = vmatpush1.msra.mxu0 0.0
    %2284 = vmatprep.subr.mxu0 0.0
    %2285 = vmatpush1.msra.mxu0 0.0
    %2286 = vmatprep.subr.mxu0 0.0
    %2287 = vmatpush1.msra.mxu0 0.0
    %2288 = vmatprep.subr.mxu0 0.0
    %2289 = vmatpush1.msra.mxu0 0.0
    %2290 = vmatprep.subr.mxu0 0.0
    %2291 = vmatpush1.msra.mxu0 0.0
    %2292 = vmatprep.subr.mxu0 0.0
    %2293 = vmatpush1.msra.mxu0 0.0
    %2294 = vmatprep.subr.mxu0 0.0
    %2295 = vmatpush1.msra.mxu0 0.0
    %2296 = vmatprep.subr.mxu0 0.0
    %2297 = vmatpush1.msra.mxu0 0.0
    %2298 = vmatprep.subr.mxu0 0.0
    %2299 = vmatpush1.msra.mxu0 0.0
    %2300 = vmatprep.subr.mxu0 0.0
    %2301 = vmatpush1.msra.mxu0 0.0
    %2302 = vmatprep.subr.mxu0 0.0
    %2303 = vmatpush1.msra.mxu0 0.0
    %2304 = vmatprep.subr.mxu0 0.0
    %2305 = vmatpush1.msra.mxu0 0.0
    %2306 = vmatprep.mubr.f32.mxu0 0.0
    %2307 = vmatmul.mubr.f32.gmra.mrb[0].mxu0 %v2075
    %v2308 = vpop.f32.mrb[0].mxu0
    %v2309 = vadd.f32 0.0, %v2308
    %v2310 = vpop.f32.mrb[0].mxu0
    %v2311 = vadd.f32 0.0, %v2310
    %2312 = vdwg.mxu0
    %2313 = vmatprep.subr.mxu0 %v351
    %2314 = vmatpush1.msra.mxu0 %v350
    %2315 = vmatprep.subr.mxu0 %v355
    %2316 = vmatpush1.msra.mxu0 %v354
    %2317 = vmatprep.subr.mxu0 %v359
    %2318 = vmatpush1.msra.mxu0 %v358
    %2319 = vmatprep.subr.mxu0 %v363
    %2320 = vmatpush1.msra.mxu0 %v362
    %2321 = vmatprep.subr.mxu0 %v367
    %2322 = vmatpush1.msra.mxu0 %v366
    %2323 = vmatprep.subr.mxu0 %v371
    %2324 = vmatpush1.msra.mxu0 %v370
    %2325 = vmatprep.subr.mxu0 %v375
    %2326 = vmatpush1.msra.mxu0 %v374
    %2327 = vmatprep.subr.mxu0 %v379
    %2328 = vmatpush1.msra.mxu0 %v378
    %2329 = vmatprep.subr.mxu0 %v383
    %2330 = vmatpush1.msra.mxu0 %v382
    %2331 = vmatprep.subr.mxu0 %v387
    %2332 = vmatpush1.msra.mxu0 %v386
    %2333 = vmatprep.subr.mxu0 %v391
    %2334 = vmatpush1.msra.mxu0 %v390
    %2335 = vmatprep.subr.mxu0 %v395
    %2336 = vmatpush1.msra.mxu0 %v394
    %2337 = vmatprep.subr.mxu0 %v399
    %2338 = vmatpush1.msra.mxu0 %v398
    %2339 = vmatprep.subr.mxu0 %v403
    %2340 = vmatpush1.msra.mxu0 %v402
    %2341 = vmatprep.subr.mxu0 %v407
    %2342 = vmatpush1.msra.mxu0 %v406
    %2343 = vmatprep.subr.mxu0 %v411
    %2344 = vmatpush1.msra.mxu0 %v410
    %2345 = vmatprep.subr.mxu0 0.0
    %2346 = vmatpush1.msra.mxu0 0.0
    %2347 = vmatprep.subr.mxu0 0.0
    %2348 = vmatpush1.msra.mxu0 0.0
    %2349 = vmatprep.subr.mxu0 0.0
    %2350 = vmatpush1.msra.mxu0 0.0
    %2351 = vmatprep.subr.mxu0 0.0
    %2352 = vmatpush1.msra.mxu0 0.0
    %2353 = vmatprep.subr.mxu0 0.0
    %2354 = vmatpush1.msra.mxu0 0.0
    %2355 = vmatprep.subr.mxu0 0.0
    %2356 = vmatpush1.msra.mxu0 0.0
    %2357 = vmatprep.subr.mxu0 0.0
    %2358 = vmatpush1.msra.mxu0 0.0
    %2359 = vmatprep.subr.mxu0 0.0
    %2360 = vmatpush1.msra.mxu0 0.0
    %2361 = vmatprep.subr.mxu0 0.0
    %2362 = vmatpush1.msra.mxu0 0.0
    %2363 = vmatprep.subr.mxu0 0.0
    %2364 = vmatpush1.msra.mxu0 0.0
    %2365 = vmatprep.subr.mxu0 0.0
    %2366 = vmatpush1.msra.mxu0 0.0
    %2367 = vmatprep.subr.mxu0 0.0
    %2368 = vmatpush1.msra.mxu0 0.0
    %2369 = vmatprep.subr.mxu0 0.0
    %2370 = vmatpush1.msra.mxu0 0.0
    %2371 = vmatprep.subr.mxu0 0.0
    %2372 = vmatpush1.msra.mxu0 0.0
    %2373 = vmatprep.subr.mxu0 0.0
    %2374 = vmatpush1.msra.mxu0 0.0
    %2375 = vmatprep.subr.mxu0 0.0
    %2376 = vmatpush1.msra.mxu0 0.0
    %2377 = vmatprep.mubr.f32.mxu0 0.0
    %2378 = vmatmul.mubr.f32.gmra.mrb[0].mxu0 %v2075
    %v2379 = vpop.f32.mrb[0].mxu0
    %v2380 = vadd.f32 0.0, %v2379
    %v2381 = vpop.f32.mrb[0].mxu0
    %v2382 = vadd.f32 0.0, %v2381
    %2383 = vdwg.mxu0
    %v2384 = vadd.f32 %v219, %v2309
    %v2385 = vadd.f32 %v221, %v2311
    %v2386 = vadd.f32 %v332, %v2380
    %v2387 = vadd.f32 %v334, %v2382
    %v2388 = vxor.u32 %v2384, 2147483648
    %v2389 = vxor.u32 %v2385, 2147483648
    %v2390 = vxor.u32 %v2386, 2147483648
    %v2391 = vmul.f32 %v2388, 1.442695
    %v2392 = vpow.pop %v2391
    %v2393 = vmul.f32 %v2389, 1.442695
    %v2394 = vpow.pop %v2393
    %v2395 = vmul.f32 %v2390, 1.442695
    %v2396 = vpow.pop %v2395
    %v2397 = vadd.f32 %v2392, 1.0
    %v2398 = vadd.f32 %v2394, 1.0
    %v2399 = vadd.f32 %v2396, 1.0
    %v2400 = vrcp.pop %v2397
    %v2401 = vmul.f32 1.0, %v2400
    %v2402 = vrcp.pop %v2398
    %v2403 = vmul.f32 1.0, %v2402
    %v2404 = vrcp.pop %v2399
    %v2405 = vmul.f32 1.0, %v2404
    %v2406 = vtanh.pop %v2387
    %v2407 = vmul.f32 %v2403, %v2073
    %v2408 = vmul.f32 %v2401, %v2406
    %v2409 = vadd.f32 %v2407, %v2408
    %v2410 = vtanh.pop %v2409
    %v2411 = vmul.f32 %v2405, %v2410
    %2412 = vmatprep.subr.mxu0 %v413
    %2413 = vmatpush1.msra.mxu0 %v412
    %2414 = vmatprep.subr.mxu0 %v417
    %2415 = vmatpush1.msra.mxu0 %v416
    %2416 = vmatprep.subr.mxu0 %v421
    %2417 = vmatpush1.msra.mxu0 %v420
    %2418 = vmatprep.subr.mxu0 %v425
    %2419 = vmatpush1.msra.mxu0 %v424
    %2420 = vmatprep.subr.mxu0 %v429
    %2421 = vmatpush1.msra.mxu0 %v428
    %2422 = vmatprep.subr.mxu0 %v433
    %2423 = vmatpush1.msra.mxu0 %v432
    %2424 = vmatprep.subr.mxu0 %v437
    %2425 = vmatpush1.msra.mxu0 %v436
    %2426 = vmatprep.subr.mxu0 %v441
    %2427 = vmatpush1.msra.mxu0 %v440
    %2428 = vmatprep.subr.mxu0 %v445
    %2429 = vmatpush1.msra.mxu0 %v444
    %2430 = vmatprep.subr.mxu0 %v449
    %2431 = vmatpush1.msra.mxu0 %v448
    %2432 = vmatprep.subr.mxu0 %v453
    %2433 = vmatpush1.msra.mxu0 %v452
    %2434 = vmatprep.subr.mxu0 %v457
    %2435 = vmatpush1.msra.mxu0 %v456
    %2436 = vmatprep.subr.mxu0 %v461
    %2437 = vmatpush1.msra.mxu0 %v460
    %2438 = vmatprep.subr.mxu0 %v465
    %2439 = vmatpush1.msra.mxu0 %v464
    %2440 = vmatprep.subr.mxu0 %v469
    %2441 = vmatpush1.msra.mxu0 %v468
    %2442 = vmatprep.subr.mxu0 %v473
    %2443 = vmatpush1.msra.mxu0 %v472
    %2444 = vmatprep.subr.mxu0 %v477
    %2445 = vmatpush1.msra.mxu0 %v476
    %2446 = vmatprep.subr.mxu0 %v481
    %2447 = vmatpush1.msra.mxu0 %v480
    %2448 = vmatprep.subr.mxu0 %v485
    %2449 = vmatpush1.msra.mxu0 %v484
    %2450 = vmatprep.subr.mxu0 %v489
    %2451 = vmatpush1.msra.mxu0 %v488
    %2452 = vmatprep.subr.mxu0 %v493
    %2453 = vmatpush1.msra.mxu0 %v492
    %2454 = vmatprep.subr.mxu0 %v497
    %2455 = vmatpush1.msra.mxu0 %v496
    %2456 = vmatprep.subr.mxu0 %v501
    %2457 = vmatpush1.msra.mxu0 %v500
    %2458 = vmatprep.subr.mxu0 %v505
    %2459 = vmatpush1.msra.mxu0 %v504
    %2460 = vmatprep.subr.mxu0 %v509
    %2461 = vmatpush1.msra.mxu0 %v508
    %2462 = vmatprep.subr.mxu0 %v513
    %2463 = vmatpush1.msra.mxu0 %v512
    %2464 = vmatprep.subr.mxu0 %v517
    %2465 = vmatpush1.msra.mxu0 %v516
    %2466 = vmatprep.subr.mxu0 %v521
    %2467 = vmatpush1.msra.mxu0 %v520
    %2468 = vmatprep.subr.mxu0 %v525
    %2469 = vmatpush1.msra.mxu0 %v524
    %2470 = vmatprep.subr.mxu0 %v529
    %2471 = vmatpush1.msra.mxu0 %v528
    %2472 = vmatprep.subr.mxu0 %v533
    %2473 = vmatpush1.msra.mxu0 %v532
    %2474 = vmatprep.subr.mxu0 %v537
    %2475 = vmatpush1.msra.mxu0 %v536
    %2476 = vmatprep.mubr.f32.mxu0 %v2241
    %2477 = vmatmul.mubr.f32.gmra.mrb[0].mxu0 %v2411
    %v2478 = vpop.f32.mrb[0].mxu0
    %v2479 = vadd.f32 %v715, %v2478
    %v2480 = vpop.f32.mrb[0].mxu0
    %v2481 = vadd.f32 %v719, %v2480
    %2482 = vdwg.mxu0
    %2483 = vmatprep.subr.mxu0 %v415
    %2484 = vmatpush1.msra.mxu0 %v414
    %2485 = vmatprep.subr.mxu0 %v419
    %2486 = vmatpush1.msra.mxu0 %v418
    %2487 = vmatprep.subr.mxu0 %v423
    %2488 = vmatpush1.msra.mxu0 %v422
    %2489 = vmatprep.subr.mxu0 %v427
    %2490 = vmatpush1.msra.mxu0 %v426
    %2491 = vmatprep.subr.mxu0 %v431
    %2492 = vmatpush1.msra.mxu0 %v430
    %2493 = vmatprep.subr.mxu0 %v435
    %2494 = vmatpush1.msra.mxu0 %v434
    %2495 = vmatprep.subr.mxu0 %v439
    %2496 = vmatpush1.msra.mxu0 %v438
    %2497 = vmatprep.subr.mxu0 %v443
    %2498 = vmatpush1.msra.mxu0 %v442
    %2499 = vmatprep.subr.mxu0 %v447
    %2500 = vmatpush1.msra.mxu0 %v446
    %2501 = vmatprep.subr.mxu0 %v451
    %2502 = vmatpush1.msra.mxu0 %v450
    %2503 = vmatprep.subr.mxu0 %v455
    %2504 = vmatpush1.msra.mxu0 %v454
    %2505 = vmatprep.subr.mxu0 %v459
    %2506 = vmatpush1.msra.mxu0 %v458
    %2507 = vmatprep.subr.mxu0 %v463
    %2508 = vmatpush1.msra.mxu0 %v462
    %2509 = vmatprep.subr.mxu0 %v467
    %2510 = vmatpush1.msra.mxu0 %v466
    %2511 = vmatprep.subr.mxu0 %v471
    %2512 = vmatpush1.msra.mxu0 %v470
    %2513 = vmatprep.subr.mxu0 %v475
    %2514 = vmatpush1.msra.mxu0 %v474
    %2515 = vmatprep.subr.mxu0 %v479
    %2516 = vmatpush1.msra.mxu0 %v478
    %2517 = vmatprep.subr.mxu0 %v483
    %2518 = vmatpush1.msra.mxu0 %v482
    %2519 = vmatprep.subr.mxu0 %v487
    %2520 = vmatpush1.msra.mxu0 %v486
    %2521 = vmatprep.subr.mxu0 %v491
    %2522 = vmatpush1.msra.mxu0 %v490
    %2523 = vmatprep.subr.mxu0 %v495
    %2524 = vmatpush1.msra.mxu0 %v494
    %2525 = vmatprep.subr.mxu0 %v499
    %2526 = vmatpush1.msra.mxu0 %v498
    %2527 = vmatprep.subr.mxu0 %v503
    %2528 = vmatpush1.msra.mxu0 %v502
    %2529 = vmatprep.subr.mxu0 %v507
    %2530 = vmatpush1.msra.mxu0 %v506
    %2531 = vmatprep.subr.mxu0 %v511
    %2532 = vmatpush1.msra.mxu0 %v510
    %2533 = vmatprep.subr.mxu0 %v515
    %2534 = vmatpush1.msra.mxu0 %v514
    %2535 = vmatprep.subr.mxu0 %v519
    %2536 = vmatpush1.msra.mxu0 %v518
    %2537 = vmatprep.subr.mxu0 %v523
    %2538 = vmatpush1.msra.mxu0 %v522
    %2539 = vmatprep.subr.mxu0 %v527
    %2540 = vmatpush1.msra.mxu0 %v526
    %2541 = vmatprep.subr.mxu0 %v531
    %2542 = vmatpush1.msra.mxu0 %v530
    %2543 = vmatprep.subr.mxu0 %v535
    %2544 = vmatpush1.msra.mxu0 %v534
    %2545 = vmatprep.subr.mxu0 %v539
    %2546 = vmatpush1.msra.mxu0 %v538
    %2547 = vmatprep.mubr.f32.mxu0 %v2241
    %2548 = vmatmul.mubr.f32.gmra.mrb[0].mxu0 %v2411
    %v2549 = vpop.f32.mrb[0].mxu0
    %v2550 = vadd.f32 %v723, %v2549
    %v2551 = vpop.f32.mrb[0].mxu0
    %v2552 = vadd.f32 %v727, %v2551
    %2553 = vdwg.mxu0
    %v2554 = vxor.u32 %v2479, 2147483648
    %v2555 = vxor.u32 %v2481, 2147483648
    %v2556 = vxor.u32 %v2550, 2147483648
    %v2557 = vmul.f32 %v2554, 1.442695
    %v2558 = vpow.pop %v2557
    %v2559 = vmul.f32 %v2555, 1.442695
    %v2560 = vpow.pop %v2559
    %v2561 = vmul.f32 %v2556, 1.442695
    %v2562 = vpow.pop %v2561
    %v2563 = vadd.f32 %v2558, 1.0
    %v2564 = vadd.f32 %v2560, 1.0
    %v2565 = vadd.f32 %v2562, 1.0
    %v2566 = vrcp.pop %v2563
    %v2567 = vmul.f32 1.0, %v2566
    %v2568 = vrcp.pop %v2564
    %v2569 = vmul.f32 1.0, %v2568
    %v2570 = vrcp.pop %v2565
    %v2571 = vmul.f32 1.0, %v2570
    %v2572 = vtanh.pop %v2552
    %v2573 = vmul.f32 %v2569, %v2239
    %v2574 = vmul.f32 %v2567, %v2572
    %v2575 = vadd.f32 %v2573, %v2574
    %v2576 = vtanh.pop %v2575
    %v2577 = vmul.f32 %v2571, %v2576
    %2578 = vmatprep.subr.mxu0 %v349
    %2579 = vmatpush1.msra.mxu0 %v348
    %2580 = vmatprep.subr.mxu0 %v353
    %2581 = vmatpush1.msra.mxu0 %v352
    %2582 = vmatprep.subr.mxu0 %v357
    %2583 = vmatpush1.msra.mxu0 %v356
    %2584 = vmatprep.subr.mxu0 %v361
    %2585 = vmatpush1.msra.mxu0 %v360
    %2586 = vmatprep.subr.mxu0 %v365
    %2587 = vmatpush1.msra.mxu0 %v364
    %2588 = vmatprep.subr.mxu0 %v369
    %2589 = vmatpush1.msra.mxu0 %v368
    %2590 = vmatprep.subr.mxu0 %v373
    %2591 = vmatpush1.msra.mxu0 %v372
    %2592 = vmatprep.subr.mxu0 %v377
    %2593 = vmatpush1.msra.mxu0 %v376
    %2594 = vmatprep.subr.mxu0 %v381
    %2595 = vmatpush1.msra.mxu0 %v380
    %2596 = vmatprep.subr.mxu0 %v385
    %2597 = vmatpush1.msra.mxu0 %v384
    %2598 = vmatprep.subr.mxu0 %v389
    %2599 = vmatpush1.msra.mxu0 %v388
    %2600 = vmatprep.subr.mxu0 %v393
    %2601 = vmatpush1.msra.mxu0 %v392
    %2602 = vmatprep.subr.mxu0 %v397
    %2603 = vmatpush1.msra.mxu0 %v396
    %2604 = vmatprep.subr.mxu0 %v401
    %2605 = vmatpush1.msra.mxu0 %v400
    %2606 = vmatprep.subr.mxu0 %v405
    %2607 = vmatpush1.msra.mxu0 %v404
    %2608 = vmatprep.subr.mxu0 %v409
    %2609 = vmatpush1.msra.mxu0 %v408
    %2610 = vmatprep.subr.mxu0 0.0
    %2611 = vmatpush1.msra.mxu0 0.0
    %2612 = vmatprep.subr.mxu0 0.0
    %2613 = vmatpush1.msra.mxu0 0.0
    %2614 = vmatprep.subr.mxu0 0.0
    %2615 = vmatpush1.msra.mxu0 0.0
    %2616 = vmatprep.subr.mxu0 0.0
    %2617 = vmatpush1.msra.mxu0 0.0
    %2618 = vmatprep.subr.mxu0 0.0
    %2619 = vmatpush1.msra.mxu0 0.0
    %2620 = vmatprep.subr.mxu0 0.0
    %2621 = vmatpush1.msra.mxu0 0.0
    %2622 = vmatprep.subr.mxu0 0.0
    %2623 = vmatpush1.msra.mxu0 0.0
    %2624 = vmatprep.subr.mxu0 0.0
    %2625 = vmatpush1.msra.mxu0 0.0
    %2626 = vmatprep.subr.mxu0 0.0
    %2627 = vmatpush1.msra.mxu0 0.0
    %2628 = vmatprep.subr.mxu0 0.0
    %2629 = vmatpush1.msra.mxu0 0.0
    %2630 = vmatprep.subr.mxu0 0.0
    %2631 = vmatpush1.msra.mxu0 0.0
    %2632 = vmatprep.subr.mxu0 0.0
    %2633 = vmatpush1.msra.mxu0 0.0
    %2634 = vmatprep.subr.mxu0 0.0
    %2635 = vmatpush1.msra.mxu0 0.0
    %2636 = vmatprep.subr.mxu0 0.0
    %2637 = vmatpush1.msra.mxu0 0.0
    %2638 = vmatprep.subr.mxu0 0.0
    %2639 = vmatpush1.msra.mxu0 0.0
    %2640 = vmatprep.subr.mxu0 0.0
    %2641 = vmatpush1.msra.mxu0 0.0
    %2642 = vmatprep.mubr.f32.mxu0 0.0
    %2643 = vmatmul.mubr.f32.gmra.mrb[0].mxu0 %v2411
    %v2644 = vpop.f32.mrb[0].mxu0
    %v2645 = vadd.f32 0.0, %v2644
    %v2646 = vpop.f32.mrb[0].mxu0
    %v2647 = vadd.f32 0.0, %v2646
    %2648 = vdwg.mxu0
    %2649 = vmatprep.subr.mxu0 %v351
    %2650 = vmatpush1.msra.mxu0 %v350
    %2651 = vmatprep.subr.mxu0 %v355
    %2652 = vmatpush1.msra.mxu0 %v354
    %2653 = vmatprep.subr.mxu0 %v359
    %2654 = vmatpush1.msra.mxu0 %v358
    %2655 = vmatprep.subr.mxu0 %v363
    %2656 = vmatpush1.msra.mxu0 %v362
    %2657 = vmatprep.subr.mxu0 %v367
    %2658 = vmatpush1.msra.mxu0 %v366
    %2659 = vmatprep.subr.mxu0 %v371
    %2660 = vmatpush1.msra.mxu0 %v370
    %2661 = vmatprep.subr.mxu0 %v375
    %2662 = vmatpush1.msra.mxu0 %v374
    %2663 = vmatprep.subr.mxu0 %v379
    %2664 = vmatpush1.msra.mxu0 %v378
    %2665 = vmatprep.subr.mxu0 %v383
    %2666 = vmatpush1.msra.mxu0 %v382
    %2667 = vmatprep.subr.mxu0 %v387
    %2668 = vmatpush1.msra.mxu0 %v386
    %2669 = vmatprep.subr.mxu0 %v391
    %2670 = vmatpush1.msra.mxu0 %v390
    %2671 = vmatprep.subr.mxu0 %v395
    %2672 = vmatpush1.msra.mxu0 %v394
    %2673 = vmatprep.subr.mxu0 %v399
    %2674 = vmatpush1.msra.mxu0 %v398
    %2675 = vmatprep.subr.mxu0 %v403
    %2676 = vmatpush1.msra.mxu0 %v402
    %2677 = vmatprep.subr.mxu0 %v407
    %2678 = vmatpush1.msra.mxu0 %v406
    %2679 = vmatprep.subr.mxu0 %v411
    %2680 = vmatpush1.msra.mxu0 %v410
    %2681 = vmatprep.subr.mxu0 0.0
    %2682 = vmatpush1.msra.mxu0 0.0
    %2683 = vmatprep.subr.mxu0 0.0
    %2684 = vmatpush1.msra.mxu0 0.0
    %2685 = vmatprep.subr.mxu0 0.0
    %2686 = vmatpush1.msra.mxu0 0.0
    %2687 = vmatprep.subr.mxu0 0.0
    %2688 = vmatpush1.msra.mxu0 0.0
    %2689 = vmatprep.subr.mxu0 0.0
    %2690 = vmatpush1.msra.mxu0 0.0
    %2691 = vmatprep.subr.mxu0 0.0
    %2692 = vmatpush1.msra.mxu0 0.0
    %2693 = vmatprep.subr.mxu0 0.0
    %2694 = vmatpush1.msra.mxu0 0.0
    %2695 = vmatprep.subr.mxu0 0.0
    %2696 = vmatpush1.msra.mxu0 0.0
    %2697 = vmatprep.subr.mxu0 0.0
    %2698 = vmatpush1.msra.mxu0 0.0
    %2699 = vmatprep.subr.mxu0 0.0
    %2700 = vmatpush1.msra.mxu0 0.0
    %2701 = vmatprep.subr.mxu0 0.0
    %2702 = vmatpush1.msra.mxu0 0.0
    %2703 = vmatprep.subr.mxu0 0.0
    %2704 = vmatpush1.msra.mxu0 0.0
    %2705 = vmatprep.subr.mxu0 0.0
    %2706 = vmatpush1.msra.mxu0 0.0
    %2707 = vmatprep.subr.mxu0 0.0
    %2708 = vmatpush1.msra.mxu0 0.0
    %2709 = vmatprep.subr.mxu0 0.0
    %2710 = vmatpush1.msra.mxu0 0.0
    %2711 = vmatprep.subr.mxu0 0.0
    %2712 = vmatpush1.msra.mxu0 0.0
    %2713 = vmatprep.mubr.f32.mxu0 0.0
    %2714 = vmatmul.mubr.f32.gmra.mrb[0].mxu0 %v2411
    %v2715 = vpop.f32.mrb[0].mxu0
    %v2716 = vadd.f32 0.0, %v2715
    %v2717 = vpop.f32.mrb[0].mxu0
    %v2718 = vadd.f32 0.0, %v2717
    %2719 = vdwg.mxu0
    %v2720 = vadd.f32 %v225, %v2645
    %v2721 = vadd.f32 %v227, %v2647
    %v2722 = vadd.f32 %v338, %v2716
    %v2723 = vadd.f32 %v340, %v2718
    %v2724 = vxor.u32 %v2720, 2147483648
    %v2725 = vxor.u32 %v2721, 2147483648
    %v2726 = vxor.u32 %v2722, 2147483648
    %v2727 = vmul.f32 %v2724, 1.442695
    %v2728 = vpow.pop %v2727
    %v2729 = vmul.f32 %v2725, 1.442695
    %v2730 = vpow.pop %v2729
    %v2731 = vmul.f32 %v2726, 1.442695
    %v2732 = vpow.pop %v2731
    %v2733 = vadd.f32 %v2728, 1.0
    %v2734 = vadd.f32 %v2730, 1.0
    %v2735 = vadd.f32 %v2732, 1.0
    %v2736 = vrcp.pop %v2733
    %v2737 = vmul.f32 1.0, %v2736
    %v2738 = vrcp.pop %v2734
    %v2739 = vmul.f32 1.0, %v2738
    %v2740 = vrcp.pop %v2735
    %v2741 = vmul.f32 1.0, %v2740
    %v2742 = vtanh.pop %v2723
    %v2743 = vmul.f32 %v2739, %v2409
    %v2744 = vmul.f32 %v2737, %v2742
    %v2745 = vadd.f32 %v2743, %v2744
    %v2746 = vtanh.pop %v2745
    %v2747 = vmul.f32 %v2741, %v2746
    %2748 = vmatprep.subr.mxu0 %v413
    %2749 = vmatpush1.msra.mxu0 %v412
    %2750 = vmatprep.subr.mxu0 %v417
    %2751 = vmatpush1.msra.mxu0 %v416
    %2752 = vmatprep.subr.mxu0 %v421
    %2753 = vmatpush1.msra.mxu0 %v420
    %2754 = vmatprep.subr.mxu0 %v425
    %2755 = vmatpush1.msra.mxu0 %v424
    %2756 = vmatprep.subr.mxu0 %v429
    %2757 = vmatpush1.msra.mxu0 %v428
    %2758 = vmatprep.subr.mxu0 %v433
    %2759 = vmatpush1.msra.mxu0 %v432
    %2760 = vmatprep.subr.mxu0 %v437
    %2761 = vmatpush1.msra.mxu0 %v436
    %2762 = vmatprep.subr.mxu0 %v441
    %2763 = vmatpush1.msra.mxu0 %v440
    %2764 = vmatprep.subr.mxu0 %v445
    %2765 = vmatpush1.msra.mxu0 %v444
    %2766 = vmatprep.subr.mxu0 %v449
    %2767 = vmatpush1.msra.mxu0 %v448
    %2768 = vmatprep.subr.mxu0 %v453
    %2769 = vmatpush1.msra.mxu0 %v452
    %2770 = vmatprep.subr.mxu0 %v457
    %2771 = vmatpush1.msra.mxu0 %v456
    %2772 = vmatprep.subr.mxu0 %v461
    %2773 = vmatpush1.msra.mxu0 %v460
    %2774 = vmatprep.subr.mxu0 %v465
    %2775 = vmatpush1.msra.mxu0 %v464
    %2776 = vmatprep.subr.mxu0 %v469
    %2777 = vmatpush1.msra.mxu0 %v468
    %2778 = vmatprep.subr.mxu0 %v473
    %2779 = vmatpush1.msra.mxu0 %v472
    %2780 = vmatprep.subr.mxu0 %v477
    %2781 = vmatpush1.msra.mxu0 %v476
    %2782 = vmatprep.subr.mxu0 %v481
    %2783 = vmatpush1.msra.mxu0 %v480
    %2784 = vmatprep.subr.mxu0 %v485
    %2785 = vmatpush1.msra.mxu0 %v484
    %2786 = vmatprep.subr.mxu0 %v489
    %2787 = vmatpush1.msra.mxu0 %v488
    %2788 = vmatprep.subr.mxu0 %v493
    %2789 = vmatpush1.msra.mxu0 %v492
    %2790 = vmatprep.subr.mxu0 %v497
    %2791 = vmatpush1.msra.mxu0 %v496
    %2792 = vmatprep.subr.mxu0 %v501
    %2793 = vmatpush1.msra.mxu0 %v500
    %2794 = vmatprep.subr.mxu0 %v505
    %2795 = vmatpush1.msra.mxu0 %v504
    %2796 = vmatprep.subr.mxu0 %v509
    %2797 = vmatpush1.msra.mxu0 %v508
    %2798 = vmatprep.subr.mxu0 %v513
    %2799 = vmatpush1.msra.mxu0 %v512
    %2800 = vmatprep.subr.mxu0 %v517
    %2801 = vmatpush1.msra.mxu0 %v516
    %2802 = vmatprep.subr.mxu0 %v521
    %2803 = vmatpush1.msra.mxu0 %v520
    %2804 = vmatprep.subr.mxu0 %v525
    %2805 = vmatpush1.msra.mxu0 %v524
    %2806 = vmatprep.subr.mxu0 %v529
    %2807 = vmatpush1.msra.mxu0 %v528
    %2808 = vmatprep.subr.mxu0 %v533
    %2809 = vmatpush1.msra.mxu0 %v532
    %2810 = vmatprep.subr.mxu0 %v537
    %2811 = vmatpush1.msra.mxu0 %v536
    %2812 = vmatprep.mubr.f32.mxu0 %v2577
    %2813 = vmatmul.mubr.f32.gmra.mrb[0].mxu0 %v2747
    %v2814 = vpop.f32.mrb[0].mxu0
    %v2815 = vadd.f32 %v715, %v2814
    %v2816 = vpop.f32.mrb[0].mxu0
    %v2817 = vadd.f32 %v719, %v2816
    %2818 = vdwg.mxu0
    %2819 = vmatprep.subr.mxu0 %v415
    %2820 = vmatpush1.msra.mxu0 %v414
    %2821 = vmatprep.subr.mxu0 %v419
    %2822 = vmatpush1.msra.mxu0 %v418
    %2823 = vmatprep.subr.mxu0 %v423
    %2824 = vmatpush1.msra.mxu0 %v422
    %2825 = vmatprep.subr.mxu0 %v427
    %2826 = vmatpush1.msra.mxu0 %v426
    %2827 = vmatprep.subr.mxu0 %v431
    %2828 = vmatpush1.msra.mxu0 %v430
    %2829 = vmatprep.subr.mxu0 %v435
    %2830 = vmatpush1.msra.mxu0 %v434
    %2831 = vmatprep.subr.mxu0 %v439
    %2832 = vmatpush1.msra.mxu0 %v438
    %2833 = vmatprep.subr.mxu0 %v443
    %2834 = vmatpush1.msra.mxu0 %v442
    %2835 = vmatprep.subr.mxu0 %v447
    %2836 = vmatpush1.msra.mxu0 %v446
    %2837 = vmatprep.subr.mxu0 %v451
    %2838 = vmatpush1.msra.mxu0 %v450
    %2839 = vmatprep.subr.mxu0 %v455
    %2840 = vmatpush1.msra.mxu0 %v454
    %2841 = vmatprep.subr.mxu0 %v459
    %2842 = vmatpush1.msra.mxu0 %v458
    %2843 = vmatprep.subr.mxu0 %v463
    %2844 = vmatpush1.msra.mxu0 %v462
    %2845 = vmatprep.subr.mxu0 %v467
    %2846 = vmatpush1.msra.mxu0 %v466
    %2847 = vmatprep.subr.mxu0 %v471
    %2848 = vmatpush1.msra.mxu0 %v470
    %2849 = vmatprep.subr.mxu0 %v475
    %2850 = vmatpush1.msra.mxu0 %v474
    %2851 = vmatprep.subr.mxu0 %v479
    %2852 = vmatpush1.msra.mxu0 %v478
    %2853 = vmatprep.subr.mxu0 %v483
    %2854 = vmatpush1.msra.mxu0 %v482
    %2855 = vmatprep.subr.mxu0 %v487
    %2856 = vmatpush1.msra.mxu0 %v486
    %2857 = vmatprep.subr.mxu0 %v491
    %2858 = vmatpush1.msra.mxu0 %v490
    %2859 = vmatprep.subr.mxu0 %v495
    %2860 = vmatpush1.msra.mxu0 %v494
    %2861 = vmatprep.subr.mxu0 %v499
    %2862 = vmatpush1.msra.mxu0 %v498
    %2863 = vmatprep.subr.mxu0 %v503
    %2864 = vmatpush1.msra.mxu0 %v502
    %2865 = vmatprep.subr.mxu0 %v507
    %2866 = vmatpush1.msra.mxu0 %v506
    %2867 = vmatprep.subr.mxu0 %v511
    %2868 = vmatpush1.msra.mxu0 %v510
    %2869 = vmatprep.subr.mxu0 %v515
    %2870 = vmatpush1.msra.mxu0 %v514
    %2871 = vmatprep.subr.mxu0 %v519
    %2872 = vmatpush1.msra.mxu0 %v518
    %2873 = vmatprep.subr.mxu0 %v523
    %2874 = vmatpush1.msra.mxu0 %v522
    %2875 = vmatprep.subr.mxu0 %v527
    %2876 = vmatpush1.msra.mxu0 %v526
    %2877 = vmatprep.subr.mxu0 %v531
    %2878 = vmatpush1.msra.mxu0 %v530
    %2879 = vmatprep.subr.mxu0 %v535
    %2880 = vmatpush1.msra.mxu0 %v534
    %2881 = vmatprep.subr.mxu0 %v539
    %2882 = vmatpush1.msra.mxu0 %v538
    %2883 = vmatprep.mubr.f32.mxu0 %v2577
    %2884 = vmatmul.mubr.f32.gmra.mrb[0].mxu0 %v2747
    %v2885 = vpop.f32.mrb[0].mxu0
    %v2886 = vadd.f32 %v723, %v2885
    %v2887 = vpop.f32.mrb[0].mxu0
    %v2888 = vadd.f32 %v727, %v2887
    %2889 = vdwg.mxu0
    %v2890 = vxor.u32 %v2815, 2147483648
    %v2891 = vxor.u32 %v2817, 2147483648
    %v2892 = vxor.u32 %v2886, 2147483648
    %v2893 = vmul.f32 %v2890, 1.442695
    %v2894 = vpow.pop %v2893
    %v2895 = vmul.f32 %v2891, 1.442695
    %v2896 = vpow.pop %v2895
    %v2897 = vmul.f32 %v2892, 1.442695
    %v2898 = vpow.pop %v2897
    %v2899 = vadd.f32 %v2894, 1.0
    %v2900 = vadd.f32 %v2896, 1.0
    %v2901 = vadd.f32 %v2898, 1.0
    %v2902 = vrcp.pop %v2899
    %v2903 = vmul.f32 1.0, %v2902
    %v2904 = vrcp.pop %v2900
    %v2905 = vmul.f32 1.0, %v2904
    %v2906 = vrcp.pop %v2901
    %v2907 = vmul.f32 1.0, %v2906
    %v2908 = vtanh.pop %v2888
    %v2909 = vmul.f32 %v2905, %v2575
    %v2910 = vmul.f32 %v2903, %v2908
    %v2911 = vadd.f32 %v2909, %v2910
    %v2912 = vtanh.pop %v2911
    %v2913 = vmul.f32 %v2907, %v2912
    %2914 = vmatprep.subr.mxu0 %v349
    %2915 = vmatpush1.msra.mxu0 %v348
    %2916 = vmatprep.subr.mxu0 %v353
    %2917 = vmatpush1.msra.mxu0 %v352
    %2918 = vmatprep.subr.mxu0 %v357
    %2919 = vmatpush1.msra.mxu0 %v356
    %2920 = vmatprep.subr.mxu0 %v361
    %2921 = vmatpush1.msra.mxu0 %v360
    %2922 = vmatprep.subr.mxu0 %v365
    %2923 = vmatpush1.msra.mxu0 %v364
    %2924 = vmatprep.subr.mxu0 %v369
    %2925 = vmatpush1.msra.mxu0 %v368
    %2926 = vmatprep.subr.mxu0 %v373
    %2927 = vmatpush1.msra.mxu0 %v372
    %2928 = vmatprep.subr.mxu0 %v377
    %2929 = vmatpush1.msra.mxu0 %v376
    %2930 = vmatprep.subr.mxu0 %v381
    %2931 = vmatpush1.msra.mxu0 %v380
    %2932 = vmatprep.subr.mxu0 %v385
    %2933 = vmatpush1.msra.mxu0 %v384
    %2934 = vmatprep.subr.mxu0 %v389
    %2935 = vmatpush1.msra.mxu0 %v388
    %2936 = vmatprep.subr.mxu0 %v393
    %2937 = vmatpush1.msra.mxu0 %v392
    %2938 = vmatprep.subr.mxu0 %v397
    %2939 = vmatpush1.msra.mxu0 %v396
    %2940 = vmatprep.subr.mxu0 %v401
    %2941 = vmatpush1.msra.mxu0 %v400
    %2942 = vmatprep.subr.mxu0 %v405
    %2943 = vmatpush1.msra.mxu0 %v404
    %2944 = vmatprep.subr.mxu0 %v409
    %2945 = vmatpush1.msra.mxu0 %v408
    %2946 = vmatprep.subr.mxu0 0.0
    %2947 = vmatpush1.msra.mxu0 0.0
    %2948 = vmatprep.subr.mxu0 0.0
    %2949 = vmatpush1.msra.mxu0 0.0
    %2950 = vmatprep.subr.mxu0 0.0
    %2951 = vmatpush1.msra.mxu0 0.0
    %2952 = vmatprep.subr.mxu0 0.0
    %2953 = vmatpush1.msra.mxu0 0.0
    %2954 = vmatprep.subr.mxu0 0.0
    %2955 = vmatpush1.msra.mxu0 0.0
    %2956 = vmatprep.subr.mxu0 0.0
    %2957 = vmatpush1.msra.mxu0 0.0
    %2958 = vmatprep.subr.mxu0 0.0
    %2959 = vmatpush1.msra.mxu0 0.0
    %2960 = vmatprep.subr.mxu0 0.0
    %2961 = vmatpush1.msra.mxu0 0.0
    %2962 = vmatprep.subr.mxu0 0.0
    %2963 = vmatpush1.msra.mxu0 0.0
    %2964 = vmatprep.subr.mxu0 0.0
    %2965 = vmatpush1.msra.mxu0 0.0
    %2966 = vmatprep.subr.mxu0 0.0
    %2967 = vmatpush1.msra.mxu0 0.0
    %2968 = vmatprep.subr.mxu0 0.0
    %2969 = vmatpush1.msra.mxu0 0.0
    %2970 = vmatprep.subr.mxu0 0.0
    %2971 = vmatpush1.msra.mxu0 0.0
    %2972 = vmatprep.subr.mxu0 0.0
    %2973 = vmatpush1.msra.mxu0 0.0
    %2974 = vmatprep.subr.mxu0 0.0
    %2975 = vmatpush1.msra.mxu0 0.0
    %2976 = vmatprep.subr.mxu0 0.0
    %2977 = vmatpush1.msra.mxu0 0.0
    %2978 = vmatprep.mubr.f32.mxu0 0.0
    %2979 = vmatmul.mubr.f32.gmra.mrb[0].mxu0 %v2747
    %v2980 = vpop.f32.mrb[0].mxu0
    %v2981 = vadd.f32 0.0, %v2980
    %v2982 = vpop.f32.mrb[0].mxu0
    %v2983 = vadd.f32 0.0, %v2982
    %2984 = vdwg.mxu0
    %2985 = vmatprep.subr.mxu0 %v351
    %2986 = vmatpush1.msra.mxu0 %v350
    %2987 = vmatprep.subr.mxu0 %v355
    %2988 = vmatpush1.msra.mxu0 %v354
    %2989 = vmatprep.subr.mxu0 %v359
    %2990 = vmatpush1.msra.mxu0 %v358
    %2991 = vmatprep.subr.mxu0 %v363
    %2992 = vmatpush1.msra.mxu0 %v362
    %2993 = vmatprep.subr.mxu0 %v367
    %2994 = vmatpush1.msra.mxu0 %v366
    %2995 = vmatprep.subr.mxu0 %v371
    %2996 = vmatpush1.msra.mxu0 %v370
    %2997 = vmatprep.subr.mxu0 %v375
    %2998 = vmatpush1.msra.mxu0 %v374
    %2999 = vmatprep.subr.mxu0 %v379
    %3000 = vmatpush1.msra.mxu0 %v378
    %3001 = vmatprep.subr.mxu0 %v383
    %3002 = vmatpush1.msra.mxu0 %v382
    %3003 = vmatprep.subr.mxu0 %v387
    %3004 = vmatpush1.msra.mxu0 %v386
    %3005 = vmatprep.subr.mxu0 %v391
    %3006 = vmatpush1.msra.mxu0 %v390
    %3007 = vmatprep.subr.mxu0 %v395
    %3008 = vmatpush1.msra.mxu0 %v394
    %3009 = vmatprep.subr.mxu0 %v399
    %3010 = vmatpush1.msra.mxu0 %v398
    %3011 = vmatprep.subr.mxu0 %v403
    %3012 = vmatpush1.msra.mxu0 %v402
    %3013 = vmatprep.subr.mxu0 %v407
    %3014 = vmatpush1.msra.mxu0 %v406
    %3015 = vmatprep.subr.mxu0 %v411
    %3016 = vmatpush1.msra.mxu0 %v410
    %3017 = vmatprep.subr.mxu0 0.0
    %3018 = vmatpush1.msra.mxu0 0.0
    %3019 = vmatprep.subr.mxu0 0.0
    %3020 = vmatpush1.msra.mxu0 0.0
    %3021 = vmatprep.subr.mxu0 0.0
    %3022 = vmatpush1.msra.mxu0 0.0
    %3023 = vmatprep.subr.mxu0 0.0
    %3024 = vmatpush1.msra.mxu0 0.0
    %3025 = vmatprep.subr.mxu0 0.0
    %3026 = vmatpush1.msra.mxu0 0.0
    %3027 = vmatprep.subr.mxu0 0.0
    %3028 = vmatpush1.msra.mxu0 0.0
    %3029 = vmatprep.subr.mxu0 0.0
    %3030 = vmatpush1.msra.mxu0 0.0
    %3031 = vmatprep.subr.mxu0 0.0
    %3032 = vmatpush1.msra.mxu0 0.0
    %3033 = vmatprep.subr.mxu0 0.0
    %3034 = vmatpush1.msra.mxu0 0.0
    %3035 = vmatprep.subr.mxu0 0.0
    %3036 = vmatpush1.msra.mxu0 0.0
    %3037 = vmatprep.subr.mxu0 0.0
    %3038 = vmatpush1.msra.mxu0 0.0
    %3039 = vmatprep.subr.mxu0 0.0
    %3040 = vmatpush1.msra.mxu0 0.0
    %3041 = vmatprep.subr.mxu0 0.0
    %3042 = vmatpush1.msra.mxu0 0.0
    %3043 = vmatprep.subr.mxu0 0.0
    %3044 = vmatpush1.msra.mxu0 0.0
    %3045 = vmatprep.subr.mxu0 0.0
    %3046 = vmatpush1.msra.mxu0 0.0
    %3047 = vmatprep.subr.mxu0 0.0
    %3048 = vmatpush1.msra.mxu0 0.0
    %3049 = vmatprep.mubr.f32.mxu0 0.0
    %3050 = vmatmul.mubr.f32.gmra.mrb[0].mxu0 %v2747
    %v3051 = vpop.f32.mrb[0].mxu0
    %v3052 = vadd.f32 0.0, %v3051
    %v3053 = vpop.f32.mrb[0].mxu0
    %v3054 = vadd.f32 0.0, %v3053
    %3055 = vdwg.mxu0
    %v3056 = vadd.f32 %v231, %v2981
    %v3057 = vadd.f32 %v233, %v2983
    %v3058 = vadd.f32 %v344, %v3052
    %v3059 = vadd.f32 %v346, %v3054
    %v3060 = vxor.u32 %v3056, 2147483648
    %v3061 = vxor.u32 %v3057, 2147483648
    %v3062 = vxor.u32 %v3058, 2147483648
    %v3063 = vmul.f32 %v3060, 1.442695
    %v3064 = vpow.pop %v3063
    %v3065 = vmul.f32 %v3061, 1.442695
    %v3066 = vpow.pop %v3065
    %v3067 = vmul.f32 %v3062, 1.442695
    %v3068 = vpow.pop %v3067
    %v3069 = vadd.f32 %v3064, 1.0
    %v3070 = vadd.f32 %v3066, 1.0
    %v3071 = vadd.f32 %v3068, 1.0
    %v3072 = vrcp.pop %v3069
    %v3073 = vmul.f32 1.0, %v3072
    %v3074 = vrcp.pop %v3070
    %v3075 = vmul.f32 1.0, %v3074
    %v3076 = vrcp.pop %v3071
    %v3077 = vmul.f32 1.0, %v3076
    %v3078 = vtanh.pop %v3059
    %v3079 = vmul.f32 %v3075, %v2745
    %v3080 = vmul.f32 %v3073, %v3078
    %v3081 = vadd.f32 %v3079, %v3080
    %v3082 = vtanh.pop %v3081
    %v3083 = vmul.f32 %v3077, %v3082
    %3084 = vmatprep.subr.mxu0 %v413
    %3085 = vmatpush1.msra.mxu0 %v412
    %3086 = vmatprep.subr.mxu0 %v417
    %3087 = vmatpush1.msra.mxu0 %v416
    %3088 = vmatprep.subr.mxu0 %v421
    %3089 = vmatpush1.msra.mxu0 %v420
    %3090 = vmatprep.subr.mxu0 %v425
    %3091 = vmatpush1.msra.mxu0 %v424
    %3092 = vmatprep.subr.mxu0 %v429
    %3093 = vmatpush1.msra.mxu0 %v428
    %3094 = vmatprep.subr.mxu0 %v433
    %3095 = vmatpush1.msra.mxu0 %v432
    %3096 = vmatprep.subr.mxu0 %v437
    %3097 = vmatpush1.msra.mxu0 %v436
    %3098 = vmatprep.subr.mxu0 %v441
    %3099 = vmatpush1.msra.mxu0 %v440
    %3100 = vmatprep.subr.mxu0 %v445
    %3101 = vmatpush1.msra.mxu0 %v444
    %3102 = vmatprep.subr.mxu0 %v449
    %3103 = vmatpush1.msra.mxu0 %v448
    %3104 = vmatprep.subr.mxu0 %v453
    %3105 = vmatpush1.msra.mxu0 %v452
    %3106 = vmatprep.subr.mxu0 %v457
    %3107 = vmatpush1.msra.mxu0 %v456
    %3108 = vmatprep.subr.mxu0 %v461
    %3109 = vmatpush1.msra.mxu0 %v460
    %3110 = vmatprep.subr.mxu0 %v465
    %3111 = vmatpush1.msra.mxu0 %v464
    %3112 = vmatprep.subr.mxu0 %v469
    %3113 = vmatpush1.msra.mxu0 %v468
    %3114 = vmatprep.subr.mxu0 %v473
    %3115 = vmatpush1.msra.mxu0 %v472
    %3116 = vmatprep.subr.mxu0 %v477
    %3117 = vmatpush1.msra.mxu0 %v476
    %3118 = vmatprep.subr.mxu0 %v481
    %3119 = vmatpush1.msra.mxu0 %v480
    %3120 = vmatprep.subr.mxu0 %v485
    %3121 = vmatpush1.msra.mxu0 %v484
    %3122 = vmatprep.subr.mxu0 %v489
    %3123 = vmatpush1.msra.mxu0 %v488
    %3124 = vmatprep.subr.mxu0 %v493
    %3125 = vmatpush1.msra.mxu0 %v492
    %3126 = vmatprep.subr.mxu0 %v497
    %3127 = vmatpush1.msra.mxu0 %v496
    %3128 = vmatprep.subr.mxu0 %v501
    %3129 = vmatpush1.msra.mxu0 %v500
    %3130 = vmatprep.subr.mxu0 %v505
    %3131 = vmatpush1.msra.mxu0 %v504
    %3132 = vmatprep.subr.mxu0 %v509
    %3133 = vmatpush1.msra.mxu0 %v508
    %3134 = vmatprep.subr.mxu0 %v513
    %3135 = vmatpush1.msra.mxu0 %v512
    %3136 = vmatprep.subr.mxu0 %v517
    %3137 = vmatpush1.msra.mxu0 %v516
    %3138 = vmatprep.subr.mxu0 %v521
    %3139 = vmatpush1.msra.mxu0 %v520
    %3140 = vmatprep.subr.mxu0 %v525
    %3141 = vmatpush1.msra.mxu0 %v524
    %3142 = vmatprep.subr.mxu0 %v529
    %3143 = vmatpush1.msra.mxu0 %v528
    %3144 = vmatprep.subr.mxu0 %v533
    %3145 = vmatpush1.msra.mxu0 %v532
    %3146 = vmatprep.subr.mxu0 %v537
    %3147 = vmatpush1.msra.mxu0 %v536
    %3148 = vmatprep.mubr.f32.mxu0 %v2913
    %3149 = vmatmul.mubr.f32.gmra.mrb[0].mxu0 %v3083
    %v3150 = vpop.f32.mrb[0].mxu0
    %v3151 = vadd.f32 %v715, %v3150
    %v3152 = vpop.f32.mrb[0].mxu0
    %v3153 = vadd.f32 %v719, %v3152
    %3154 = vdwg.mxu0
    %3155 = vmatprep.subr.mxu0 %v415
    %3156 = vmatpush1.msra.mxu0 %v414
    %3157 = vmatprep.subr.mxu0 %v419
    %3158 = vmatpush1.msra.mxu0 %v418
    %3159 = vmatprep.subr.mxu0 %v423
    %3160 = vmatpush1.msra.mxu0 %v422
    %3161 = vmatprep.subr.mxu0 %v427
    %3162 = vmatpush1.msra.mxu0 %v426
    %3163 = vmatprep.subr.mxu0 %v431
    %3164 = vmatpush1.msra.mxu0 %v430
    %3165 = vmatprep.subr.mxu0 %v435
    %3166 = vmatpush1.msra.mxu0 %v434
    %3167 = vmatprep.subr.mxu0 %v439
    %3168 = vmatpush1.msra.mxu0 %v438
    %3169 = vmatprep.subr.mxu0 %v443
    %3170 = vmatpush1.msra.mxu0 %v442
    %3171 = vmatprep.subr.mxu0 %v447
    %3172 = vmatpush1.msra.mxu0 %v446
    %3173 = vmatprep.subr.mxu0 %v451
    %3174 = vmatpush1.msra.mxu0 %v450
    %3175 = vmatprep.subr.mxu0 %v455
    %3176 = vmatpush1.msra.mxu0 %v454
    %3177 = vmatprep.subr.mxu0 %v459
    %3178 = vmatpush1.msra.mxu0 %v458
    %3179 = vmatprep.subr.mxu0 %v463
    %3180 = vmatpush1.msra.mxu0 %v462
    %3181 = vmatprep.subr.mxu0 %v467
    %3182 = vmatpush1.msra.mxu0 %v466
    %3183 = vmatprep.subr.mxu0 %v471
    %3184 = vmatpush1.msra.mxu0 %v470
    %3185 = vmatprep.subr.mxu0 %v475
    %3186 = vmatpush1.msra.mxu0 %v474
    %3187 = vmatprep.subr.mxu0 %v479
    %3188 = vmatpush1.msra.mxu0 %v478
    %3189 = vmatprep.subr.mxu0 %v483
    %3190 = vmatpush1.msra.mxu0 %v482
    %3191 = vmatprep.subr.mxu0 %v487
    %3192 = vmatpush1.msra.mxu0 %v486
    %3193 = vmatprep.subr.mxu0 %v491
    %3194 = vmatpush1.msra.mxu0 %v490
    %3195 = vmatprep.subr.mxu0 %v495
    %3196 = vmatpush1.msra.mxu0 %v494
    %3197 = vmatprep.subr.mxu0 %v499
    %3198 = vmatpush1.msra.mxu0 %v498
    %3199 = vmatprep.subr.mxu0 %v503
    %3200 = vmatpush1.msra.mxu0 %v502
    %3201 = vmatprep.subr.mxu0 %v507
    %3202 = vmatpush1.msra.mxu0 %v506
    %3203 = vmatprep.subr.mxu0 %v511
    %3204 = vmatpush1.msra.mxu0 %v510
    %3205 = vmatprep.subr.mxu0 %v515
    %3206 = vmatpush1.msra.mxu0 %v514
    %3207 = vmatprep.subr.mxu0 %v519
    %3208 = vmatpush1.msra.mxu0 %v518
    %3209 = vmatprep.subr.mxu0 %v523
    %3210 = vmatpush1.msra.mxu0 %v522
    %3211 = vmatprep.subr.mxu0 %v527
    %3212 = vmatpush1.msra.mxu0 %v526
    %3213 = vmatprep.subr.mxu0 %v531
    %3214 = vmatpush1.msra.mxu0 %v530
    %3215 = vmatprep.subr.mxu0 %v535
    %3216 = vmatpush1.msra.mxu0 %v534
    %3217 = vmatprep.subr.mxu0 %v539
    %3218 = vmatpush1.msra.mxu0 %v538
    %3219 = vmatprep.mubr.f32.mxu0 %v2913
    %3220 = vmatmul.mubr.f32.gmra.mrb[0].mxu0 %v3083
    %v3221 = vpop.f32.mrb[0].mxu0
    %v3222 = vadd.f32 %v723, %v3221
    %v3223 = vpop.f32.mrb[0].mxu0
    %v3224 = vadd.f32 %v727, %v3223
    %3225 = vdwg.mxu0
    %v3226 = vxor.u32 %v3151, 2147483648
    %v3227 = vxor.u32 %v3153, 2147483648
    %v3228 = vxor.u32 %v3222, 2147483648
    %v3229 = vmul.f32 %v3226, 1.442695
    %v3230 = vpow.pop %v3229
    %v3231 = vmul.f32 %v3227, 1.442695
    %v3232 = vpow.pop %v3231
    %v3233 = vmul.f32 %v3228, 1.442695
    %v3234 = vpow.pop %v3233
    %v3235 = vadd.f32 %v3230, 1.0
    %v3236 = vadd.f32 %v3232, 1.0
    %v3237 = vadd.f32 %v3234, 1.0
    %v3238 = vrcp.pop %v3235
    %v3239 = vmul.f32 1.0, %v3238
    %v3240 = vrcp.pop %v3236
    %v3241 = vmul.f32 1.0, %v3240
    %v3242 = vrcp.pop %v3237
    %v3243 = vmul.f32 1.0, %v3242
    %v3244 = vtanh.pop %v3224
    %v3245 = vmul.f32 %v3241, %v2911
    %v3246 = vmul.f32 %v3239, %v3244
    %v3247 = vadd.f32 %v3245, %v3246
    %v3248 = vtanh.pop %v3247
    %v3249 = vmul.f32 %v3243, %v3248
    %v3250 = vld [vmem:[%s6] sm:$0x1]
    %v3252 = vlaneseq
    %v3253 = vshrl.u32 %v3252, 7
    %v3254 = vsub.s32 0, %v3253
    %v3255 = vrot.slane %v3250, %v3254
    %v3257 = vmul.f32 %v3249, %v3255
    %3258 = vadd.xlane.f32.xlu0 %v3257
    %v3259 = vpop.xlane.xlu0 %3258
    %v3260 = vld [vmem:[#allocation2] sm:$0x1]
    %v3262 = vlaneseq
    %v3263 = vshrl.u32 %v3262, 7
    %v3264 = vsub.s32 0, %v3263
    %v3265 = vrot.slane %v3260, %v3264
    %v3267 = vadd.f32 %v3259, %v3265
    %vm3268 = vcmask 7168
    %3269 = vst.msk [vmem:[%s8] sm:$0xff] %vm3268, %v3267
    // Predicated region
    $region42: #{lstm_model_forward.1} parent=1 // pred_check
      _
    $region43: #{lstm_model_forward.1} parent=1 // pred_check_branch
      %3271 = sbr.rel (0) target = $region45
    $region44: #{lstm_model_forward.1} parent=1 // pred_region
      _
    $region45: #{lstm_model_forward.1} parent=1 // pred_fallthru
      _
    // Predicated region
    $region46: #{lstm_model_forward.1} parent=1 // pred_check
      _
    $region47: #{lstm_model_forward.1} parent=1 // pred_check_branch
      %3273 = sbr.rel (0) target = $region49
    $region48: #{lstm_model_forward.1} parent=1 // pred_region
      _
    $region49: #{lstm_model_forward.1} parent=1 // pred_fallthru
      _
    %3274 = vsyncpa [#allocation4], 1
    %3275 = vsyncpa [#allocation6], 1

</llo_original>
